<compile_context>
chip_gen: v7x
topology: tpu7x:2x2x1
jax: 0.10.0
libtpu: 0.0.40
codegen_flags: <defaults>
</compile_context>

<pallas_src>
import jax
import jax.numpy as jnp
from jax.experimental import pallas as pl
from jax.experimental.pallas import tpu as pltpu

# ---------------- configuration (small, consistent with the module) ---------
IN_CH = 4
OUT_CH = 8
RES_CH = 32          # res_channels == dl_channels (required by the block's
DL_CH = 32           # BatchNorm1d(res_channels) applied to dl_channels data)
BLOCKS = 2
LAYERS = 4
BATCH = 2
LENGTH = 64          # B * L = 128 -> lane-dense last dim inside the kernel

EPS_BLOCK = 1e-5     # nn.BatchNorm1d default eps (block batchnorms)
EPS_TOP = 5e-4       # eps=0.0005 for start_bn / end_bn1 / end_bn2

_VMEM = pl.BlockSpec(memory_space=pltpu.MemorySpace.VMEM)


# ---------------- in-kernel helpers ------------------------------------------
def _bn_train(y, gamma, beta, eps):
    """Training-mode batchnorm over the flattened (batch*time) lane axis.

    One-pass statistics: var = E[x^2] - mean^2, rsqrt on the EUP.
    """
    mean = jnp.mean(y, axis=1, keepdims=True)
    ex2 = jnp.mean(y * y, axis=1, keepdims=True)
    var = ex2 - mean * mean
    scale = jax.lax.rsqrt(var + eps) * gamma
    return (y - mean) * scale + beta


def _make_fused_kernel(batch: int, length: int):
    total = batch * length
    pow2 = (length & (length - 1)) == 0

    def kernel(x_ref,
               start_w_ref, start_b_ref, start_g_ref, start_be_ref,
               wfg_ref, bfg_ref, gamma_ref, beta_ref, wrs_ref, brs_ref,
               bn1_g_ref, bn1_b_ref, e1w_ref, e1b_ref,
               bn2_g_ref, bn2_b_ref, e2w_ref, e2b_ref,
               o_ref):
        f32 = jnp.float32

        # per-lane time index t within each length-`length` batch segment
        lane = jax.lax.broadcasted_iota(jnp.int32, (RES_CH, total), 1)
        if pow2:
            t_idx = jnp.bitwise_and(lane, length - 1)
        else:
            t_idx = jax.lax.rem(lane, length)

        mask_cache = {}   # de-dup masks per distinct shift (trace-time memo)

        def shift(x, s):
            # xs[:, b*L + t] = x[:, b*L + (t+s)] if 0 <= t+s < L else 0
            if s == 0:
                return x
            if s not in mask_cache:
                mask_cache[s] = jnp.logical_and(t_idx + s >= 0,
                                                t_idx + s < length)
            rolled = pltpu.roll(x, shift=(-s) % total, axis=1)
            return jnp.where(mask_cache[s], rolled, 0.0)

        # ---- start: 1x1 conv + training-mode BN (eps=5e-4) -----------------
        y0 = jnp.dot(start_w_ref[...], x_ref[...], preferred_element_type=f32)
        resid = _bn_train(y0 + start_b_ref[...],
                          start_g_ref[...], start_be_ref[...], EPS_TOP)
        skip = jnp.zeros((RES_CH, total), f32)

        # ---- BLOCKS x LAYERS dilated layers, fully unrolled ----------------
        for li in range(BLOCKS * LAYERS):
            li_in = li % LAYERS
            if li_in == 0:
                # k=2, d=1, padding=1, output sliced [:-1]:
                #   out[t] = W0 @ x[t-1] + W1 @ x[t]
                s0, s1 = -1, 0
            else:
                # k=2, dilation d, padding d//2:
                #   out[t] = W0 @ x[t - d//2] + W1 @ x[t + d//2]
                d = 2 ** li_in
                s0, s1 = -(d // 2), d // 2

            xin = jnp.concatenate([shift(resid, s0), shift(resid, s1)], axis=0)
            # filter & gate as one (2*DL, 2*RES) @ (2*RES, N) block matmul
            y = (jnp.dot(wfg_ref[li], xin, preferred_element_type=f32)
                 + bfg_ref[li])
            # filter/gate activations are not applied in forward() (see notes)
            prod = y[:DL_CH] * y[DL_CH:]
            bn = _bn_train(prod, gamma_ref[li], beta_ref[li], EPS_BLOCK)
            # residual & skip 1x1 convs as one (2*RES, DL) @ (DL, N) matmul
            z = (jnp.dot(wrs_ref[li], bn, preferred_element_type=f32)
                 + brs_ref[li])
            resid = resid + z[:RES_CH]
            # each block's skip starts at zero, so a single global running sum
            # equals the per-block sums accumulated at top level.
            skip = skip + z[RES_CH:]

        # ---- end: relu -> bn1 -> 1x1 conv -> relu -> bn2 -> 1x1 conv -------
        s = _bn_train(jnp.maximum(skip, 0.0),
                      bn1_g_ref[...], bn1_b_ref[...], EPS_TOP)
        y = jnp.dot(e1w_ref[...], s, preferred_element_type=f32) + e1b_ref[...]
        y = _bn_train(jnp.maximum(y, 0.0),
                      bn2_g_ref[...], bn2_b_ref[...], EPS_TOP)
        o_ref[...] = (jnp.dot(e2w_ref[...], y, preferred_element_type=f32)
                      + e2b_ref[...])

    return kernel


# ---------------- parameters (PyTorch-module-shaped) --------------------------
def init_params(key):
    keys = iter(jax.random.split(key, 256))

    def rnd(shape, scale=0.1):
        return scale * jax.random.normal(next(keys), shape, dtype=jnp.float32)

    def col(c):          # bias / bn params as (C, 1) for lane broadcasting
        return rnd((c, 1))

    params = {
        "start_w": rnd((RES_CH, IN_CH)),
        "start_b": col(RES_CH),
        "start_gamma": jnp.ones((RES_CH, 1), jnp.float32),
        "start_beta": jnp.zeros((RES_CH, 1), jnp.float32),
        "end1_w": rnd((OUT_CH, RES_CH)),
        "end1_b": col(OUT_CH),
        "end2_w": rnd((OUT_CH, OUT_CH)),
        "end2_b": col(OUT_CH),
        "bn1_gamma": jnp.ones((RES_CH, 1), jnp.float32),
        "bn1_beta": jnp.zeros((RES_CH, 1), jnp.float32),
        "bn2_gamma": jnp.ones((OUT_CH, 1), jnp.float32),
        "bn2_beta": jnp.zeros((OUT_CH, 1), jnp.float32),
        "blocks": [],
    }
    for _ in range(BLOCKS):
        layers = []
        for _ in range(LAYERS):
            layers.append({
                "wf0": rnd((DL_CH, RES_CH)), "wf1": rnd((DL_CH, RES_CH)),
                "bf": col(DL_CH),
                "wg0": rnd((DL_CH, RES_CH)), "wg1": rnd((DL_CH, RES_CH)),
                "bg": col(DL_CH),
                "gamma": jnp.ones((DL_CH, 1), jnp.float32),
                "beta": jnp.zeros((DL_CH, 1), jnp.float32),
                "wr": rnd((RES_CH, DL_CH)), "br": col(RES_CH),
                "ws": rnd((RES_CH, DL_CH)), "bs": col(RES_CH),
            })
        params["blocks"].append(layers)
    return params


def pack_params(params):
    """One-time packing: block-stacked weights + per-category layer slabs."""
    wfg, bfg, gam, bet, wrs, brs = [], [], [], [], [], []
    for bi in range(BLOCKS):
        for li in range(LAYERS):
            lp = params["blocks"][bi][li]
            wfg.append(jnp.concatenate(
                [jnp.concatenate([lp["wf0"], lp["wf1"]], axis=1),
                 jnp.concatenate([lp["wg0"], lp["wg1"]], axis=1)], axis=0))
            bfg.append(jnp.concatenate([lp["bf"], lp["bg"]], axis=0))
            gam.append(lp["gamma"])
            bet.append(lp["beta"])
            wrs.append(jnp.concatenate([lp["wr"], lp["ws"]], axis=0))
            brs.append(jnp.concatenate([lp["br"], lp["bs"]], axis=0))
    return {
        "start_w": params["start_w"], "start_b": params["start_b"],
        "start_gamma": params["start_gamma"], "start_beta": params["start_beta"],
        "wfg": jnp.stack(wfg),      # (8, 2*DL, 2*RES)
        "bfg": jnp.stack(bfg),      # (8, 2*DL, 1)
        "gamma": jnp.stack(gam),    # (8, DL, 1)
        "beta": jnp.stack(bet),     # (8, DL, 1)
        "wrs": jnp.stack(wrs),      # (8, 2*RES, DL)
        "brs": jnp.stack(brs),      # (8, 2*RES, 1)
        "bn1_gamma": params["bn1_gamma"], "bn1_beta": params["bn1_beta"],
        "end1_w": params["end1_w"], "end1_b": params["end1_b"],
        "bn2_gamma": params["bn2_gamma"], "bn2_beta": params["bn2_beta"],
        "end2_w": params["end2_w"], "end2_b": params["end2_b"],
    }


# ---------------- full forward: ONE pallas_call --------------------------------
@jax.jit
def bitwise_wavenet_forward(x, packed):
    # x: (B, in_channels, L)  -> (B, out_channels, L)
    B, Cin, L = x.shape
    kernel = _make_fused_kernel(B, L)

    x_cn = jnp.transpose(x, (1, 0, 2)).reshape(Cin, B * L)   # (Cin, B*L)
    ins = (x_cn,
           packed["start_w"], packed["start_b"],
           packed["start_gamma"], packed["start_beta"],
           packed["wfg"], packed["bfg"], packed["gamma"], packed["beta"],
           packed["wrs"], packed["brs"],
           packed["bn1_gamma"], packed["bn1_beta"],
           packed["end1_w"], packed["end1_b"],
           packed["bn2_gamma"], packed["bn2_beta"],
           packed["end2_w"], packed["end2_b"])

    out_cn = pl.pallas_call(
        kernel,
        out_shape=jax.ShapeDtypeStruct((OUT_CH, B * L), jnp.float32),
        in_specs=[_VMEM] * len(ins),
        out_specs=_VMEM,
    )(*ins)
    return jnp.transpose(out_cn.reshape(OUT_CH, B, L), (1, 0, 2))


# ---------------- pure-JAX reference (for correctness check) -------------------
def _shift_time_ref(x, s):
    L = x.shape[-1]
    if s == 0:
        return x
    if s > 0:
        return jnp.pad(x[:, :, s:], ((0, 0), (0, 0), (0, s)))
    return jnp.pad(x[:, :, :L + s], ((0, 0), (0, 0), (-s, 0)))


def _bn_ref(y, gamma, beta, eps):
    mean = jnp.mean(y, axis=(0, 2), keepdims=True)
    var = jnp.mean((y - mean) ** 2, axis=(0, 2), keepdims=True)
    return ((y - mean) / jnp.sqrt(var + eps)) * gamma.reshape(1, -1, 1) \
        + beta.reshape(1, -1, 1)


def reference_forward(x, params):
    conv = lambda w, b, a: jnp.einsum("oc,bcl->bol", w, a) + b.reshape(1, -1, 1)
    resid = _bn_ref(conv(params["start_w"], params["start_b"], x),
                    params["start_gamma"], params["start_beta"], EPS_TOP)
    skip = jnp.zeros_like(resid)
    for bi in range(BLOCKS):
        block_resid = resid
        block_skip = jnp.zeros_like(resid)
        dilation = 1
        for li in range(LAYERS):
            lp = params["blocks"][bi][li]
            if li == 0:
                s0, s1 = -1, 0
            else:
                s0, s1 = -(dilation // 2), dilation // 2
            xs0 = _shift_time_ref(block_resid, s0)
            xs1 = _shift_time_ref(block_resid, s1)
            filt = (jnp.einsum("oc,bcl->bol", lp["wf0"], xs0)
                    + jnp.einsum("oc,bcl->bol", lp["wf1"], xs1)
                    + lp["bf"].reshape(1, -1, 1))
            gate = (jnp.einsum("oc,bcl->bol", lp["wg0"], xs0)
                    + jnp.einsum("oc,bcl->bol", lp["wg1"], xs1)
                    + lp["bg"].reshape(1, -1, 1))
            bn = _bn_ref(filt * gate, lp["gamma"], lp["beta"], EPS_BLOCK)
            block_skip = block_skip + conv(lp["ws"], lp["bs"], bn)
            block_resid = block_resid + conv(lp["wr"], lp["br"], bn)
            dilation *= 2
        resid = block_resid
        skip = skip + block_skip
    out = _bn_ref(jnp.maximum(skip, 0.0),
                  params["bn1_gamma"], params["bn1_beta"], EPS_TOP)
    out = jnp.maximum(conv(params["end1_w"], params["end1_b"], out), 0.0)
    out = _bn_ref(out, params["bn2_gamma"], params["bn2_beta"], EPS_TOP)
    return conv(params["end2_w"], params["end2_b"], out)


# ---------------- demo ---------------------------------------------------------
if __name__ == "__main__":
    key = jax.random.PRNGKey(0)
    k_param, k_x = jax.random.split(key)
    params = init_params(k_param)
    packed = pack_params(params)          # one-time weight packing (outside jit)
    x = jax.random.normal(k_x, (BATCH, IN_CH, LENGTH), dtype=jnp.float32)

    out = bitwise_wavenet_forward(x, packed)
    out = jax.block_until_ready(out)

    assert out.shape == (BATCH, OUT_CH, LENGTH), out.shape
    assert bool(jnp.all(jnp.isfinite(out)))

    ref = reference_forward(x, params)
    max_diff = float(jnp.max(jnp.abs(out - ref)))
    assert jnp.allclose(out, ref, rtol=2e-3, atol=2e-3), max_diff

    print("KERNEL_OK")
</pallas_src>

<mosaic_0001>
module attributes {stable_mosaic.version = 11 : i64} {
  func.func @kernel(%arg0: memref<4x128xf32, #tpu.memory_space<vmem>>, %arg1: memref<32x4xf32, #tpu.memory_space<vmem>>, %arg2: memref<32x1xf32, #tpu.memory_space<vmem>>, %arg3: memref<32x1xf32, #tpu.memory_space<vmem>>, %arg4: memref<32x1xf32, #tpu.memory_space<vmem>>, %arg5: memref<8x64x64xf32, #tpu.memory_space<vmem>>, %arg6: memref<8x64x1xf32, #tpu.memory_space<vmem>>, %arg7: memref<8x32x1xf32, #tpu.memory_space<vmem>>, %arg8: memref<8x32x1xf32, #tpu.memory_space<vmem>>, %arg9: memref<8x64x32xf32, #tpu.memory_space<vmem>>, %arg10: memref<8x64x1xf32, #tpu.memory_space<vmem>>, %arg11: memref<32x1xf32, #tpu.memory_space<vmem>>, %arg12: memref<32x1xf32, #tpu.memory_space<vmem>>, %arg13: memref<8x32xf32, #tpu.memory_space<vmem>>, %arg14: memref<8x1xf32, #tpu.memory_space<vmem>>, %arg15: memref<8x1xf32, #tpu.memory_space<vmem>>, %arg16: memref<8x1xf32, #tpu.memory_space<vmem>>, %arg17: memref<8x8xf32, #tpu.memory_space<vmem>>, %arg18: memref<8x1xf32, #tpu.memory_space<vmem>>, %arg19: memref<8x128xf32, #tpu.memory_space<vmem>>) attributes {dimension_semantics = [], scalar_prefetch = 0 : i64, scratch_operands = 0 : i64, tpu.core_type = #tpu.core_type<tc>} {
    %0 = tpu.iota {dimensions = array<i32: 1>} : vector<32x128xi32>
    %c63_i32 = arith.constant 63 : i32
    %1 = vector.broadcast %c63_i32 : i32 to vector<32x128xi32>
    %2 = arith.andi %0, %1 : vector<32x128xi32>
    %c0 = arith.constant 0 : index
    %c0_0 = arith.constant 0 : index
    %3 = vector.load %arg1[%c0, %c0_0] : memref<32x4xf32, #tpu.memory_space<vmem>>, vector<32x4xf32>
    %c0_1 = arith.constant 0 : index
    %c0_2 = arith.constant 0 : index
    %4 = vector.load %arg0[%c0_1, %c0_2] : memref<4x128xf32, #tpu.memory_space<vmem>>, vector<4x128xf32>
    %cst = arith.constant dense<0.000000e+00> : vector<32x128xf32>
    %5 = tpu.matmul %3, %4, %cst {dimension_numbers = #tpu.dot_dimension_numbers<[1], [0], [0], [1], [0, 0, 1, 1], [], []>} : vector<32x4xf32>, vector<4x128xf32>, vector<32x128xf32> -> vector<32x128xf32>
    %c0_3 = arith.constant 0 : index
    %c0_4 = arith.constant 0 : index
    %6 = vector.load %arg2[%c0_3, %c0_4] : memref<32x1xf32, #tpu.memory_space<vmem>>, vector<32x1xf32>
    %7 = vector.broadcast %6 : vector<32x1xf32> to vector<32x128xf32>
    %8 = arith.addf %5, %7 : vector<32x128xf32>
    %c0_5 = arith.constant 0 : index
    %c0_6 = arith.constant 0 : index
    %9 = vector.load %arg3[%c0_5, %c0_6] : memref<32x1xf32, #tpu.memory_space<vmem>>, vector<32x1xf32>
    %c0_7 = arith.constant 0 : index
    %c0_8 = arith.constant 0 : index
    %10 = vector.load %arg4[%c0_7, %c0_8] : memref<32x1xf32, #tpu.memory_space<vmem>>, vector<32x1xf32>
    %cst_9 = arith.constant dense<0.000000e+00> : vector<32xf32>
    %11 = vector.multi_reduction <add>, %8, %cst_9 [1] : vector<32x128xf32> to vector<32xf32>
    %12 = vector.shape_cast %11 : vector<32xf32> to vector<32x1xf32>
    %cst_10 = arith.constant 1.280000e+02 : f32
    %13 = vector.broadcast %cst_10 : f32 to vector<32x1xf32>
    %14 = arith.divf %12, %13 : vector<32x1xf32>
    %15 = arith.mulf %8, %8 : vector<32x128xf32>
    %cst_11 = arith.constant dense<0.000000e+00> : vector<32xf32>
    %16 = vector.multi_reduction <add>, %15, %cst_11 [1] : vector<32x128xf32> to vector<32xf32>
    %17 = vector.shape_cast %16 : vector<32xf32> to vector<32x1xf32>
    %cst_12 = arith.constant 1.280000e+02 : f32
    %18 = vector.broadcast %cst_12 : f32 to vector<32x1xf32>
    %19 = arith.divf %17, %18 : vector<32x1xf32>
    %20 = arith.mulf %14, %14 : vector<32x1xf32>
    %21 = arith.subf %19, %20 : vector<32x1xf32>
    %cst_13 = arith.constant 5.000000e-04 : f32
    %22 = vector.broadcast %cst_13 : f32 to vector<32x1xf32>
    %23 = arith.addf %21, %22 : vector<32x1xf32>
    %24 = math.rsqrt %23 : vector<32x1xf32>
    %25 = arith.mulf %24, %9 : vector<32x1xf32>
    %26 = vector.broadcast %14 : vector<32x1xf32> to vector<32x128xf32>
    %27 = arith.subf %8, %26 : vector<32x128xf32>
    %28 = vector.broadcast %25 : vector<32x1xf32> to vector<32x128xf32>
    %29 = arith.mulf %27, %28 : vector<32x128xf32>
    %30 = vector.broadcast %10 : vector<32x1xf32> to vector<32x128xf32>
    %31 = arith.addf %29, %30 : vector<32x128xf32>
    %cst_14 = arith.constant 0.000000e+00 : f32
    %32 = vector.broadcast %cst_14 : f32 to vector<32x128xf32>
    %c-1_i32 = arith.constant -1 : i32
    %33 = vector.broadcast %c-1_i32 : i32 to vector<32x128xi32>
    %34 = arith.addi %2, %33 : vector<32x128xi32>
    %c0_i32 = arith.constant 0 : i32
    %35 = vector.broadcast %c0_i32 : i32 to vector<32x128xi32>
    %36 = arith.cmpi sge, %34, %35 : vector<32x128xi32>
    %c-1_i32_15 = arith.constant -1 : i32
    %37 = vector.broadcast %c-1_i32_15 : i32 to vector<32x128xi32>
    %38 = arith.addi %2, %37 : vector<32x128xi32>
    %c64_i32 = arith.constant 64 : i32
    %39 = vector.broadcast %c64_i32 : i32 to vector<32x128xi32>
    %40 = arith.cmpi slt, %38, %39 : vector<32x128xi32>
    %41 = arith.andi %36, %40 : vector<32x128xi1>
    %c1_i32 = arith.constant 1 : i32
    %42 = tpu.dynamic_rotate %31 by %c1_i32 dim 1 : vector<32x128xf32>, i32 -> vector<32x128xf32>
    %cst_16 = arith.constant 0.000000e+00 : f32
    %43 = vector.broadcast %cst_16 : f32 to vector<32x128xf32>
    %44 = arith.select %41, %42, %43 : vector<32x128xi1>, vector<32x128xf32>
    %45 = tpu.concatenate %44, %31 in 0 : vector<32x128xf32>, vector<32x128xf32> -> vector<64x128xf32>
    %c0_17 = arith.constant 0 : index
    %c0_18 = arith.constant 0 : index
    %c0_19 = arith.constant 0 : index
    %46 = vector.load %arg5[%c0_17, %c0_18, %c0_19] : memref<8x64x64xf32, #tpu.memory_space<vmem>>, vector<1x64x64xf32>
    %47 = vector.shape_cast %46 : vector<1x64x64xf32> to vector<64x64xf32>
    %cst_20 = arith.constant dense<0.000000e+00> : vector<64x128xf32>
    %48 = tpu.matmul %47, %45, %cst_20 {dimension_numbers = #tpu.dot_dimension_numbers<[1], [0], [0], [1], [0, 0, 1, 1], [], []>} : vector<64x64xf32>, vector<64x128xf32>, vector<64x128xf32> -> vector<64x128xf32>
    %c0_21 = arith.constant 0 : index
    %c0_22 = arith.constant 0 : index
    %c0_23 = arith.constant 0 : index
    %49 = vector.load %arg6[%c0_21, %c0_22, %c0_23] : memref<8x64x1xf32, #tpu.memory_space<vmem>>, vector<1x64x1xf32>
    %50 = vector.shape_cast %49 : vector<1x64x1xf32> to vector<64x1xf32>
    %51 = vector.broadcast %50 : vector<64x1xf32> to vector<64x128xf32>
    %52 = arith.addf %48, %51 : vector<64x128xf32>
    %53 = vector.extract_strided_slice %52 {offsets = [0, 0], sizes = [32, 128], strides = [1, 1]} : vector<64x128xf32> to vector<32x128xf32>
    %54 = vector.extract_strided_slice %52 {offsets = [32, 0], sizes = [32, 128], strides = [1, 1]} : vector<64x128xf32> to vector<32x128xf32>
    %55 = arith.mulf %53, %54 : vector<32x128xf32>
    %c0_24 = arith.constant 0 : index
    %c0_25 = arith.constant 0 : index
    %c0_26 = arith.constant 0 : index
    %56 = vector.load %arg7[%c0_24, %c0_25, %c0_26] : memref<8x32x1xf32, #tpu.memory_space<vmem>>, vector<1x32x1xf32>
    %57 = vector.shape_cast %56 : vector<1x32x1xf32> to vector<32x1xf32>
    %c0_27 = arith.constant 0 : index
    %c0_28 = arith.constant 0 : index
    %c0_29 = arith.constant 0 : index
    %58 = vector.load %arg8[%c0_27, %c0_28, %c0_29] : memref<8x32x1xf32, #tpu.memory_space<vmem>>, vector<1x32x1xf32>
    %59 = vector.shape_cast %58 : vector<1x32x1xf32> to vector<32x1xf32>
    %cst_30 = arith.constant dense<0.000000e+00> : vector<32xf32>
    %60 = vector.multi_reduction <add>, %55, %cst_30 [1] : vector<32x128xf32> to vector<32xf32>
    %61 = vector.shape_cast %60 : vector<32xf32> to vector<32x1xf32>
    %cst_31 = arith.constant 1.280000e+02 : f32
    %62 = vector.broadcast %cst_31 : f32 to vector<32x1xf32>
    %63 = arith.divf %61, %62 : vector<32x1xf32>
    %64 = arith.mulf %55, %55 : vector<32x128xf32>
    %cst_32 = arith.constant dense<0.000000e+00> : vector<32xf32>
    %65 = vector.multi_reduction <add>, %64, %cst_32 [1] : vector<32x128xf32> to vector<32xf32>
    %66 = vector.shape_cast %65 : vector<32xf32> to vector<32x1xf32>
    %cst_33 = arith.constant 1.280000e+02 : f32
    %67 = vector.broadcast %cst_33 : f32 to vector<32x1xf32>
    %68 = arith.divf %66, %67 : vector<32x1xf32>
    %69 = arith.mulf %63, %63 : vector<32x1xf32>
    %70 = arith.subf %68, %69 : vector<32x1xf32>
    %cst_34 = arith.constant 9.99999974E-6 : f32
    %71 = vector.broadcast %cst_34 : f32 to vector<32x1xf32>
    %72 = arith.addf %70, %71 : vector<32x1xf32>
    %73 = math.rsqrt %72 : vector<32x1xf32>
    %74 = arith.mulf %73, %57 : vector<32x1xf32>
    %75 = vector.broadcast %63 : vector<32x1xf32> to vector<32x128xf32>
    %76 = arith.subf %55, %75 : vector<32x128xf32>
    %77 = vector.broadcast %74 : vector<32x1xf32> to vector<32x128xf32>
    %78 = arith.mulf %76, %77 : vector<32x128xf32>
    %79 = vector.broadcast %59 : vector<32x1xf32> to vector<32x128xf32>
    %80 = arith.addf %78, %79 : vector<32x128xf32>
    %c0_35 = arith.constant 0 : index
    %c0_36 = arith.constant 0 : index
    %c0_37 = arith.constant 0 : index
    %81 = vector.load %arg9[%c0_35, %c0_36, %c0_37] : memref<8x64x32xf32, #tpu.memory_space<vmem>>, vector<1x64x32xf32>
    %82 = vector.shape_cast %81 : vector<1x64x32xf32> to vector<64x32xf32>
    %cst_38 = arith.constant dense<0.000000e+00> : vector<64x128xf32>
    %83 = tpu.matmul %82, %80, %cst_38 {dimension_numbers = #tpu.dot_dimension_numbers<[1], [0], [0], [1], [0, 0, 1, 1], [], []>} : vector<64x32xf32>, vector<32x128xf32>, vector<64x128xf32> -> vector<64x128xf32>
    %c0_39 = arith.constant 0 : index
    %c0_40 = arith.constant 0 : index
    %c0_41 = arith.constant 0 : index
    %84 = vector.load %arg10[%c0_39, %c0_40, %c0_41] : memref<8x64x1xf32, #tpu.memory_space<vmem>>, vector<1x64x1xf32>
    %85 = vector.shape_cast %84 : vector<1x64x1xf32> to vector<64x1xf32>
    %86 = vector.broadcast %85 : vector<64x1xf32> to vector<64x128xf32>
    %87 = arith.addf %83, %86 : vector<64x128xf32>
    %88 = vector.extract_strided_slice %87 {offsets = [0, 0], sizes = [32, 128], strides = [1, 1]} : vector<64x128xf32> to vector<32x128xf32>
    %89 = arith.addf %31, %88 : vector<32x128xf32>
    %90 = vector.extract_strided_slice %87 {offsets = [32, 0], sizes = [32, 128], strides = [1, 1]} : vector<64x128xf32> to vector<32x128xf32>
    %91 = arith.addf %32, %90 : vector<32x128xf32>
    %c1_i32_42 = arith.constant 1 : i32
    %92 = tpu.dynamic_rotate %89 by %c1_i32_42 dim 1 : vector<32x128xf32>, i32 -> vector<32x128xf32>
    %cst_43 = arith.constant 0.000000e+00 : f32
    %93 = vector.broadcast %cst_43 : f32 to vector<32x128xf32>
    %94 = arith.select %41, %92, %93 : vector<32x128xi1>, vector<32x128xf32>
    %c1_i32_44 = arith.constant 1 : i32
    %95 = vector.broadcast %c1_i32_44 : i32 to vector<32x128xi32>
    %96 = arith.addi %2, %95 : vector<32x128xi32>
    %c0_i32_45 = arith.constant 0 : i32
    %97 = vector.broadcast %c0_i32_45 : i32 to vector<32x128xi32>
    %98 = arith.cmpi sge, %96, %97 : vector<32x128xi32>
    %c1_i32_46 = arith.constant 1 : i32
    %99 = vector.broadcast %c1_i32_46 : i32 to vector<32x128xi32>
    %100 = arith.addi %2, %99 : vector<32x128xi32>
    %c64_i32_47 = arith.constant 64 : i32
    %101 = vector.broadcast %c64_i32_47 : i32 to vector<32x128xi32>
    %102 = arith.cmpi slt, %100, %101 : vector<32x128xi32>
    %103 = arith.andi %98, %102 : vector<32x128xi1>
    %c127_i32 = arith.constant 127 : i32
    %104 = tpu.dynamic_rotate %89 by %c127_i32 dim 1 : vector<32x128xf32>, i32 -> vector<32x128xf32>
    %cst_48 = arith.constant 0.000000e+00 : f32
    %105 = vector.broadcast %cst_48 : f32 to vector<32x128xf32>
    %106 = arith.select %103, %104, %105 : vector<32x128xi1>, vector<32x128xf32>
    %107 = tpu.concatenate %94, %106 in 0 : vector<32x128xf32>, vector<32x128xf32> -> vector<64x128xf32>
    %c1 = arith.constant 1 : index
    %c0_49 = arith.constant 0 : index
    %c0_50 = arith.constant 0 : index
    %108 = vector.load %arg5[%c1, %c0_49, %c0_50] : memref<8x64x64xf32, #tpu.memory_space<vmem>>, vector<1x64x64xf32>
    %109 = vector.shape_cast %108 : vector<1x64x64xf32> to vector<64x64xf32>
    %cst_51 = arith.constant dense<0.000000e+00> : vector<64x128xf32>
    %110 = tpu.matmul %109, %107, %cst_51 {dimension_numbers = #tpu.dot_dimension_numbers<[1], [0], [0], [1], [0, 0, 1, 1], [], []>} : vector<64x64xf32>, vector<64x128xf32>, vector<64x128xf32> -> vector<64x128xf32>
    %c1_52 = arith.constant 1 : index
    %c0_53 = arith.constant 0 : index
    %c0_54 = arith.constant 0 : index
    %111 = vector.load %arg6[%c1_52, %c0_53, %c0_54] : memref<8x64x1xf32, #tpu.memory_space<vmem>>, vector<1x64x1xf32>
    %112 = vector.shape_cast %111 : vector<1x64x1xf32> to vector<64x1xf32>
    %113 = vector.broadcast %112 : vector<64x1xf32> to vector<64x128xf32>
    %114 = arith.addf %110, %113 : vector<64x128xf32>
    %115 = vector.extract_strided_slice %114 {offsets = [0, 0], sizes = [32, 128], strides = [1, 1]} : vector<64x128xf32> to vector<32x128xf32>
    %116 = vector.extract_strided_slice %114 {offsets = [32, 0], sizes = [32, 128], strides = [1, 1]} : vector<64x128xf32> to vector<32x128xf32>
    %117 = arith.mulf %115, %116 : vector<32x128xf32>
    %c1_55 = arith.constant 1 : index
    %c0_56 = arith.constant 0 : index
    %c0_57 = arith.constant 0 : index
    %118 = vector.load %arg7[%c1_55, %c0_56, %c0_57] : memref<8x32x1xf32, #tpu.memory_space<vmem>>, vector<1x32x1xf32>
    %119 = vector.shape_cast %118 : vector<1x32x1xf32> to vector<32x1xf32>
    %c1_58 = arith.constant 1 : index
    %c0_59 = arith.constant 0 : index
    %c0_60 = arith.constant 0 : index
    %120 = vector.load %arg8[%c1_58, %c0_59, %c0_60] : memref<8x32x1xf32, #tpu.memory_space<vmem>>, vector<1x32x1xf32>
    %121 = vector.shape_cast %120 : vector<1x32x1xf32> to vector<32x1xf32>
    %cst_61 = arith.constant dense<0.000000e+00> : vector<32xf32>
    %122 = vector.multi_reduction <add>, %117, %cst_61 [1] : vector<32x128xf32> to vector<32xf32>
    %123 = vector.shape_cast %122 : vector<32xf32> to vector<32x1xf32>
    %cst_62 = arith.constant 1.280000e+02 : f32
    %124 = vector.broadcast %cst_62 : f32 to vector<32x1xf32>
    %125 = arith.divf %123, %124 : vector<32x1xf32>
    %126 = arith.mulf %117, %117 : vector<32x128xf32>
    %cst_63 = arith.constant dense<0.000000e+00> : vector<32xf32>
    %127 = vector.multi_reduction <add>, %126, %cst_63 [1] : vector<32x128xf32> to vector<32xf32>
    %128 = vector.shape_cast %127 : vector<32xf32> to vector<32x1xf32>
    %cst_64 = arith.constant 1.280000e+02 : f32
    %129 = vector.broadcast %cst_64 : f32 to vector<32x1xf32>
    %130 = arith.divf %128, %129 : vector<32x1xf32>
    %131 = arith.mulf %125, %125 : vector<32x1xf32>
    %132 = arith.subf %130, %131 : vector<32x1xf32>
    %cst_65 = arith.constant 9.99999974E-6 : f32
    %133 = vector.broadcast %cst_65 : f32 to vector<32x1xf32>
    %134 = arith.addf %132, %133 : vector<32x1xf32>
    %135 = math.rsqrt %134 : vector<32x1xf32>
    %136 = arith.mulf %135, %119 : vector<32x1xf32>
    %137 = vector.broadcast %125 : vector<32x1xf32> to vector<32x128xf32>
    %138 = arith.subf %117, %137 : vector<32x128xf32>
    %139 = vector.broadcast %136 : vector<32x1xf32> to vector<32x128xf32>
    %140 = arith.mulf %138, %139 : vector<32x128xf32>
    %141 = vector.broadcast %121 : vector<32x1xf32> to vector<32x128xf32>
    %142 = arith.addf %140, %141 : vector<32x128xf32>
    %c1_66 = arith.constant 1 : index
    %c0_67 = arith.constant 0 : index
    %c0_68 = arith.constant 0 : index
    %143 = vector.load %arg9[%c1_66, %c0_67, %c0_68] : memref<8x64x32xf32, #tpu.memory_space<vmem>>, vector<1x64x32xf32>
    %144 = vector.shape_cast %143 : vector<1x64x32xf32> to vector<64x32xf32>
    %cst_69 = arith.constant dense<0.000000e+00> : vector<64x128xf32>
    %145 = tpu.matmul %144, %142, %cst_69 {dimension_numbers = #tpu.dot_dimension_numbers<[1], [0], [0], [1], [0, 0, 1, 1], [], []>} : vector<64x32xf32>, vector<32x128xf32>, vector<64x128xf32> -> vector<64x128xf32>
    %c1_70 = arith.constant 1 : index
    %c0_71 = arith.constant 0 : index
    %c0_72 = arith.constant 0 : index
    %146 = vector.load %arg10[%c1_70, %c0_71, %c0_72] : memref<8x64x1xf32, #tpu.memory_space<vmem>>, vector<1x64x1xf32>
    %147 = vector.shape_cast %146 : vector<1x64x1xf32> to vector<64x1xf32>
    %148 = vector.broadcast %147 : vector<64x1xf32> to vector<64x128xf32>
    %149 = arith.addf %145, %148 : vector<64x128xf32>
    %150 = vector.extract_strided_slice %149 {offsets = [0, 0], sizes = [32, 128], strides = [1, 1]} : vector<64x128xf32> to vector<32x128xf32>
    %151 = arith.addf %89, %150 : vector<32x128xf32>
    %152 = vector.extract_strided_slice %149 {offsets = [32, 0], sizes = [32, 128], strides = [1, 1]} : vector<64x128xf32> to vector<32x128xf32>
    %153 = arith.addf %91, %152 : vector<32x128xf32>
    %c-2_i32 = arith.constant -2 : i32
    %154 = vector.broadcast %c-2_i32 : i32 to vector<32x128xi32>
    %155 = arith.addi %2, %154 : vector<32x128xi32>
    %c0_i32_73 = arith.constant 0 : i32
    %156 = vector.broadcast %c0_i32_73 : i32 to vector<32x128xi32>
    %157 = arith.cmpi sge, %155, %156 : vector<32x128xi32>
    %c-2_i32_74 = arith.constant -2 : i32
    %158 = vector.broadcast %c-2_i32_74 : i32 to vector<32x128xi32>
    %159 = arith.addi %2, %158 : vector<32x128xi32>
    %c64_i32_75 = arith.constant 64 : i32
    %160 = vector.broadcast %c64_i32_75 : i32 to vector<32x128xi32>
    %161 = arith.cmpi slt, %159, %160 : vector<32x128xi32>
    %162 = arith.andi %157, %161 : vector<32x128xi1>
    %c2_i32 = arith.constant 2 : i32
    %163 = tpu.dynamic_rotate %151 by %c2_i32 dim 1 : vector<32x128xf32>, i32 -> vector<32x128xf32>
    %cst_76 = arith.constant 0.000000e+00 : f32
    %164 = vector.broadcast %cst_76 : f32 to vector<32x128xf32>
    %165 = arith.select %162, %163, %164 : vector<32x128xi1>, vector<32x128xf32>
    %c2_i32_77 = arith.constant 2 : i32
    %166 = vector.broadcast %c2_i32_77 : i32 to vector<32x128xi32>
    %167 = arith.addi %2, %166 : vector<32x128xi32>
    %c0_i32_78 = arith.constant 0 : i32
    %168 = vector.broadcast %c0_i32_78 : i32 to vector<32x128xi32>
    %169 = arith.cmpi sge, %167, %168 : vector<32x128xi32>
    %c2_i32_79 = arith.constant 2 : i32
    %170 = vector.broadcast %c2_i32_79 : i32 to vector<32x128xi32>
    %171 = arith.addi %2, %170 : vector<32x128xi32>
    %c64_i32_80 = arith.constant 64 : i32
    %172 = vector.broadcast %c64_i32_80 : i32 to vector<32x128xi32>
    %173 = arith.cmpi slt, %171, %172 : vector<32x128xi32>
    %174 = arith.andi %169, %173 : vector<32x128xi1>
    %c126_i32 = arith.constant 126 : i32
    %175 = tpu.dynamic_rotate %151 by %c126_i32 dim 1 : vector<32x128xf32>, i32 -> vector<32x128xf32>
    %cst_81 = arith.constant 0.000000e+00 : f32
    %176 = vector.broadcast %cst_81 : f32 to vector<32x128xf32>
    %177 = arith.select %174, %175, %176 : vector<32x128xi1>, vector<32x128xf32>
    %178 = tpu.concatenate %165, %177 in 0 : vector<32x128xf32>, vector<32x128xf32> -> vector<64x128xf32>
    %c2 = arith.constant 2 : index
    %c0_82 = arith.constant 0 : index
    %c0_83 = arith.constant 0 : index
    %179 = vector.load %arg5[%c2, %c0_82, %c0_83] : memref<8x64x64xf32, #tpu.memory_space<vmem>>, vector<1x64x64xf32>
    %180 = vector.shape_cast %179 : vector<1x64x64xf32> to vector<64x64xf32>
    %cst_84 = arith.constant dense<0.000000e+00> : vector<64x128xf32>
    %181 = tpu.matmul %180, %178, %cst_84 {dimension_numbers = #tpu.dot_dimension_numbers<[1], [0], [0], [1], [0, 0, 1, 1], [], []>} : vector<64x64xf32>, vector<64x128xf32>, vector<64x128xf32> -> vector<64x128xf32>
    %c2_85 = arith.constant 2 : index
    %c0_86 = arith.constant 0 : index
    %c0_87 = arith.constant 0 : index
    %182 = vector.load %arg6[%c2_85, %c0_86, %c0_87] : memref<8x64x1xf32, #tpu.memory_space<vmem>>, vector<1x64x1xf32>
    %183 = vector.shape_cast %182 : vector<1x64x1xf32> to vector<64x1xf32>
    %184 = vector.broadcast %183 : vector<64x1xf32> to vector<64x128xf32>
    %185 = arith.addf %181, %184 : vector<64x128xf32>
    %186 = vector.extract_strided_slice %185 {offsets = [0, 0], sizes = [32, 128], strides = [1, 1]} : vector<64x128xf32> to vector<32x128xf32>
    %187 = vector.extract_strided_slice %185 {offsets = [32, 0], sizes = [32, 128], strides = [1, 1]} : vector<64x128xf32> to vector<32x128xf32>
    %188 = arith.mulf %186, %187 : vector<32x128xf32>
    %c2_88 = arith.constant 2 : index
    %c0_89 = arith.constant 0 : index
    %c0_90 = arith.constant 0 : index
    %189 = vector.load %arg7[%c2_88, %c0_89, %c0_90] : memref<8x32x1xf32, #tpu.memory_space<vmem>>, vector<1x32x1xf32>
    %190 = vector.shape_cast %189 : vector<1x32x1xf32> to vector<32x1xf32>
    %c2_91 = arith.constant 2 : index
    %c0_92 = arith.constant 0 : index
    %c0_93 = arith.constant 0 : index
    %191 = vector.load %arg8[%c2_91, %c0_92, %c0_93] : memref<8x32x1xf32, #tpu.memory_space<vmem>>, vector<1x32x1xf32>
    %192 = vector.shape_cast %191 : vector<1x32x1xf32> to vector<32x1xf32>
    %cst_94 = arith.constant dense<0.000000e+00> : vector<32xf32>
    %193 = vector.multi_reduction <add>, %188, %cst_94 [1] : vector<32x128xf32> to vector<32xf32>
    %194 = vector.shape_cast %193 : vector<32xf32> to vector<32x1xf32>
    %cst_95 = arith.constant 1.280000e+02 : f32
    %195 = vector.broadcast %cst_95 : f32 to vector<32x1xf32>
    %196 = arith.divf %194, %195 : vector<32x1xf32>
    %197 = arith.mulf %188, %188 : vector<32x128xf32>
    %cst_96 = arith.constant dense<0.000000e+00> : vector<32xf32>
    %198 = vector.multi_reduction <add>, %197, %cst_96 [1] : vector<32x128xf32> to vector<32xf32>
    %199 = vector.shape_cast %198 : vector<32xf32> to vector<32x1xf32>
    %cst_97 = arith.constant 1.280000e+02 : f32
    %200 = vector.broadcast %cst_97 : f32 to vector<32x1xf32>
    %201 = arith.divf %199, %200 : vector<32x1xf32>
    %202 = arith.mulf %196, %196 : vector<32x1xf32>
    %203 = arith.subf %201, %202 : vector<32x1xf32>
    %cst_98 = arith.constant 9.99999974E-6 : f32
    %204 = vector.broadcast %cst_98 : f32 to vector<32x1xf32>
    %205 = arith.addf %203, %204 : vector<32x1xf32>
    %206 = math.rsqrt %205 : vector<32x1xf32>
    %207 = arith.mulf %206, %190 : vector<32x1xf32>
    %208 = vector.broadcast %196 : vector<32x1xf32> to vector<32x128xf32>
    %209 = arith.subf %188, %208 : vector<32x128xf32>
    %210 = vector.broadcast %207 : vector<32x1xf32> to vector<32x128xf32>
    %211 = arith.mulf %209, %210 : vector<32x128xf32>
    %212 = vector.broadcast %192 : vector<32x1xf32> to vector<32x128xf32>
    %213 = arith.addf %211, %212 : vector<32x128xf32>
    %c2_99 = arith.constant 2 : index
    %c0_100 = arith.constant 0 : index
    %c0_101 = arith.constant 0 : index
    %214 = vector.load %arg9[%c2_99, %c0_100, %c0_101] : memref<8x64x32xf32, #tpu.memory_space<vmem>>, vector<1x64x32xf32>
    %215 = vector.shape_cast %214 : vector<1x64x32xf32> to vector<64x32xf32>
    %cst_102 = arith.constant dense<0.000000e+00> : vector<64x128xf32>
    %216 = tpu.matmul %215, %213, %cst_102 {dimension_numbers = #tpu.dot_dimension_numbers<[1], [0], [0], [1], [0, 0, 1, 1], [], []>} : vector<64x32xf32>, vector<32x128xf32>, vector<64x128xf32> -> vector<64x128xf32>
    %c2_103 = arith.constant 2 : index
    %c0_104 = arith.constant 0 : index
    %c0_105 = arith.constant 0 : index
    %217 = vector.load %arg10[%c2_103, %c0_104, %c0_105] : memref<8x64x1xf32, #tpu.memory_space<vmem>>, vector<1x64x1xf32>
    %218 = vector.shape_cast %217 : vector<1x64x1xf32> to vector<64x1xf32>
    %219 = vector.broadcast %218 : vector<64x1xf32> to vector<64x128xf32>
    %220 = arith.addf %216, %219 : vector<64x128xf32>
    %221 = vector.extract_strided_slice %220 {offsets = [0, 0], sizes = [32, 128], strides = [1, 1]} : vector<64x128xf32> to vector<32x128xf32>
    %222 = arith.addf %151, %221 : vector<32x128xf32>
    %223 = vector.extract_strided_slice %220 {offsets = [32, 0], sizes = [32, 128], strides = [1, 1]} : vector<64x128xf32> to vector<32x128xf32>
    %224 = arith.addf %153, %223 : vector<32x128xf32>
    %c-4_i32 = arith.constant -4 : i32
    %225 = vector.broadcast %c-4_i32 : i32 to vector<32x128xi32>
    %226 = arith.addi %2, %225 : vector<32x128xi32>
    %c0_i32_106 = arith.constant 0 : i32
    %227 = vector.broadcast %c0_i32_106 : i32 to vector<32x128xi32>
    %228 = arith.cmpi sge, %226, %227 : vector<32x128xi32>
    %c-4_i32_107 = arith.constant -4 : i32
    %229 = vector.broadcast %c-4_i32_107 : i32 to vector<32x128xi32>
    %230 = arith.addi %2, %229 : vector<32x128xi32>
    %c64_i32_108 = arith.constant 64 : i32
    %231 = vector.broadcast %c64_i32_108 : i32 to vector<32x128xi32>
    %232 = arith.cmpi slt, %230, %231 : vector<32x128xi32>
    %233 = arith.andi %228, %232 : vector<32x128xi1>
    %c4_i32 = arith.constant 4 : i32
    %234 = tpu.dynamic_rotate %222 by %c4_i32 dim 1 : vector<32x128xf32>, i32 -> vector<32x128xf32>
    %cst_109 = arith.constant 0.000000e+00 : f32
    %235 = vector.broadcast %cst_109 : f32 to vector<32x128xf32>
    %236 = arith.select %233, %234, %235 : vector<32x128xi1>, vector<32x128xf32>
    %c4_i32_110 = arith.constant 4 : i32
    %237 = vector.broadcast %c4_i32_110 : i32 to vector<32x128xi32>
    %238 = arith.addi %2, %237 : vector<32x128xi32>
    %c0_i32_111 = arith.constant 0 : i32
    %239 = vector.broadcast %c0_i32_111 : i32 to vector<32x128xi32>
    %240 = arith.cmpi sge, %238, %239 : vector<32x128xi32>
    %c4_i32_112 = arith.constant 4 : i32
    %241 = vector.broadcast %c4_i32_112 : i32 to vector<32x128xi32>
    %242 = arith.addi %2, %241 : vector<32x128xi32>
    %c64_i32_113 = arith.constant 64 : i32
    %243 = vector.broadcast %c64_i32_113 : i32 to vector<32x128xi32>
    %244 = arith.cmpi slt, %242, %243 : vector<32x128xi32>
    %245 = arith.andi %240, %244 : vector<32x128xi1>
    %c124_i32 = arith.constant 124 : i32
    %246 = tpu.dynamic_rotate %222 by %c124_i32 dim 1 : vector<32x128xf32>, i32 -> vector<32x128xf32>
    %cst_114 = arith.constant 0.000000e+00 : f32
    %247 = vector.broadcast %cst_114 : f32 to vector<32x128xf32>
    %248 = arith.select %245, %246, %247 : vector<32x128xi1>, vector<32x128xf32>
    %249 = tpu.concatenate %236, %248 in 0 : vector<32x128xf32>, vector<32x128xf32> -> vector<64x128xf32>
    %c3 = arith.constant 3 : index
    %c0_115 = arith.constant 0 : index
    %c0_116 = arith.constant 0 : index
    %250 = vector.load %arg5[%c3, %c0_115, %c0_116] : memref<8x64x64xf32, #tpu.memory_space<vmem>>, vector<1x64x64xf32>
    %251 = vector.shape_cast %250 : vector<1x64x64xf32> to vector<64x64xf32>
    %cst_117 = arith.constant dense<0.000000e+00> : vector<64x128xf32>
    %252 = tpu.matmul %251, %249, %cst_117 {dimension_numbers = #tpu.dot_dimension_numbers<[1], [0], [0], [1], [0, 0, 1, 1], [], []>} : vector<64x64xf32>, vector<64x128xf32>, vector<64x128xf32> -> vector<64x128xf32>
    %c3_118 = arith.constant 3 : index
    %c0_119 = arith.constant 0 : index
    %c0_120 = arith.constant 0 : index
    %253 = vector.load %arg6[%c3_118, %c0_119, %c0_120] : memref<8x64x1xf32, #tpu.memory_space<vmem>>, vector<1x64x1xf32>
    %254 = vector.shape_cast %253 : vector<1x64x1xf32> to vector<64x1xf32>
    %255 = vector.broadcast %254 : vector<64x1xf32> to vector<64x128xf32>
    %256 = arith.addf %252, %255 : vector<64x128xf32>
    %257 = vector.extract_strided_slice %256 {offsets = [0, 0], sizes = [32, 128], strides = [1, 1]} : vector<64x128xf32> to vector<32x128xf32>
    %258 = vector.extract_strided_slice %256 {offsets = [32, 0], sizes = [32, 128], strides = [1, 1]} : vector<64x128xf32> to vector<32x128xf32>
    %259 = arith.mulf %257, %258 : vector<32x128xf32>
    %c3_121 = arith.constant 3 : index
    %c0_122 = arith.constant 0 : index
    %c0_123 = arith.constant 0 : index
    %260 = vector.load %arg7[%c3_121, %c0_122, %c0_123] : memref<8x32x1xf32, #tpu.memory_space<vmem>>, vector<1x32x1xf32>
    %261 = vector.shape_cast %260 : vector<1x32x1xf32> to vector<32x1xf32>
    %c3_124 = arith.constant 3 : index
    %c0_125 = arith.constant 0 : index
    %c0_126 = arith.constant 0 : index
    %262 = vector.load %arg8[%c3_124, %c0_125, %c0_126] : memref<8x32x1xf32, #tpu.memory_space<vmem>>, vector<1x32x1xf32>
    %263 = vector.shape_cast %262 : vector<1x32x1xf32> to vector<32x1xf32>
    %cst_127 = arith.constant dense<0.000000e+00> : vector<32xf32>
    %264 = vector.multi_reduction <add>, %259, %cst_127 [1] : vector<32x128xf32> to vector<32xf32>
    %265 = vector.shape_cast %264 : vector<32xf32> to vector<32x1xf32>
    %cst_128 = arith.constant 1.280000e+02 : f32
    %266 = vector.broadcast %cst_128 : f32 to vector<32x1xf32>
    %267 = arith.divf %265, %266 : vector<32x1xf32>
    %268 = arith.mulf %259, %259 : vector<32x128xf32>
    %cst_129 = arith.constant dense<0.000000e+00> : vector<32xf32>
    %269 = vector.multi_reduction <add>, %268, %cst_129 [1] : vector<32x128xf32> to vector<32xf32>
    %270 = vector.shape_cast %269 : vector<32xf32> to vector<32x1xf32>
    %cst_130 = arith.constant 1.280000e+02 : f32
    %271 = vector.broadcast %cst_130 : f32 to vector<32x1xf32>
    %272 = arith.divf %270, %271 : vector<32x1xf32>
    %273 = arith.mulf %267, %267 : vector<32x1xf32>
    %274 = arith.subf %272, %273 : vector<32x1xf32>
    %cst_131 = arith.constant 9.99999974E-6 : f32
    %275 = vector.broadcast %cst_131 : f32 to vector<32x1xf32>
    %276 = arith.addf %274, %275 : vector<32x1xf32>
    %277 = math.rsqrt %276 : vector<32x1xf32>
    %278 = arith.mulf %277, %261 : vector<32x1xf32>
    %279 = vector.broadcast %267 : vector<32x1xf32> to vector<32x128xf32>
    %280 = arith.subf %259, %279 : vector<32x128xf32>
    %281 = vector.broadcast %278 : vector<32x1xf32> to vector<32x128xf32>
    %282 = arith.mulf %280, %281 : vector<32x128xf32>
    %283 = vector.broadcast %263 : vector<32x1xf32> to vector<32x128xf32>
    %284 = arith.addf %282, %283 : vector<32x128xf32>
    %c3_132 = arith.constant 3 : index
    %c0_133 = arith.constant 0 : index
    %c0_134 = arith.constant 0 : index
    %285 = vector.load %arg9[%c3_132, %c0_133, %c0_134] : memref<8x64x32xf32, #tpu.memory_space<vmem>>, vector<1x64x32xf32>
    %286 = vector.shape_cast %285 : vector<1x64x32xf32> to vector<64x32xf32>
    %cst_135 = arith.constant dense<0.000000e+00> : vector<64x128xf32>
    %287 = tpu.matmul %286, %284, %cst_135 {dimension_numbers = #tpu.dot_dimension_numbers<[1], [0], [0], [1], [0, 0, 1, 1], [], []>} : vector<64x32xf32>, vector<32x128xf32>, vector<64x128xf32> -> vector<64x128xf32>
    %c3_136 = arith.constant 3 : index
    %c0_137 = arith.constant 0 : index
    %c0_138 = arith.constant 0 : index
    %288 = vector.load %arg10[%c3_136, %c0_137, %c0_138] : memref<8x64x1xf32, #tpu.memory_space<vmem>>, vector<1x64x1xf32>
    %289 = vector.shape_cast %288 : vector<1x64x1xf32> to vector<64x1xf32>
    %290 = vector.broadcast %289 : vector<64x1xf32> to vector<64x128xf32>
    %291 = arith.addf %287, %290 : vector<64x128xf32>
    %292 = vector.extract_strided_slice %291 {offsets = [0, 0], sizes = [32, 128], strides = [1, 1]} : vector<64x128xf32> to vector<32x128xf32>
    %293 = arith.addf %222, %292 : vector<32x128xf32>
    %294 = vector.extract_strided_slice %291 {offsets = [32, 0], sizes = [32, 128], strides = [1, 1]} : vector<64x128xf32> to vector<32x128xf32>
    %295 = arith.addf %224, %294 : vector<32x128xf32>
    %c1_i32_139 = arith.constant 1 : i32
    %296 = tpu.dynamic_rotate %293 by %c1_i32_139 dim 1 : vector<32x128xf32>, i32 -> vector<32x128xf32>
    %cst_140 = arith.constant 0.000000e+00 : f32
    %297 = vector.broadcast %cst_140 : f32 to vector<32x128xf32>
    %298 = arith.select %41, %296, %297 : vector<32x128xi1>, vector<32x128xf32>
    %299 = tpu.concatenate %298, %293 in 0 : vector<32x128xf32>, vector<32x128xf32> -> vector<64x128xf32>
    %c4 = arith.constant 4 : index
    %c0_141 = arith.constant 0 : index
    %c0_142 = arith.constant 0 : index
    %300 = vector.load %arg5[%c4, %c0_141, %c0_142] : memref<8x64x64xf32, #tpu.memory_space<vmem>>, vector<1x64x64xf32>
    %301 = vector.shape_cast %300 : vector<1x64x64xf32> to vector<64x64xf32>
    %cst_143 = arith.constant dense<0.000000e+00> : vector<64x128xf32>
    %302 = tpu.matmul %301, %299, %cst_143 {dimension_numbers = #tpu.dot_dimension_numbers<[1], [0], [0], [1], [0, 0, 1, 1], [], []>} : vector<64x64xf32>, vector<64x128xf32>, vector<64x128xf32> -> vector<64x128xf32>
    %c4_144 = arith.constant 4 : index
    %c0_145 = arith.constant 0 : index
    %c0_146 = arith.constant 0 : index
    %303 = vector.load %arg6[%c4_144, %c0_145, %c0_146] : memref<8x64x1xf32, #tpu.memory_space<vmem>>, vector<1x64x1xf32>
    %304 = vector.shape_cast %303 : vector<1x64x1xf32> to vector<64x1xf32>
    %305 = vector.broadcast %304 : vector<64x1xf32> to vector<64x128xf32>
    %306 = arith.addf %302, %305 : vector<64x128xf32>
    %307 = vector.extract_strided_slice %306 {offsets = [0, 0], sizes = [32, 128], strides = [1, 1]} : vector<64x128xf32> to vector<32x128xf32>
    %308 = vector.extract_strided_slice %306 {offsets = [32, 0], sizes = [32, 128], strides = [1, 1]} : vector<64x128xf32> to vector<32x128xf32>
    %309 = arith.mulf %307, %308 : vector<32x128xf32>
    %c4_147 = arith.constant 4 : index
    %c0_148 = arith.constant 0 : index
    %c0_149 = arith.constant 0 : index
    %310 = vector.load %arg7[%c4_147, %c0_148, %c0_149] : memref<8x32x1xf32, #tpu.memory_space<vmem>>, vector<1x32x1xf32>
    %311 = vector.shape_cast %310 : vector<1x32x1xf32> to vector<32x1xf32>
    %c4_150 = arith.constant 4 : index
    %c0_151 = arith.constant 0 : index
    %c0_152 = arith.constant 0 : index
    %312 = vector.load %arg8[%c4_150, %c0_151, %c0_152] : memref<8x32x1xf32, #tpu.memory_space<vmem>>, vector<1x32x1xf32>
    %313 = vector.shape_cast %312 : vector<1x32x1xf32> to vector<32x1xf32>
    %cst_153 = arith.constant dense<0.000000e+00> : vector<32xf32>
    %314 = vector.multi_reduction <add>, %309, %cst_153 [1] : vector<32x128xf32> to vector<32xf32>
    %315 = vector.shape_cast %314 : vector<32xf32> to vector<32x1xf32>
    %cst_154 = arith.constant 1.280000e+02 : f32
    %316 = vector.broadcast %cst_154 : f32 to vector<32x1xf32>
    %317 = arith.divf %315, %316 : vector<32x1xf32>
    %318 = arith.mulf %309, %309 : vector<32x128xf32>
    %cst_155 = arith.constant dense<0.000000e+00> : vector<32xf32>
    %319 = vector.multi_reduction <add>, %318, %cst_155 [1] : vector<32x128xf32> to vector<32xf32>
    %320 = vector.shape_cast %319 : vector<32xf32> to vector<32x1xf32>
    %cst_156 = arith.constant 1.280000e+02 : f32
    %321 = vector.broadcast %cst_156 : f32 to vector<32x1xf32>
    %322 = arith.divf %320, %321 : vector<32x1xf32>
    %323 = arith.mulf %317, %317 : vector<32x1xf32>
    %324 = arith.subf %322, %323 : vector<32x1xf32>
    %cst_157 = arith.constant 9.99999974E-6 : f32
    %325 = vector.broadcast %cst_157 : f32 to vector<32x1xf32>
    %326 = arith.addf %324, %325 : vector<32x1xf32>
    %327 = math.rsqrt %326 : vector<32x1xf32>
    %328 = arith.mulf %327, %311 : vector<32x1xf32>
    %329 = vector.broadcast %317 : vector<32x1xf32> to vector<32x128xf32>
    %330 = arith.subf %309, %329 : vector<32x128xf32>
    %331 = vector.broadcast %328 : vector<32x1xf32> to vector<32x128xf32>
    %332 = arith.mulf %330, %331 : vector<32x128xf32>
    %333 = vector.broadcast %313 : vector<32x1xf32> to vector<32x128xf32>
    %334 = arith.addf %332, %333 : vector<32x128xf32>
    %c4_158 = arith.constant 4 : index
    %c0_159 = arith.constant 0 : index
    %c0_160 = arith.constant 0 : index
    %335 = vector.load %arg9[%c4_158, %c0_159, %c0_160] : memref<8x64x32xf32, #tpu.memory_space<vmem>>, vector<1x64x32xf32>
    %336 = vector.shape_cast %335 : vector<1x64x32xf32> to vector<64x32xf32>
    %cst_161 = arith.constant dense<0.000000e+00> : vector<64x128xf32>
    %337 = tpu.matmul %336, %334, %cst_161 {dimension_numbers = #tpu.dot_dimension_numbers<[1], [0], [0], [1], [0, 0, 1, 1], [], []>} : vector<64x32xf32>, vector<32x128xf32>, vector<64x128xf32> -> vector<64x128xf32>
    %c4_162 = arith.constant 4 : index
    %c0_163 = arith.constant 0 : index
    %c0_164 = arith.constant 0 : index
    %338 = vector.load %arg10[%c4_162, %c0_163, %c0_164] : memref<8x64x1xf32, #tpu.memory_space<vmem>>, vector<1x64x1xf32>
    %339 = vector.shape_cast %338 : vector<1x64x1xf32> to vector<64x1xf32>
    %340 = vector.broadcast %339 : vector<64x1xf32> to vector<64x128xf32>
    %341 = arith.addf %337, %340 : vector<64x128xf32>
    %342 = vector.extract_strided_slice %341 {offsets = [0, 0], sizes = [32, 128], strides = [1, 1]} : vector<64x128xf32> to vector<32x128xf32>
    %343 = arith.addf %293, %342 : vector<32x128xf32>
    %344 = vector.extract_strided_slice %341 {offsets = [32, 0], sizes = [32, 128], strides = [1, 1]} : vector<64x128xf32> to vector<32x128xf32>
    %345 = arith.addf %295, %344 : vector<32x128xf32>
    %c1_i32_165 = arith.constant 1 : i32
    %346 = tpu.dynamic_rotate %343 by %c1_i32_165 dim 1 : vector<32x128xf32>, i32 -> vector<32x128xf32>
    %cst_166 = arith.constant 0.000000e+00 : f32
    %347 = vector.broadcast %cst_166 : f32 to vector<32x128xf32>
    %348 = arith.select %41, %346, %347 : vector<32x128xi1>, vector<32x128xf32>
    %c127_i32_167 = arith.constant 127 : i32
    %349 = tpu.dynamic_rotate %343 by %c127_i32_167 dim 1 : vector<32x128xf32>, i32 -> vector<32x128xf32>
    %cst_168 = arith.constant 0.000000e+00 : f32
    %350 = vector.broadcast %cst_168 : f32 to vector<32x128xf32>
    %351 = arith.select %103, %349, %350 : vector<32x128xi1>, vector<32x128xf32>
    %352 = tpu.concatenate %348, %351 in 0 : vector<32x128xf32>, vector<32x128xf32> -> vector<64x128xf32>
    %c5 = arith.constant 5 : index
    %c0_169 = arith.constant 0 : index
    %c0_170 = arith.constant 0 : index
    %353 = vector.load %arg5[%c5, %c0_169, %c0_170] : memref<8x64x64xf32, #tpu.memory_space<vmem>>, vector<1x64x64xf32>
    %354 = vector.shape_cast %353 : vector<1x64x64xf32> to vector<64x64xf32>
    %cst_171 = arith.constant dense<0.000000e+00> : vector<64x128xf32>
    %355 = tpu.matmul %354, %352, %cst_171 {dimension_numbers = #tpu.dot_dimension_numbers<[1], [0], [0], [1], [0, 0, 1, 1], [], []>} : vector<64x64xf32>, vector<64x128xf32>, vector<64x128xf32> -> vector<64x128xf32>
    %c5_172 = arith.constant 5 : index
    %c0_173 = arith.constant 0 : index
    %c0_174 = arith.constant 0 : index
    %356 = vector.load %arg6[%c5_172, %c0_173, %c0_174] : memref<8x64x1xf32, #tpu.memory_space<vmem>>, vector<1x64x1xf32>
    %357 = vector.shape_cast %356 : vector<1x64x1xf32> to vector<64x1xf32>
    %358 = vector.broadcast %357 : vector<64x1xf32> to vector<64x128xf32>
    %359 = arith.addf %355, %358 : vector<64x128xf32>
    %360 = vector.extract_strided_slice %359 {offsets = [0, 0], sizes = [32, 128], strides = [1, 1]} : vector<64x128xf32> to vector<32x128xf32>
    %361 = vector.extract_strided_slice %359 {offsets = [32, 0], sizes = [32, 128], strides = [1, 1]} : vector<64x128xf32> to vector<32x128xf32>
    %362 = arith.mulf %360, %361 : vector<32x128xf32>
    %c5_175 = arith.constant 5 : index
    %c0_176 = arith.constant 0 : index
    %c0_177 = arith.constant 0 : index
    %363 = vector.load %arg7[%c5_175, %c0_176, %c0_177] : memref<8x32x1xf32, #tpu.memory_space<vmem>>, vector<1x32x1xf32>
    %364 = vector.shape_cast %363 : vector<1x32x1xf32> to vector<32x1xf32>
    %c5_178 = arith.constant 5 : index
    %c0_179 = arith.constant 0 : index
    %c0_180 = arith.constant 0 : index
    %365 = vector.load %arg8[%c5_178, %c0_179, %c0_180] : memref<8x32x1xf32, #tpu.memory_space<vmem>>, vector<1x32x1xf32>
    %366 = vector.shape_cast %365 : vector<1x32x1xf32> to vector<32x1xf32>
    %cst_181 = arith.constant dense<0.000000e+00> : vector<32xf32>
    %367 = vector.multi_reduction <add>, %362, %cst_181 [1] : vector<32x128xf32> to vector<32xf32>
    %368 = vector.shape_cast %367 : vector<32xf32> to vector<32x1xf32>
    %cst_182 = arith.constant 1.280000e+02 : f32
    %369 = vector.broadcast %cst_182 : f32 to vector<32x1xf32>
    %370 = arith.divf %368, %369 : vector<32x1xf32>
    %371 = arith.mulf %362, %362 : vector<32x128xf32>
    %cst_183 = arith.constant dense<0.000000e+00> : vector<32xf32>
    %372 = vector.multi_reduction <add>, %371, %cst_183 [1] : vector<32x128xf32> to vector<32xf32>
    %373 = vector.shape_cast %372 : vector<32xf32> to vector<32x1xf32>
    %cst_184 = arith.constant 1.280000e+02 : f32
    %374 = vector.broadcast %cst_184 : f32 to vector<32x1xf32>
    %375 = arith.divf %373, %374 : vector<32x1xf32>
    %376 = arith.mulf %370, %370 : vector<32x1xf32>
    %377 = arith.subf %375, %376 : vector<32x1xf32>
    %cst_185 = arith.constant 9.99999974E-6 : f32
    %378 = vector.broadcast %cst_185 : f32 to vector<32x1xf32>
    %379 = arith.addf %377, %378 : vector<32x1xf32>
    %380 = math.rsqrt %379 : vector<32x1xf32>
    %381 = arith.mulf %380, %364 : vector<32x1xf32>
    %382 = vector.broadcast %370 : vector<32x1xf32> to vector<32x128xf32>
    %383 = arith.subf %362, %382 : vector<32x128xf32>
    %384 = vector.broadcast %381 : vector<32x1xf32> to vector<32x128xf32>
    %385 = arith.mulf %383, %384 : vector<32x128xf32>
    %386 = vector.broadcast %366 : vector<32x1xf32> to vector<32x128xf32>
    %387 = arith.addf %385, %386 : vector<32x128xf32>
    %c5_186 = arith.constant 5 : index
    %c0_187 = arith.constant 0 : index
    %c0_188 = arith.constant 0 : index
    %388 = vector.load %arg9[%c5_186, %c0_187, %c0_188] : memref<8x64x32xf32, #tpu.memory_space<vmem>>, vector<1x64x32xf32>
    %389 = vector.shape_cast %388 : vector<1x64x32xf32> to vector<64x32xf32>
    %cst_189 = arith.constant dense<0.000000e+00> : vector<64x128xf32>
    %390 = tpu.matmul %389, %387, %cst_189 {dimension_numbers = #tpu.dot_dimension_numbers<[1], [0], [0], [1], [0, 0, 1, 1], [], []>} : vector<64x32xf32>, vector<32x128xf32>, vector<64x128xf32> -> vector<64x128xf32>
    %c5_190 = arith.constant 5 : index
    %c0_191 = arith.constant 0 : index
    %c0_192 = arith.constant 0 : index
    %391 = vector.load %arg10[%c5_190, %c0_191, %c0_192] : memref<8x64x1xf32, #tpu.memory_space<vmem>>, vector<1x64x1xf32>
    %392 = vector.shape_cast %391 : vector<1x64x1xf32> to vector<64x1xf32>
    %393 = vector.broadcast %392 : vector<64x1xf32> to vector<64x128xf32>
    %394 = arith.addf %390, %393 : vector<64x128xf32>
    %395 = vector.extract_strided_slice %394 {offsets = [0, 0], sizes = [32, 128], strides = [1, 1]} : vector<64x128xf32> to vector<32x128xf32>
    %396 = arith.addf %343, %395 : vector<32x128xf32>
    %397 = vector.extract_strided_slice %394 {offsets = [32, 0], sizes = [32, 128], strides = [1, 1]} : vector<64x128xf32> to vector<32x128xf32>
    %398 = arith.addf %345, %397 : vector<32x128xf32>
    %c2_i32_193 = arith.constant 2 : i32
    %399 = tpu.dynamic_rotate %396 by %c2_i32_193 dim 1 : vector<32x128xf32>, i32 -> vector<32x128xf32>
    %cst_194 = arith.constant 0.000000e+00 : f32
    %400 = vector.broadcast %cst_194 : f32 to vector<32x128xf32>
    %401 = arith.select %162, %399, %400 : vector<32x128xi1>, vector<32x128xf32>
    %c126_i32_195 = arith.constant 126 : i32
    %402 = tpu.dynamic_rotate %396 by %c126_i32_195 dim 1 : vector<32x128xf32>, i32 -> vector<32x128xf32>
    %cst_196 = arith.constant 0.000000e+00 : f32
    %403 = vector.broadcast %cst_196 : f32 to vector<32x128xf32>
    %404 = arith.select %174, %402, %403 : vector<32x128xi1>, vector<32x128xf32>
    %405 = tpu.concatenate %401, %404 in 0 : vector<32x128xf32>, vector<32x128xf32> -> vector<64x128xf32>
    %c6 = arith.constant 6 : index
    %c0_197 = arith.constant 0 : index
    %c0_198 = arith.constant 0 : index
    %406 = vector.load %arg5[%c6, %c0_197, %c0_198] : memref<8x64x64xf32, #tpu.memory_space<vmem>>, vector<1x64x64xf32>
    %407 = vector.shape_cast %406 : vector<1x64x64xf32> to vector<64x64xf32>
    %cst_199 = arith.constant dense<0.000000e+00> : vector<64x128xf32>
    %408 = tpu.matmul %407, %405, %cst_199 {dimension_numbers = #tpu.dot_dimension_numbers<[1], [0], [0], [1], [0, 0, 1, 1], [], []>} : vector<64x64xf32>, vector<64x128xf32>, vector<64x128xf32> -> vector<64x128xf32>
    %c6_200 = arith.constant 6 : index
    %c0_201 = arith.constant 0 : index
    %c0_202 = arith.constant 0 : index
    %409 = vector.load %arg6[%c6_200, %c0_201, %c0_202] : memref<8x64x1xf32, #tpu.memory_space<vmem>>, vector<1x64x1xf32>
    %410 = vector.shape_cast %409 : vector<1x64x1xf32> to vector<64x1xf32>
    %411 = vector.broadcast %410 : vector<64x1xf32> to vector<64x128xf32>
    %412 = arith.addf %408, %411 : vector<64x128xf32>
    %413 = vector.extract_strided_slice %412 {offsets = [0, 0], sizes = [32, 128], strides = [1, 1]} : vector<64x128xf32> to vector<32x128xf32>
    %414 = vector.extract_strided_slice %412 {offsets = [32, 0], sizes = [32, 128], strides = [1, 1]} : vector<64x128xf32> to vector<32x128xf32>
    %415 = arith.mulf %413, %414 : vector<32x128xf32>
    %c6_203 = arith.constant 6 : index
    %c0_204 = arith.constant 0 : index
    %c0_205 = arith.constant 0 : index
    %416 = vector.load %arg7[%c6_203, %c0_204, %c0_205] : memref<8x32x1xf32, #tpu.memory_space<vmem>>, vector<1x32x1xf32>
    %417 = vector.shape_cast %416 : vector<1x32x1xf32> to vector<32x1xf32>
    %c6_206 = arith.constant 6 : index
    %c0_207 = arith.constant 0 : index
    %c0_208 = arith.constant 0 : index
    %418 = vector.load %arg8[%c6_206, %c0_207, %c0_208] : memref<8x32x1xf32, #tpu.memory_space<vmem>>, vector<1x32x1xf32>
    %419 = vector.shape_cast %418 : vector<1x32x1xf32> to vector<32x1xf32>
    %cst_209 = arith.constant dense<0.000000e+00> : vector<32xf32>
    %420 = vector.multi_reduction <add>, %415, %cst_209 [1] : vector<32x128xf32> to vector<32xf32>
    %421 = vector.shape_cast %420 : vector<32xf32> to vector<32x1xf32>
    %cst_210 = arith.constant 1.280000e+02 : f32
    %422 = vector.broadcast %cst_210 : f32 to vector<32x1xf32>
    %423 = arith.divf %421, %422 : vector<32x1xf32>
    %424 = arith.mulf %415, %415 : vector<32x128xf32>
    %cst_211 = arith.constant dense<0.000000e+00> : vector<32xf32>
    %425 = vector.multi_reduction <add>, %424, %cst_211 [1] : vector<32x128xf32> to vector<32xf32>
    %426 = vector.shape_cast %425 : vector<32xf32> to vector<32x1xf32>
    %cst_212 = arith.constant 1.280000e+02 : f32
    %427 = vector.broadcast %cst_212 : f32 to vector<32x1xf32>
    %428 = arith.divf %426, %427 : vector<32x1xf32>
    %429 = arith.mulf %423, %423 : vector<32x1xf32>
    %430 = arith.subf %428, %429 : vector<32x1xf32>
    %cst_213 = arith.constant 9.99999974E-6 : f32
    %431 = vector.broadcast %cst_213 : f32 to vector<32x1xf32>
    %432 = arith.addf %430, %431 : vector<32x1xf32>
    %433 = math.rsqrt %432 : vector<32x1xf32>
    %434 = arith.mulf %433, %417 : vector<32x1xf32>
    %435 = vector.broadcast %423 : vector<32x1xf32> to vector<32x128xf32>
    %436 = arith.subf %415, %435 : vector<32x128xf32>
    %437 = vector.broadcast %434 : vector<32x1xf32> to vector<32x128xf32>
    %438 = arith.mulf %436, %437 : vector<32x128xf32>
    %439 = vector.broadcast %419 : vector<32x1xf32> to vector<32x128xf32>
    %440 = arith.addf %438, %439 : vector<32x128xf32>
    %c6_214 = arith.constant 6 : index
    %c0_215 = arith.constant 0 : index
    %c0_216 = arith.constant 0 : index
    %441 = vector.load %arg9[%c6_214, %c0_215, %c0_216] : memref<8x64x32xf32, #tpu.memory_space<vmem>>, vector<1x64x32xf32>
    %442 = vector.shape_cast %441 : vector<1x64x32xf32> to vector<64x32xf32>
    %cst_217 = arith.constant dense<0.000000e+00> : vector<64x128xf32>
    %443 = tpu.matmul %442, %440, %cst_217 {dimension_numbers = #tpu.dot_dimension_numbers<[1], [0], [0], [1], [0, 0, 1, 1], [], []>} : vector<64x32xf32>, vector<32x128xf32>, vector<64x128xf32> -> vector<64x128xf32>
    %c6_218 = arith.constant 6 : index
    %c0_219 = arith.constant 0 : index
    %c0_220 = arith.constant 0 : index
    %444 = vector.load %arg10[%c6_218, %c0_219, %c0_220] : memref<8x64x1xf32, #tpu.memory_space<vmem>>, vector<1x64x1xf32>
    %445 = vector.shape_cast %444 : vector<1x64x1xf32> to vector<64x1xf32>
    %446 = vector.broadcast %445 : vector<64x1xf32> to vector<64x128xf32>
    %447 = arith.addf %443, %446 : vector<64x128xf32>
    %448 = vector.extract_strided_slice %447 {offsets = [0, 0], sizes = [32, 128], strides = [1, 1]} : vector<64x128xf32> to vector<32x128xf32>
    %449 = arith.addf %396, %448 : vector<32x128xf32>
    %450 = vector.extract_strided_slice %447 {offsets = [32, 0], sizes = [32, 128], strides = [1, 1]} : vector<64x128xf32> to vector<32x128xf32>
    %451 = arith.addf %398, %450 : vector<32x128xf32>
    %c4_i32_221 = arith.constant 4 : i32
    %452 = tpu.dynamic_rotate %449 by %c4_i32_221 dim 1 : vector<32x128xf32>, i32 -> vector<32x128xf32>
    %cst_222 = arith.constant 0.000000e+00 : f32
    %453 = vector.broadcast %cst_222 : f32 to vector<32x128xf32>
    %454 = arith.select %233, %452, %453 : vector<32x128xi1>, vector<32x128xf32>
    %c124_i32_223 = arith.constant 124 : i32
    %455 = tpu.dynamic_rotate %449 by %c124_i32_223 dim 1 : vector<32x128xf32>, i32 -> vector<32x128xf32>
    %cst_224 = arith.constant 0.000000e+00 : f32
    %456 = vector.broadcast %cst_224 : f32 to vector<32x128xf32>
    %457 = arith.select %245, %455, %456 : vector<32x128xi1>, vector<32x128xf32>
    %458 = tpu.concatenate %454, %457 in 0 : vector<32x128xf32>, vector<32x128xf32> -> vector<64x128xf32>
    %c7 = arith.constant 7 : index
    %c0_225 = arith.constant 0 : index
    %c0_226 = arith.constant 0 : index
    %459 = vector.load %arg5[%c7, %c0_225, %c0_226] : memref<8x64x64xf32, #tpu.memory_space<vmem>>, vector<1x64x64xf32>
    %460 = vector.shape_cast %459 : vector<1x64x64xf32> to vector<64x64xf32>
    %cst_227 = arith.constant dense<0.000000e+00> : vector<64x128xf32>
    %461 = tpu.matmul %460, %458, %cst_227 {dimension_numbers = #tpu.dot_dimension_numbers<[1], [0], [0], [1], [0, 0, 1, 1], [], []>} : vector<64x64xf32>, vector<64x128xf32>, vector<64x128xf32> -> vector<64x128xf32>
    %c7_228 = arith.constant 7 : index
    %c0_229 = arith.constant 0 : index
    %c0_230 = arith.constant 0 : index
    %462 = vector.load %arg6[%c7_228, %c0_229, %c0_230] : memref<8x64x1xf32, #tpu.memory_space<vmem>>, vector<1x64x1xf32>
    %463 = vector.shape_cast %462 : vector<1x64x1xf32> to vector<64x1xf32>
    %464 = vector.broadcast %463 : vector<64x1xf32> to vector<64x128xf32>
    %465 = arith.addf %461, %464 : vector<64x128xf32>
    %466 = vector.extract_strided_slice %465 {offsets = [0, 0], sizes = [32, 128], strides = [1, 1]} : vector<64x128xf32> to vector<32x128xf32>
    %467 = vector.extract_strided_slice %465 {offsets = [32, 0], sizes = [32, 128], strides = [1, 1]} : vector<64x128xf32> to vector<32x128xf32>
    %468 = arith.mulf %466, %467 : vector<32x128xf32>
    %c7_231 = arith.constant 7 : index
    %c0_232 = arith.constant 0 : index
    %c0_233 = arith.constant 0 : index
    %469 = vector.load %arg7[%c7_231, %c0_232, %c0_233] : memref<8x32x1xf32, #tpu.memory_space<vmem>>, vector<1x32x1xf32>
    %470 = vector.shape_cast %469 : vector<1x32x1xf32> to vector<32x1xf32>
    %c7_234 = arith.constant 7 : index
    %c0_235 = arith.constant 0 : index
    %c0_236 = arith.constant 0 : index
    %471 = vector.load %arg8[%c7_234, %c0_235, %c0_236] : memref<8x32x1xf32, #tpu.memory_space<vmem>>, vector<1x32x1xf32>
    %472 = vector.shape_cast %471 : vector<1x32x1xf32> to vector<32x1xf32>
    %cst_237 = arith.constant dense<0.000000e+00> : vector<32xf32>
    %473 = vector.multi_reduction <add>, %468, %cst_237 [1] : vector<32x128xf32> to vector<32xf32>
    %474 = vector.shape_cast %473 : vector<32xf32> to vector<32x1xf32>
    %cst_238 = arith.constant 1.280000e+02 : f32
    %475 = vector.broadcast %cst_238 : f32 to vector<32x1xf32>
    %476 = arith.divf %474, %475 : vector<32x1xf32>
    %477 = arith.mulf %468, %468 : vector<32x128xf32>
    %cst_239 = arith.constant dense<0.000000e+00> : vector<32xf32>
    %478 = vector.multi_reduction <add>, %477, %cst_239 [1] : vector<32x128xf32> to vector<32xf32>
    %479 = vector.shape_cast %478 : vector<32xf32> to vector<32x1xf32>
    %cst_240 = arith.constant 1.280000e+02 : f32
    %480 = vector.broadcast %cst_240 : f32 to vector<32x1xf32>
    %481 = arith.divf %479, %480 : vector<32x1xf32>
    %482 = arith.mulf %476, %476 : vector<32x1xf32>
    %483 = arith.subf %481, %482 : vector<32x1xf32>
    %cst_241 = arith.constant 9.99999974E-6 : f32
    %484 = vector.broadcast %cst_241 : f32 to vector<32x1xf32>
    %485 = arith.addf %483, %484 : vector<32x1xf32>
    %486 = math.rsqrt %485 : vector<32x1xf32>
    %487 = arith.mulf %486, %470 : vector<32x1xf32>
    %488 = vector.broadcast %476 : vector<32x1xf32> to vector<32x128xf32>
    %489 = arith.subf %468, %488 : vector<32x128xf32>
    %490 = vector.broadcast %487 : vector<32x1xf32> to vector<32x128xf32>
    %491 = arith.mulf %489, %490 : vector<32x128xf32>
    %492 = vector.broadcast %472 : vector<32x1xf32> to vector<32x128xf32>
    %493 = arith.addf %491, %492 : vector<32x128xf32>
    %c7_242 = arith.constant 7 : index
    %c0_243 = arith.constant 0 : index
    %c0_244 = arith.constant 0 : index
    %494 = vector.load %arg9[%c7_242, %c0_243, %c0_244] : memref<8x64x32xf32, #tpu.memory_space<vmem>>, vector<1x64x32xf32>
    %495 = vector.shape_cast %494 : vector<1x64x32xf32> to vector<64x32xf32>
    %cst_245 = arith.constant dense<0.000000e+00> : vector<64x128xf32>
    %496 = tpu.matmul %495, %493, %cst_245 {dimension_numbers = #tpu.dot_dimension_numbers<[1], [0], [0], [1], [0, 0, 1, 1], [], []>} : vector<64x32xf32>, vector<32x128xf32>, vector<64x128xf32> -> vector<64x128xf32>
    %c7_246 = arith.constant 7 : index
    %c0_247 = arith.constant 0 : index
    %c0_248 = arith.constant 0 : index
    %497 = vector.load %arg10[%c7_246, %c0_247, %c0_248] : memref<8x64x1xf32, #tpu.memory_space<vmem>>, vector<1x64x1xf32>
    %498 = vector.shape_cast %497 : vector<1x64x1xf32> to vector<64x1xf32>
    %499 = vector.broadcast %498 : vector<64x1xf32> to vector<64x128xf32>
    %500 = arith.addf %496, %499 : vector<64x128xf32>
    %501 = vector.extract_strided_slice %500 {offsets = [32, 0], sizes = [32, 128], strides = [1, 1]} : vector<64x128xf32> to vector<32x128xf32>
    %502 = arith.addf %451, %501 : vector<32x128xf32>
    %cst_249 = arith.constant 0.000000e+00 : f32
    %503 = vector.broadcast %cst_249 : f32 to vector<32x128xf32>
    %504 = arith.maximumf %502, %503 : vector<32x128xf32>
    %c0_250 = arith.constant 0 : index
    %c0_251 = arith.constant 0 : index
    %505 = vector.load %arg11[%c0_250, %c0_251] : memref<32x1xf32, #tpu.memory_space<vmem>>, vector<32x1xf32>
    %c0_252 = arith.constant 0 : index
    %c0_253 = arith.constant 0 : index
    %506 = vector.load %arg12[%c0_252, %c0_253] : memref<32x1xf32, #tpu.memory_space<vmem>>, vector<32x1xf32>
    %cst_254 = arith.constant dense<0.000000e+00> : vector<32xf32>
    %507 = vector.multi_reduction <add>, %504, %cst_254 [1] : vector<32x128xf32> to vector<32xf32>
    %508 = vector.shape_cast %507 : vector<32xf32> to vector<32x1xf32>
    %cst_255 = arith.constant 1.280000e+02 : f32
    %509 = vector.broadcast %cst_255 : f32 to vector<32x1xf32>
    %510 = arith.divf %508, %509 : vector<32x1xf32>
    %511 = arith.mulf %504, %504 : vector<32x128xf32>
    %cst_256 = arith.constant dense<0.000000e+00> : vector<32xf32>
    %512 = vector.multi_reduction <add>, %511, %cst_256 [1] : vector<32x128xf32> to vector<32xf32>
    %513 = vector.shape_cast %512 : vector<32xf32> to vector<32x1xf32>
    %cst_257 = arith.constant 1.280000e+02 : f32
    %514 = vector.broadcast %cst_257 : f32 to vector<32x1xf32>
    %515 = arith.divf %513, %514 : vector<32x1xf32>
    %516 = arith.mulf %510, %510 : vector<32x1xf32>
    %517 = arith.subf %515, %516 : vector<32x1xf32>
    %cst_258 = arith.constant 5.000000e-04 : f32
    %518 = vector.broadcast %cst_258 : f32 to vector<32x1xf32>
    %519 = arith.addf %517, %518 : vector<32x1xf32>
    %520 = math.rsqrt %519 : vector<32x1xf32>
    %521 = arith.mulf %520, %505 : vector<32x1xf32>
    %522 = vector.broadcast %510 : vector<32x1xf32> to vector<32x128xf32>
    %523 = arith.subf %504, %522 : vector<32x128xf32>
    %524 = vector.broadcast %521 : vector<32x1xf32> to vector<32x128xf32>
    %525 = arith.mulf %523, %524 : vector<32x128xf32>
    %526 = vector.broadcast %506 : vector<32x1xf32> to vector<32x128xf32>
    %527 = arith.addf %525, %526 : vector<32x128xf32>
    %c0_259 = arith.constant 0 : index
    %c0_260 = arith.constant 0 : index
    %528 = vector.load %arg13[%c0_259, %c0_260] : memref<8x32xf32, #tpu.memory_space<vmem>>, vector<8x32xf32>
    %cst_261 = arith.constant dense<0.000000e+00> : vector<8x128xf32>
    %529 = tpu.matmul %528, %527, %cst_261 {dimension_numbers = #tpu.dot_dimension_numbers<[1], [0], [0], [1], [0, 0, 1, 1], [], []>} : vector<8x32xf32>, vector<32x128xf32>, vector<8x128xf32> -> vector<8x128xf32>
    %c0_262 = arith.constant 0 : index
    %c0_263 = arith.constant 0 : index
    %530 = vector.load %arg14[%c0_262, %c0_263] : memref<8x1xf32, #tpu.memory_space<vmem>>, vector<8x1xf32>
    %531 = vector.broadcast %530 : vector<8x1xf32> to vector<8x128xf32>
    %532 = arith.addf %529, %531 : vector<8x128xf32>
    %cst_264 = arith.constant 0.000000e+00 : f32
    %533 = vector.broadcast %cst_264 : f32 to vector<8x128xf32>
    %534 = arith.maximumf %532, %533 : vector<8x128xf32>
    %c0_265 = arith.constant 0 : index
    %c0_266 = arith.constant 0 : index
    %535 = vector.load %arg15[%c0_265, %c0_266] : memref<8x1xf32, #tpu.memory_space<vmem>>, vector<8x1xf32>
    %c0_267 = arith.constant 0 : index
    %c0_268 = arith.constant 0 : index
    %536 = vector.load %arg16[%c0_267, %c0_268] : memref<8x1xf32, #tpu.memory_space<vmem>>, vector<8x1xf32>
    %cst_269 = arith.constant dense<0.000000e+00> : vector<8xf32>
    %537 = vector.multi_reduction <add>, %534, %cst_269 [1] : vector<8x128xf32> to vector<8xf32>
    %538 = vector.shape_cast %537 : vector<8xf32> to vector<8x1xf32>
    %cst_270 = arith.constant 1.280000e+02 : f32
    %539 = vector.broadcast %cst_270 : f32 to vector<8x1xf32>
    %540 = arith.divf %538, %539 : vector<8x1xf32>
    %541 = arith.mulf %534, %534 : vector<8x128xf32>
    %cst_271 = arith.constant dense<0.000000e+00> : vector<8xf32>
    %542 = vector.multi_reduction <add>, %541, %cst_271 [1] : vector<8x128xf32> to vector<8xf32>
    %543 = vector.shape_cast %542 : vector<8xf32> to vector<8x1xf32>
    %cst_272 = arith.constant 1.280000e+02 : f32
    %544 = vector.broadcast %cst_272 : f32 to vector<8x1xf32>
    %545 = arith.divf %543, %544 : vector<8x1xf32>
    %546 = arith.mulf %540, %540 : vector<8x1xf32>
    %547 = arith.subf %545, %546 : vector<8x1xf32>
    %cst_273 = arith.constant 5.000000e-04 : f32
    %548 = vector.broadcast %cst_273 : f32 to vector<8x1xf32>
    %549 = arith.addf %547, %548 : vector<8x1xf32>
    %550 = math.rsqrt %549 : vector<8x1xf32>
    %551 = arith.mulf %550, %535 : vector<8x1xf32>
    %552 = vector.broadcast %540 : vector<8x1xf32> to vector<8x128xf32>
    %553 = arith.subf %534, %552 : vector<8x128xf32>
    %554 = vector.broadcast %551 : vector<8x1xf32> to vector<8x128xf32>
    %555 = arith.mulf %553, %554 : vector<8x128xf32>
    %556 = vector.broadcast %536 : vector<8x1xf32> to vector<8x128xf32>
    %557 = arith.addf %555, %556 : vector<8x128xf32>
    %c0_274 = arith.constant 0 : index
    %c0_275 = arith.constant 0 : index
    %558 = vector.load %arg17[%c0_274, %c0_275] : memref<8x8xf32, #tpu.memory_space<vmem>>, vector<8x8xf32>
    %cst_276 = arith.constant dense<0.000000e+00> : vector<8x128xf32>
    %559 = tpu.matmul %558, %557, %cst_276 {dimension_numbers = #tpu.dot_dimension_numbers<[1], [0], [0], [1], [0, 0, 1, 1], [], []>} : vector<8x8xf32>, vector<8x128xf32>, vector<8x128xf32> -> vector<8x128xf32>
    %c0_277 = arith.constant 0 : index
    %c0_278 = arith.constant 0 : index
    %560 = vector.load %arg18[%c0_277, %c0_278] : memref<8x1xf32, #tpu.memory_space<vmem>>, vector<8x1xf32>
    %561 = vector.broadcast %560 : vector<8x1xf32> to vector<8x128xf32>
    %562 = arith.addf %559, %561 : vector<8x128xf32>
    %c0_279 = arith.constant 0 : index
    %c0_280 = arith.constant 0 : index
    %563 = vector.load %arg19[%c0_279, %c0_280] : memref<8x128xf32, #tpu.memory_space<vmem>>, vector<8x128xf32>
    tpu.vector_store %arg19[%c0_279, %c0_280], %562 {strides = array<i32>} : memref<8x128xf32, #tpu.memory_space<vmem>>, vector<8x128xf32>,
    return
  }
}

</mosaic_0001>

<llo_original>
// kernel: bitwise_wavenet_forward.1
$region0: #{bitwise_wavenet_forward.1}
  #allocation0 [shape = 'u32[]', space=smem, size = 0x4, offset = 0x4, fixed_abs, tag = 'smem constant byte address 0x4 - core index']
  #allocation1 [shape = 'u32[144,128]{1,0:T(1,128)}', space=vmem, size = 0x12000, scoped, tag = 'internal scratch']
  %s0 = inlined_call_operand.vmem [shape: f32[4,128], index: 0, kind: input, shape index: {}]
  %s1 = inlined_call_operand.vmem [shape: f32[32,4], index: 1, kind: input, shape index: {}]
  %s2 = inlined_call_operand.vmem [shape: f32[32,1], index: 2, kind: input, shape index: {}]
  %s3 = inlined_call_operand.vmem [shape: f32[32,1], index: 3, kind: input, shape index: {}]
  %s4 = inlined_call_operand.vmem [shape: f32[32,1], index: 4, kind: input, shape index: {}]
  %s5 = inlined_call_operand.vmem [shape: f32[8,64,64], index: 5, kind: input, shape index: {}]
  %s6 = inlined_call_operand.vmem [shape: f32[8,64,1], index: 6, kind: input, shape index: {}]
  %s7 = inlined_call_operand.vmem [shape: f32[8,32,1], index: 7, kind: input, shape index: {}]
  %s8 = inlined_call_operand.vmem [shape: f32[8,32,1], index: 8, kind: input, shape index: {}]
  %s9 = inlined_call_operand.vmem [shape: f32[8,64,32], index: 9, kind: input, shape index: {}]
  %s10 = inlined_call_operand.vmem [shape: f32[8,64,1], index: 10, kind: input, shape index: {}]
  %s11 = inlined_call_operand.vmem [shape: f32[32,1], index: 11, kind: input, shape index: {}]
  %s12 = inlined_call_operand.vmem [shape: f32[32,1], index: 12, kind: input, shape index: {}]
  %s13 = inlined_call_operand.vmem [shape: f32[8,32], index: 13, kind: input, shape index: {}]
  %s14 = inlined_call_operand.vmem [shape: f32[8,1], index: 14, kind: input, shape index: {}]
  %s15 = inlined_call_operand.vmem [shape: f32[8,1], index: 15, kind: input, shape index: {}]
  %s16 = inlined_call_operand.vmem [shape: f32[8,1], index: 16, kind: input, shape index: {}]
  %s17 = inlined_call_operand.vmem [shape: f32[8,8], index: 17, kind: input, shape index: {}]
  %s18 = inlined_call_operand.vmem [shape: f32[8,1], index: 18, kind: input, shape index: {}]
  %s19 = inlined_call_operand.vmem [shape: f32[8,128], index: 19, kind: output, shape index: {}]
  %s20 = sld [smem:[#allocation0]]
  $region86: #{bitwise_wavenet_forward.1} parent=0
    _
  %s22 = ssub.s32 1, %s20
  %s23 = scalar_select 0, %s22, %s20
  // Predicated region
  $region2: #{bitwise_wavenet_forward.1} parent=0 // pred_check
    _
  $region3: #{bitwise_wavenet_forward.1} parent=0 // pred_check_branch
    %25 = sbr.rel (0) target = $region5
  $region4: #{bitwise_wavenet_forward.1} parent=0 // pred_region
    _
  $region5: #{bitwise_wavenet_forward.1} parent=0 // pred_fallthru
    _
  // Predicated region
  $region6: #{bitwise_wavenet_forward.1} parent=0 // pred_check
    _
  $region7: #{bitwise_wavenet_forward.1} parent=0 // pred_check_branch
    %27 = sbr.rel (0) target = $region9
  $region8: #{bitwise_wavenet_forward.1} parent=0 // pred_region
    _
  $region9: #{bitwise_wavenet_forward.1} parent=0 // pred_fallthru
    _
  // Predicated region
  $region10: #{bitwise_wavenet_forward.1} parent=0 // pred_check
    _
  $region11: #{bitwise_wavenet_forward.1} parent=0 // pred_check_branch
    %29 = sbr.rel (0) target = $region13
  $region12: #{bitwise_wavenet_forward.1} parent=0 // pred_region
    _
  $region13: #{bitwise_wavenet_forward.1} parent=0 // pred_fallthru
    _
  // Predicated region
  $region14: #{bitwise_wavenet_forward.1} parent=0 // pred_check
    _
  $region15: #{bitwise_wavenet_forward.1} parent=0 // pred_check_branch
    %31 = sbr.rel (0) target = $region17
  $region16: #{bitwise_wavenet_forward.1} parent=0 // pred_region
    _
  $region17: #{bitwise_wavenet_forward.1} parent=0 // pred_fallthru
    _
  // Predicated region
  $region18: #{bitwise_wavenet_forward.1} parent=0 // pred_check
    _
  $region19: #{bitwise_wavenet_forward.1} parent=0 // pred_check_branch
    %33 = sbr.rel (0) target = $region21
  $region20: #{bitwise_wavenet_forward.1} parent=0 // pred_region
    _
  $region21: #{bitwise_wavenet_forward.1} parent=0 // pred_fallthru
    _
  // Predicated region
  $region22: #{bitwise_wavenet_forward.1} parent=0 // pred_check
    _
  $region23: #{bitwise_wavenet_forward.1} parent=0 // pred_check_branch
    %35 = sbr.rel (0) target = $region25
  $region24: #{bitwise_wavenet_forward.1} parent=0 // pred_region
    _
  $region25: #{bitwise_wavenet_forward.1} parent=0 // pred_fallthru
    _
  // Predicated region
  $region26: #{bitwise_wavenet_forward.1} parent=0 // pred_check
    _
  $region27: #{bitwise_wavenet_forward.1} parent=0 // pred_check_branch
    %37 = sbr.rel (0) target = $region29
  $region28: #{bitwise_wavenet_forward.1} parent=0 // pred_region
    _
  $region29: #{bitwise_wavenet_forward.1} parent=0 // pred_fallthru
    _
  // Predicated region
  $region30: #{bitwise_wavenet_forward.1} parent=0 // pred_check
    _
  $region31: #{bitwise_wavenet_forward.1} parent=0 // pred_check_branch
    %39 = sbr.rel (0) target = $region33
  $region32: #{bitwise_wavenet_forward.1} parent=0 // pred_region
    _
  $region33: #{bitwise_wavenet_forward.1} parent=0 // pred_fallthru
    _
  // Predicated region
  $region34: #{bitwise_wavenet_forward.1} parent=0 // pred_check
    _
  $region35: #{bitwise_wavenet_forward.1} parent=0 // pred_check_branch
    %41 = sbr.rel (0) target = $region37
  $region36: #{bitwise_wavenet_forward.1} parent=0 // pred_region
    _
  $region37: #{bitwise_wavenet_forward.1} parent=0 // pred_fallthru
    _
  // Predicated region
  $region38: #{bitwise_wavenet_forward.1} parent=0 // pred_check
    _
  $region39: #{bitwise_wavenet_forward.1} parent=0 // pred_check_branch
    %43 = sbr.rel (0) target = $region41
  $region40: #{bitwise_wavenet_forward.1} parent=0 // pred_region
    _
  $region41: #{bitwise_wavenet_forward.1} parent=0 // pred_fallthru
    _
  // Predicated region
  $region42: #{bitwise_wavenet_forward.1} parent=0 // pred_check
    _
  $region43: #{bitwise_wavenet_forward.1} parent=0 // pred_check_branch
    %45 = sbr.rel (0) target = $region45
  $region44: #{bitwise_wavenet_forward.1} parent=0 // pred_region
    _
  $region45: #{bitwise_wavenet_forward.1} parent=0 // pred_fallthru
    _
  // Predicated region
  $region46: #{bitwise_wavenet_forward.1} parent=0 // pred_check
    _
  $region47: #{bitwise_wavenet_forward.1} parent=0 // pred_check_branch
    %47 = sbr.rel (0) target = $region49
  $region48: #{bitwise_wavenet_forward.1} parent=0 // pred_region
    _
  $region49: #{bitwise_wavenet_forward.1} parent=0 // pred_fallthru
    _
  // Predicated region
  $region50: #{bitwise_wavenet_forward.1} parent=0 // pred_check
    _
  $region51: #{bitwise_wavenet_forward.1} parent=0 // pred_check_branch
    %49 = sbr.rel (0) target = $region53
  $region52: #{bitwise_wavenet_forward.1} parent=0 // pred_region
    _
  $region53: #{bitwise_wavenet_forward.1} parent=0 // pred_fallthru
    _
  // Predicated region
  $region54: #{bitwise_wavenet_forward.1} parent=0 // pred_check
    _
  $region55: #{bitwise_wavenet_forward.1} parent=0 // pred_check_branch
    %51 = sbr.rel (0) target = $region57
  $region56: #{bitwise_wavenet_forward.1} parent=0 // pred_region
    _
  $region57: #{bitwise_wavenet_forward.1} parent=0 // pred_fallthru
    _
  // Predicated region
  $region58: #{bitwise_wavenet_forward.1} parent=0 // pred_check
    _
  $region59: #{bitwise_wavenet_forward.1} parent=0 // pred_check_branch
    %53 = sbr.rel (0) target = $region61
  $region60: #{bitwise_wavenet_forward.1} parent=0 // pred_region
    _
  $region61: #{bitwise_wavenet_forward.1} parent=0 // pred_fallthru
    _
  // Predicated region
  $region62: #{bitwise_wavenet_forward.1} parent=0 // pred_check
    _
  $region63: #{bitwise_wavenet_forward.1} parent=0 // pred_check_branch
    %55 = sbr.rel (0) target = $region65
  $region64: #{bitwise_wavenet_forward.1} parent=0 // pred_region
    _
  $region65: #{bitwise_wavenet_forward.1} parent=0 // pred_fallthru
    _
  // Predicated region
  $region66: #{bitwise_wavenet_forward.1} parent=0 // pred_check
    _
  $region67: #{bitwise_wavenet_forward.1} parent=0 // pred_check_branch
    %57 = sbr.rel (0) target = $region69
  $region68: #{bitwise_wavenet_forward.1} parent=0 // pred_region
    _
  $region69: #{bitwise_wavenet_forward.1} parent=0 // pred_fallthru
    _
  // Predicated region
  $region70: #{bitwise_wavenet_forward.1} parent=0 // pred_check
    _
  $region71: #{bitwise_wavenet_forward.1} parent=0 // pred_check_branch
    %59 = sbr.rel (0) target = $region73
  $region72: #{bitwise_wavenet_forward.1} parent=0 // pred_region
    _
  $region73: #{bitwise_wavenet_forward.1} parent=0 // pred_fallthru
    _
  // Predicated region
  $region74: #{bitwise_wavenet_forward.1} parent=0 // pred_check
    _
  $region75: #{bitwise_wavenet_forward.1} parent=0 // pred_check_branch
    %61 = sbr.rel (0) target = $region77
  $region76: #{bitwise_wavenet_forward.1} parent=0 // pred_region
    _
  $region77: #{bitwise_wavenet_forward.1} parent=0 // pred_fallthru
    _
  %v62 = vlaneseq
  %v63 = vand.u32 %v62, 127
  %v64 = vand.u32 %v63, 63
  %v65 = vld [vmem:[%s1] sm:$0xff]
  %v66 = vld [vmem:[%s1 + $0x8] sm:$0xff]
  %v67 = vld [vmem:[%s1 + $0x10] sm:$0xff]
  %v68 = vld [vmem:[%s1 + $0x18] sm:$0xff]
  %v69 = vld [vmem:[%s0] sm:$0xf]
  %v70 = vld [vmem:[%s2] sm:$0xff]
  %v71 = vld [vmem:[%s2 + $0x8] sm:$0xff]
  %v72 = vld [vmem:[%s2 + $0x10] sm:$0xff]
  %v73 = vld [vmem:[%s2 + $0x18] sm:$0xff]
  %75 = vset.pattern.permute.xlu0 0
  %76 = vperm.xlu0 %75, %v70
  %v77 = vpop.permute.xlu0 %76
  %80 = vset.pattern.permute.xlu0 0
  %81 = vperm.xlu0 %80, %v71
  %v82 = vpop.permute.xlu0 %81
  %85 = vset.pattern.permute.xlu0 0
  %86 = vperm.xlu0 %85, %v72
  %v87 = vpop.permute.xlu0 %86
  %90 = vset.pattern.permute.xlu0 0
  %91 = vperm.xlu0 %90, %v73
  %v92 = vpop.permute.xlu0 %91
  %vm94 = vcmask 31744
  %v96 = vsel %vm94, %v65, 0
  %v99 = vsel %vm94, %v66, 0
  %v102 = vsel %vm94, %v67, 0
  %v105 = vsel %vm94, %v68, 0
  %vm107 = vcmask 1043456
  %v109 = vsel %vm107, %v69, 0
  %111 = vmatprep.subr.mxu0 0.0
  %112 = vmatpush1.msra.mxu0 %v109
  %113 = vmatprep.subr.mxu0 0.0
  %114 = vmatpush1.msra.mxu0 0.0
  %115 = vmatprep.subr.mxu0 0.0
  %116 = vmatpush1.msra.mxu0 0.0
  %117 = vmatprep.subr.mxu0 0.0
  %118 = vmatpush1.msra.mxu0 0.0
  %119 = vmatprep.subr.mxu0 0.0
  %120 = vmatpush1.msra.mxu0 0.0
  %121 = vmatprep.subr.mxu0 0.0
  %122 = vmatpush1.msra.mxu0 0.0
  %123 = vmatprep.subr.mxu0 0.0
  %124 = vmatpush1.msra.mxu0 0.0
  %125 = vmatprep.subr.mxu0 0.0
  %126 = vmatpush1.msra.mxu0 0.0
  %127 = vmatprep.subr.mxu0 0.0
  %128 = vmatpush1.msra.mxu0 0.0
  %129 = vmatprep.subr.mxu0 0.0
  %130 = vmatpush1.msra.mxu0 0.0
  %131 = vmatprep.subr.mxu0 0.0
  %132 = vmatpush1.msra.mxu0 0.0
  %133 = vmatprep.subr.mxu0 0.0
  %134 = vmatpush1.msra.mxu0 0.0
  %135 = vmatprep.subr.mxu0 0.0
  %136 = vmatpush1.msra.mxu0 0.0
  %137 = vmatprep.subr.mxu0 0.0
  %138 = vmatpush1.msra.mxu0 0.0
  %139 = vmatprep.subr.mxu0 0.0
  %140 = vmatpush1.msra.mxu0 0.0
  %141 = vmatprep.subr.mxu0 0.0
  %142 = vmatpush1.msra.mxu0 0.0
  %143 = vmatprep.subr.mxu0 0.0
  %144 = vmatpush1.msra.mxu0 0.0
  %145 = vmatprep.subr.mxu0 0.0
  %146 = vmatpush1.msra.mxu0 0.0
  %147 = vmatprep.subr.mxu0 0.0
  %148 = vmatpush1.msra.mxu0 0.0
  %149 = vmatprep.subr.mxu0 0.0
  %150 = vmatpush1.msra.mxu0 0.0
  %151 = vmatprep.subr.mxu0 0.0
  %152 = vmatpush1.msra.mxu0 0.0
  %153 = vmatprep.subr.mxu0 0.0
  %154 = vmatpush1.msra.mxu0 0.0
  %155 = vmatprep.subr.mxu0 0.0
  %156 = vmatpush1.msra.mxu0 0.0
  %157 = vmatprep.subr.mxu0 0.0
  %158 = vmatpush1.msra.mxu0 0.0
  %159 = vmatprep.subr.mxu0 0.0
  %160 = vmatpush1.msra.mxu0 0.0
  %161 = vmatprep.subr.mxu0 0.0
  %162 = vmatpush1.msra.mxu0 0.0
  %163 = vmatprep.subr.mxu0 0.0
  %164 = vmatpush1.msra.mxu0 0.0
  %165 = vmatprep.subr.mxu0 0.0
  %166 = vmatpush1.msra.mxu0 0.0
  %167 = vmatprep.subr.mxu0 0.0
  %168 = vmatpush1.msra.mxu0 0.0
  %169 = vmatprep.subr.mxu0 0.0
  %170 = vmatpush1.msra.mxu0 0.0
  %171 = vmatprep.subr.mxu0 0.0
  %172 = vmatpush1.msra.mxu0 0.0
  %173 = vmatprep.subr.mxu0 0.0
  %174 = vmatpush1.msra.mxu0 0.0
  %175 = vmatprep.mubr.f32.mxu0 0.0
  %176 = vmatmul.mubr.f32.gmra.mrb[0].mxu0 %v96
  %v177 = vpop.f32.mrb[0].mxu0
  %v178 = vadd.f32 %v77, %v177
  %v179 = vpop.f32.mrb[0].mxu0
  %180 = vmatprep.mubr.f32.mxu0 0.0
  %181 = vmatmul.mubr.f32.gmra.mrb[0].mxu0 %v99
  %v182 = vpop.f32.mrb[0].mxu0
  %v183 = vadd.f32 %v82, %v182
  %v184 = vpop.f32.mrb[0].mxu0
  %185 = vmatprep.mubr.f32.mxu0 0.0
  %186 = vmatmul.mubr.f32.gmra.mrb[0].mxu0 %v102
  %v187 = vpop.f32.mrb[0].mxu0
  %v188 = vadd.f32 %v87, %v187
  %v189 = vpop.f32.mrb[0].mxu0
  %190 = vmatprep.mubr.f32.mxu0 0.0
  %191 = vmatmul.mubr.f32.gmra.mrb[0].mxu0 %v105
  %v192 = vpop.f32.mrb[0].mxu0
  %v193 = vadd.f32 %v92, %v192
  %v194 = vpop.f32.mrb[0].mxu0
  %195 = vdwg.mxu0
  %v196 = vld [vmem:[%s3] sm:$0xff]
  %v197 = vld [vmem:[%s3 + $0x8] sm:$0xff]
  %v198 = vld [vmem:[%s3 + $0x10] sm:$0xff]
  %v199 = vld [vmem:[%s3 + $0x18] sm:$0xff]
  %v200 = vld [vmem:[%s4] sm:$0xff]
  %v201 = vld [vmem:[%s4 + $0x8] sm:$0xff]
  %v202 = vld [vmem:[%s4 + $0x10] sm:$0xff]
  %v203 = vld [vmem:[%s4 + $0x18] sm:$0xff]
  %204 = vadd.xlane.f32.xlu0 %v178
  %v205 = vpop.xlane.xlu0 %204
  %206 = vadd.xlane.f32.xlu0 %v183
  %v207 = vpop.xlane.xlu0 %206
  %208 = vadd.xlane.f32.xlu0 %v188
  %v209 = vpop.xlane.xlu0 %208
  %210 = vadd.xlane.f32.xlu0 %v193
  %v211 = vpop.xlane.xlu0 %210
  %v212 = vrcp.pop 128.0
  %v213 = vmul.f32 %v205, %v212
  %v214 = vmul.f32 %v207, %v212
  %v215 = vmul.f32 %v209, %v212
  %v216 = vmul.f32 %v211, %v212
  %v217 = vmul.f32 %v178, %v178
  %v218 = vmul.f32 %v183, %v183
  %v219 = vmul.f32 %v188, %v188
  %v220 = vmul.f32 %v193, %v193
  %221 = vadd.xlane.f32.xlu0 %v217
  %v222 = vpop.xlane.xlu0 %221
  %223 = vadd.xlane.f32.xlu0 %v218
  %v224 = vpop.xlane.xlu0 %223
  %225 = vadd.xlane.f32.xlu0 %v219
  %v226 = vpop.xlane.xlu0 %225
  %227 = vadd.xlane.f32.xlu0 %v220
  %v228 = vpop.xlane.xlu0 %227
  %v229 = vmul.f32 %v222, %v212
  %v230 = vmul.f32 %v224, %v212
  %v231 = vmul.f32 %v226, %v212
  %v232 = vmul.f32 %v228, %v212
  %v233 = vmul.f32 %v213, %v213
  %v234 = vmul.f32 %v214, %v214
  %v235 = vmul.f32 %v215, %v215
  %v236 = vmul.f32 %v216, %v216
  %v237 = vsub.f32 %v229, %v233
  %v238 = vsub.f32 %v230, %v234
  %v239 = vsub.f32 %v231, %v235
  %v240 = vsub.f32 %v232, %v236
  %v241 = vadd.f32 %v237, 0.0005
  %v242 = vadd.f32 %v238, 0.0005
  %v243 = vadd.f32 %v239, 0.0005
  %v244 = vadd.f32 %v240, 0.0005
  %v245 = vrsqrt.pop %v241
  %v246 = vrsqrt.pop %v242
  %v247 = vrsqrt.pop %v243
  %v248 = vrsqrt.pop %v244
  %v249 = vmul.f32 %v245, %v196
  %v250 = vmul.f32 %v246, %v197
  %v251 = vmul.f32 %v247, %v198
  %v252 = vmul.f32 %v248, %v199
  %v253 = vsub.f32 %v178, %v213
  %v254 = vsub.f32 %v183, %v214
  %v255 = vsub.f32 %v188, %v215
  %v256 = vsub.f32 %v193, %v216
  %258 = vset.pattern.permute.xlu0 0
  %259 = vperm.xlu0 %258, %v249
  %v260 = vpop.permute.xlu0 %259
  %263 = vset.pattern.permute.xlu0 0
  %264 = vperm.xlu0 %263, %v250
  %v265 = vpop.permute.xlu0 %264
  %268 = vset.pattern.permute.xlu0 0
  %269 = vperm.xlu0 %268, %v251
  %v270 = vpop.permute.xlu0 %269
  %273 = vset.pattern.permute.xlu0 0
  %274 = vperm.xlu0 %273, %v252
  %v275 = vpop.permute.xlu0 %274
  %v277 = vmul.f32 %v253, %v260
  %v278 = vmul.f32 %v254, %v265
  %v279 = vmul.f32 %v255, %v270
  %v280 = vmul.f32 %v256, %v275
  %282 = vset.pattern.permute.xlu0 0
  %283 = vperm.xlu0 %282, %v200
  %v284 = vpop.permute.xlu0 %283
  %287 = vset.pattern.permute.xlu0 0
  %288 = vperm.xlu0 %287, %v201
  %v289 = vpop.permute.xlu0 %288
  %292 = vset.pattern.permute.xlu0 0
  %293 = vperm.xlu0 %292, %v202
  %v294 = vpop.permute.xlu0 %293
  %297 = vset.pattern.permute.xlu0 0
  %298 = vperm.xlu0 %297, %v203
  %v299 = vpop.permute.xlu0 %298
  %v301 = vadd.f32 %v277, %v284
  %v302 = vadd.f32 %v278, %v289
  %v303 = vadd.f32 %v279, %v294
  %v304 = vadd.f32 %v280, %v299
  %v305 = vadd.s32 %v64, 4294967295
  %vm306 = vcmp.ge.s32.totalorder %v305, 0
  %vm307 = vcmp.lt.s32.totalorder %v305, 64
  %vm308 = vmand %vm306, %vm307
  %309 = vrot.lane.b32.xlu0 %v301, 1
  %v310 = vpop.permute.xlu0 %309
  %311 = vrot.lane.b32.xlu0 %v302, 1
  %v312 = vpop.permute.xlu0 %311
  %313 = vrot.lane.b32.xlu0 %v303, 1
  %v314 = vpop.permute.xlu0 %313
  %315 = vrot.lane.b32.xlu0 %v304, 1
  %v316 = vpop.permute.xlu0 %315
  %v317 = vsel %vm308, %v310, 0.0
  %v318 = vsel %vm308, %v312, 0.0
  %v319 = vsel %vm308, %v314, 0.0
  %v320 = vsel %vm308, %v316, 0.0
  %v321 = vld [vmem:[%s5] sm:$0xff]
  %v322 = vld [vmem:[%s5 + $0x8] sm:$0xff]
  %v323 = vld [vmem:[%s5 + $0x10] sm:$0xff]
  %v324 = vld [vmem:[%s5 + $0x18] sm:$0xff]
  %v325 = vld [vmem:[%s5 + $0x20] sm:$0xff]
  %v326 = vld [vmem:[%s5 + $0x28] sm:$0xff]
  %v327 = vld [vmem:[%s5 + $0x30] sm:$0xff]
  %v328 = vld [vmem:[%s5 + $0x38] sm:$0xff]
  %v329 = vld [vmem:[%s6] sm:$0xff]
  %v330 = vld [vmem:[%s6 + $0x8] sm:$0xff]
  %v331 = vld [vmem:[%s6 + $0x10] sm:$0xff]
  %v332 = vld [vmem:[%s6 + $0x18] sm:$0xff]
  %v333 = vld [vmem:[%s6 + $0x20] sm:$0xff]
  %v334 = vld [vmem:[%s6 + $0x28] sm:$0xff]
  %v335 = vld [vmem:[%s6 + $0x30] sm:$0xff]
  %v336 = vld [vmem:[%s6 + $0x38] sm:$0xff]
  %338 = vset.pattern.permute.xlu0 0
  %339 = vperm.xlu0 %338, %v329
  %v340 = vpop.permute.xlu0 %339
  %343 = vset.pattern.permute.xlu0 0
  %344 = vperm.xlu0 %343, %v330
  %v345 = vpop.permute.xlu0 %344
  %348 = vset.pattern.permute.xlu0 0
  %349 = vperm.xlu0 %348, %v331
  %v350 = vpop.permute.xlu0 %349
  %353 = vset.pattern.permute.xlu0 0
  %354 = vperm.xlu0 %353, %v332
  %v355 = vpop.permute.xlu0 %354
  %358 = vset.pattern.permute.xlu0 0
  %359 = vperm.xlu0 %358, %v333
  %v360 = vpop.permute.xlu0 %359
  %363 = vset.pattern.permute.xlu0 0
  %364 = vperm.xlu0 %363, %v334
  %v365 = vpop.permute.xlu0 %364
  %368 = vset.pattern.permute.xlu0 0
  %369 = vperm.xlu0 %368, %v335
  %v370 = vpop.permute.xlu0 %369
  %373 = vset.pattern.permute.xlu0 0
  %374 = vperm.xlu0 %373, %v336
  %v375 = vpop.permute.xlu0 %374
  %vm377 = vcmask 523264
  %v379 = vsel %vm377, %v321, 0
  %v382 = vsel %vm377, %v322, 0
  %v385 = vsel %vm377, %v323, 0
  %v388 = vsel %vm377, %v324, 0
  %v391 = vsel %vm377, %v325, 0
  %v394 = vsel %vm377, %v326, 0
  %v397 = vsel %vm377, %v327, 0
  %v400 = vsel %vm377, %v328, 0
  %402 = vmatprep.subr.mxu0 0.0
  %403 = vmatpush1.msra.mxu0 %v317
  %404 = vmatprep.subr.mxu0 0.0
  %405 = vmatpush1.msra.mxu0 %v318
  %406 = vmatprep.subr.mxu0 0.0
  %407 = vmatpush1.msra.mxu0 %v319
  %408 = vmatprep.subr.mxu0 0.0
  %409 = vmatpush1.msra.mxu0 %v320
  %410 = vmatprep.subr.mxu0 0.0
  %411 = vmatpush1.msra.mxu0 %v301
  %412 = vmatprep.subr.mxu0 0.0
  %413 = vmatpush1.msra.mxu0 %v302
  %414 = vmatprep.subr.mxu0 0.0
  %415 = vmatpush1.msra.mxu0 %v303
  %416 = vmatprep.subr.mxu0 0.0
  %417 = vmatpush1.msra.mxu0 %v304
  %418 = vmatprep.subr.mxu0 0.0
  %419 = vmatpush1.msra.mxu0 0.0
  %420 = vmatprep.subr.mxu0 0.0
  %421 = vmatpush1.msra.mxu0 0.0
  %422 = vmatprep.subr.mxu0 0.0
  %423 = vmatpush1.msra.mxu0 0.0
  %424 = vmatprep.subr.mxu0 0.0
  %425 = vmatpush1.msra.mxu0 0.0
  %426 = vmatprep.subr.mxu0 0.0
  %427 = vmatpush1.msra.mxu0 0.0
  %428 = vmatprep.subr.mxu0 0.0
  %429 = vmatpush1.msra.mxu0 0.0
  %430 = vmatprep.subr.mxu0 0.0
  %431 = vmatpush1.msra.mxu0 0.0
  %432 = vmatprep.subr.mxu0 0.0
  %433 = vmatpush1.msra.mxu0 0.0
  %434 = vmatprep.subr.mxu0 0.0
  %435 = vmatpush1.msra.mxu0 0.0
  %436 = vmatprep.subr.mxu0 0.0
  %437 = vmatpush1.msra.mxu0 0.0
  %438 = vmatprep.subr.mxu0 0.0
  %439 = vmatpush1.msra.mxu0 0.0
  %440 = vmatprep.subr.mxu0 0.0
  %441 = vmatpush1.msra.mxu0 0.0
  %442 = vmatprep.subr.mxu0 0.0
  %443 = vmatpush1.msra.mxu0 0.0
  %444 = vmatprep.subr.mxu0 0.0
  %445 = vmatpush1.msra.mxu0 0.0
  %446 = vmatprep.subr.mxu0 0.0
  %447 = vmatpush1.msra.mxu0 0.0
  %448 = vmatprep.subr.mxu0 0.0
  %449 = vmatpush1.msra.mxu0 0.0
  %450 = vmatprep.subr.mxu0 0.0
  %451 = vmatpush1.msra.mxu0 0.0
  %452 = vmatprep.subr.mxu0 0.0
  %453 = vmatpush1.msra.mxu0 0.0
  %454 = vmatprep.subr.mxu0 0.0
  %455 = vmatpush1.msra.mxu0 0.0
  %456 = vmatprep.subr.mxu0 0.0
  %457 = vmatpush1.msra.mxu0 0.0
  %458 = vmatprep.subr.mxu0 0.0
  %459 = vmatpush1.msra.mxu0 0.0
  %460 = vmatprep.subr.mxu0 0.0
  %461 = vmatpush1.msra.mxu0 0.0
  %462 = vmatprep.subr.mxu0 0.0
  %463 = vmatpush1.msra.mxu0 0.0
  %464 = vmatprep.subr.mxu0 0.0
  %465 = vmatpush1.msra.mxu0 0.0
  %466 = vmatprep.mubr.f32.mxu0 0.0
  %467 = vmatmul.mubr.f32.gmra.mrb[0].mxu0 %v379
  %v468 = vpop.f32.mrb[0].mxu0
  %v469 = vadd.f32 %v340, %v468
  %v470 = vpop.f32.mrb[0].mxu0
  %471 = vmatprep.mubr.f32.mxu0 0.0
  %472 = vmatmul.mubr.f32.gmra.mrb[0].mxu0 %v382
  %v473 = vpop.f32.mrb[0].mxu0
  %v474 = vadd.f32 %v345, %v473
  %v475 = vpop.f32.mrb[0].mxu0
  %476 = vmatprep.mubr.f32.mxu0 0.0
  %477 = vmatmul.mubr.f32.gmra.mrb[0].mxu0 %v385
  %v478 = vpop.f32.mrb[0].mxu0
  %v479 = vadd.f32 %v350, %v478
  %v480 = vpop.f32.mrb[0].mxu0
  %481 = vmatprep.mubr.f32.mxu0 0.0
  %482 = vmatmul.mubr.f32.gmra.mrb[0].mxu0 %v388
  %v483 = vpop.f32.mrb[0].mxu0
  %v484 = vadd.f32 %v355, %v483
  %v485 = vpop.f32.mrb[0].mxu0
  %486 = vmatprep.mubr.f32.mxu0 0.0
  %487 = vmatmul.mubr.f32.gmra.mrb[0].mxu0 %v391
  %v488 = vpop.f32.mrb[0].mxu0
  %v489 = vadd.f32 %v360, %v488
  %v490 = vpop.f32.mrb[0].mxu0
  %491 = vmatprep.mubr.f32.mxu0 0.0
  %492 = vmatmul.mubr.f32.gmra.mrb[0].mxu0 %v394
  %v493 = vpop.f32.mrb[0].mxu0
  %v494 = vadd.f32 %v365, %v493
  %v495 = vpop.f32.mrb[0].mxu0
  %496 = vmatprep.mubr.f32.mxu0 0.0
  %497 = vmatmul.mubr.f32.gmra.mrb[0].mxu0 %v397
  %v498 = vpop.f32.mrb[0].mxu0
  %v499 = vadd.f32 %v370, %v498
  %v500 = vpop.f32.mrb[0].mxu0
  %501 = vmatprep.mubr.f32.mxu0 0.0
  %502 = vmatmul.mubr.f32.gmra.mrb[0].mxu0 %v400
  %v503 = vpop.f32.mrb[0].mxu0
  %v504 = vadd.f32 %v375, %v503
  %v505 = vpop.f32.mrb[0].mxu0
  %506 = vdwg.mxu0
  %v507 = vmul.f32 %v469, %v489
  %v508 = vmul.f32 %v474, %v494
  %v509 = vmul.f32 %v479, %v499
  %v510 = vmul.f32 %v484, %v504
  %v511 = vld [vmem:[%s7] sm:$0xff]
  %v512 = vld [vmem:[%s7 + $0x8] sm:$0xff]
  %v513 = vld [vmem:[%s7 + $0x10] sm:$0xff]
  %v514 = vld [vmem:[%s7 + $0x18] sm:$0xff]
  %v515 = vld [vmem:[%s8] sm:$0xff]
  %v516 = vld [vmem:[%s8 + $0x8] sm:$0xff]
  %v517 = vld [vmem:[%s8 + $0x10] sm:$0xff]
  %v518 = vld [vmem:[%s8 + $0x18] sm:$0xff]
  %519 = vadd.xlane.f32.xlu0 %v507
  %v520 = vpop.xlane.xlu0 %519
  %521 = vadd.xlane.f32.xlu0 %v508
  %v522 = vpop.xlane.xlu0 %521
  %523 = vadd.xlane.f32.xlu0 %v509
  %v524 = vpop.xlane.xlu0 %523
  %525 = vadd.xlane.f32.xlu0 %v510
  %v526 = vpop.xlane.xlu0 %525
  %v527 = vmul.f32 %v520, %v212
  %v528 = vmul.f32 %v522, %v212
  %v529 = vmul.f32 %v524, %v212
  %v530 = vmul.f32 %v526, %v212
  %v531 = vmul.f32 %v507, %v507
  %v532 = vmul.f32 %v508, %v508
  %v533 = vmul.f32 %v509, %v509
  %v534 = vmul.f32 %v510, %v510
  %535 = vadd.xlane.f32.xlu0 %v531
  %v536 = vpop.xlane.xlu0 %535
  %537 = vadd.xlane.f32.xlu0 %v532
  %v538 = vpop.xlane.xlu0 %537
  %539 = vadd.xlane.f32.xlu0 %v533
  %v540 = vpop.xlane.xlu0 %539
  %541 = vadd.xlane.f32.xlu0 %v534
  %v542 = vpop.xlane.xlu0 %541
  %v543 = vmul.f32 %v536, %v212
  %v544 = vmul.f32 %v538, %v212
  %v545 = vmul.f32 %v540, %v212
  %v546 = vmul.f32 %v542, %v212
  %v547 = vmul.f32 %v527, %v527
  %v548 = vmul.f32 %v528, %v528
  %v549 = vmul.f32 %v529, %v529
  %v550 = vmul.f32 %v530, %v530
  %v551 = vsub.f32 %v543, %v547
  %v552 = vsub.f32 %v544, %v548
  %v553 = vsub.f32 %v545, %v549
  %v554 = vsub.f32 %v546, %v550
  %v555 = vadd.f32 %v551, 1e-05
  %v556 = vadd.f32 %v552, 1e-05
  %v557 = vadd.f32 %v553, 1e-05
  %v558 = vadd.f32 %v554, 1e-05
  %v559 = vrsqrt.pop %v555
  %v560 = vrsqrt.pop %v556
  %v561 = vrsqrt.pop %v557
  %v562 = vrsqrt.pop %v558
  %v563 = vmul.f32 %v559, %v511
  %v564 = vmul.f32 %v560, %v512
  %v565 = vmul.f32 %v561, %v513
  %v566 = vmul.f32 %v562, %v514
  %v567 = vsub.f32 %v507, %v527
  %v568 = vsub.f32 %v508, %v528
  %v569 = vsub.f32 %v509, %v529
  %v570 = vsub.f32 %v510, %v530
  %572 = vset.pattern.permute.xlu0 0
  %573 = vperm.xlu0 %572, %v563
  %v574 = vpop.permute.xlu0 %573
  %577 = vset.pattern.permute.xlu0 0
  %578 = vperm.xlu0 %577, %v564
  %v579 = vpop.permute.xlu0 %578
  %582 = vset.pattern.permute.xlu0 0
  %583 = vperm.xlu0 %582, %v565
  %v584 = vpop.permute.xlu0 %583
  %587 = vset.pattern.permute.xlu0 0
  %588 = vperm.xlu0 %587, %v566
  %v589 = vpop.permute.xlu0 %588
  %v591 = vmul.f32 %v567, %v574
  %v592 = vmul.f32 %v568, %v579
  %v593 = vmul.f32 %v569, %v584
  %v594 = vmul.f32 %v570, %v589
  %596 = vset.pattern.permute.xlu0 0
  %597 = vperm.xlu0 %596, %v515
  %v598 = vpop.permute.xlu0 %597
  %601 = vset.pattern.permute.xlu0 0
  %602 = vperm.xlu0 %601, %v516
  %v603 = vpop.permute.xlu0 %602
  %606 = vset.pattern.permute.xlu0 0
  %607 = vperm.xlu0 %606, %v517
  %v608 = vpop.permute.xlu0 %607
  %611 = vset.pattern.permute.xlu0 0
  %612 = vperm.xlu0 %611, %v518
  %v613 = vpop.permute.xlu0 %612
  %v615 = vadd.f32 %v591, %v598
  %v616 = vadd.f32 %v592, %v603
  %v617 = vadd.f32 %v593, %v608
  %v618 = vadd.f32 %v594, %v613
  %v619 = vld [vmem:[%s9] sm:$0xff]
  %v620 = vld [vmem:[%s9 + $0x8] sm:$0xff]
  %v621 = vld [vmem:[%s9 + $0x10] sm:$0xff]
  %v622 = vld [vmem:[%s9 + $0x18] sm:$0xff]
  %v623 = vld [vmem:[%s9 + $0x20] sm:$0xff]
  %v624 = vld [vmem:[%s9 + $0x28] sm:$0xff]
  %v625 = vld [vmem:[%s9 + $0x30] sm:$0xff]
  %v626 = vld [vmem:[%s9 + $0x38] sm:$0xff]
  %v627 = vld [vmem:[%s10] sm:$0xff]
  %v628 = vld [vmem:[%s10 + $0x8] sm:$0xff]
  %v629 = vld [vmem:[%s10 + $0x10] sm:$0xff]
  %v630 = vld [vmem:[%s10 + $0x18] sm:$0xff]
  %v631 = vld [vmem:[%s10 + $0x20] sm:$0xff]
  %v632 = vld [vmem:[%s10 + $0x28] sm:$0xff]
  %v633 = vld [vmem:[%s10 + $0x30] sm:$0xff]
  %v634 = vld [vmem:[%s10 + $0x38] sm:$0xff]
  %636 = vset.pattern.permute.xlu0 0
  %637 = vperm.xlu0 %636, %v627
  %v638 = vpop.permute.xlu0 %637
  %641 = vset.pattern.permute.xlu0 0
  %642 = vperm.xlu0 %641, %v628
  %v643 = vpop.permute.xlu0 %642
  %646 = vset.pattern.permute.xlu0 0
  %647 = vperm.xlu0 %646, %v629
  %v648 = vpop.permute.xlu0 %647
  %651 = vset.pattern.permute.xlu0 0
  %652 = vperm.xlu0 %651, %v630
  %v653 = vpop.permute.xlu0 %652
  %656 = vset.pattern.permute.xlu0 0
  %657 = vperm.xlu0 %656, %v631
  %v658 = vpop.permute.xlu0 %657
  %661 = vset.pattern.permute.xlu0 0
  %662 = vperm.xlu0 %661, %v632
  %v663 = vpop.permute.xlu0 %662
  %666 = vset.pattern.permute.xlu0 0
  %667 = vperm.xlu0 %666, %v633
  %v668 = vpop.permute.xlu0 %667
  %671 = vset.pattern.permute.xlu0 0
  %672 = vperm.xlu0 %671, %v634
  %v673 = vpop.permute.xlu0 %672
  %vm675 = vcmask 261120
  %v677 = vsel %vm675, %v619, 0
  %v680 = vsel %vm675, %v620, 0
  %v683 = vsel %vm675, %v621, 0
  %v686 = vsel %vm675, %v622, 0
  %v689 = vsel %vm675, %v623, 0
  %v692 = vsel %vm675, %v624, 0
  %v695 = vsel %vm675, %v625, 0
  %v698 = vsel %vm675, %v626, 0
  %700 = vmatprep.subr.mxu0 0.0
  %701 = vmatpush1.msra.mxu0 %v615
  %702 = vmatprep.subr.mxu0 0.0
  %703 = vmatpush1.msra.mxu0 %v616
  %704 = vmatprep.subr.mxu0 0.0
  %705 = vmatpush1.msra.mxu0 %v617
  %706 = vmatprep.subr.mxu0 0.0
  %707 = vmatpush1.msra.mxu0 %v618
  %708 = vmatprep.subr.mxu0 0.0
  %709 = vmatpush1.msra.mxu0 0.0
  %710 = vmatprep.subr.mxu0 0.0
  %711 = vmatpush1.msra.mxu0 0.0
  %712 = vmatprep.subr.mxu0 0.0
  %713 = vmatpush1.msra.mxu0 0.0
  %714 = vmatprep.subr.mxu0 0.0
  %715 = vmatpush1.msra.mxu0 0.0
  %716 = vmatprep.subr.mxu0 0.0
  %717 = vmatpush1.msra.mxu0 0.0
  %718 = vmatprep.subr.mxu0 0.0
  %719 = vmatpush1.msra.mxu0 0.0
  %720 = vmatprep.subr.mxu0 0.0
  %721 = vmatpush1.msra.mxu0 0.0
  %722 = vmatprep.subr.mxu0 0.0
  %723 = vmatpush1.msra.mxu0 0.0
  %724 = vmatprep.subr.mxu0 0.0
  %725 = vmatpush1.msra.mxu0 0.0
  %726 = vmatprep.subr.mxu0 0.0
  %727 = vmatpush1.msra.mxu0 0.0
  %728 = vmatprep.subr.mxu0 0.0
  %729 = vmatpush1.msra.mxu0 0.0
  %730 = vmatprep.subr.mxu0 0.0
  %731 = vmatpush1.msra.mxu0 0.0
  %732 = vmatprep.subr.mxu0 0.0
  %733 = vmatpush1.msra.mxu0 0.0
  %734 = vmatprep.subr.mxu0 0.0
  %735 = vmatpush1.msra.mxu0 0.0
  %736 = vmatprep.subr.mxu0 0.0
  %737 = vmatpush1.msra.mxu0 0.0
  %738 = vmatprep.subr.mxu0 0.0
  %739 = vmatpush1.msra.mxu0 0.0
  %740 = vmatprep.subr.mxu0 0.0
  %741 = vmatpush1.msra.mxu0 0.0
  %742 = vmatprep.subr.mxu0 0.0
  %743 = vmatpush1.msra.mxu0 0.0
  %744 = vmatprep.subr.mxu0 0.0
  %745 = vmatpush1.msra.mxu0 0.0
  %746 = vmatprep.subr.mxu0 0.0
  %747 = vmatpush1.msra.mxu0 0.0
  %748 = vmatprep.subr.mxu0 0.0
  %749 = vmatpush1.msra.mxu0 0.0
  %750 = vmatprep.subr.mxu0 0.0
  %751 = vmatpush1.msra.mxu0 0.0
  %752 = vmatprep.subr.mxu0 0.0
  %753 = vmatpush1.msra.mxu0 0.0
  %754 = vmatprep.subr.mxu0 0.0
  %755 = vmatpush1.msra.mxu0 0.0
  %756 = vmatprep.subr.mxu0 0.0
  %757 = vmatpush1.msra.mxu0 0.0
  %758 = vmatprep.subr.mxu0 0.0
  %759 = vmatpush1.msra.mxu0 0.0
  %760 = vmatprep.subr.mxu0 0.0
  %761 = vmatpush1.msra.mxu0 0.0
  %762 = vmatprep.subr.mxu0 0.0
  %763 = vmatpush1.msra.mxu0 0.0
  %764 = vmatprep.mubr.f32.mxu0 0.0
  %765 = vmatmul.mubr.f32.gmra.mrb[0].mxu0 %v677
  %v766 = vpop.f32.mrb[0].mxu0
  %v767 = vadd.f32 %v638, %v766
  %v768 = vpop.f32.mrb[0].mxu0
  %769 = vmatprep.mubr.f32.mxu0 0.0
  %770 = vmatmul.mubr.f32.gmra.mrb[0].mxu0 %v680
  %v771 = vpop.f32.mrb[0].mxu0
  %v772 = vadd.f32 %v643, %v771
  %v773 = vpop.f32.mrb[0].mxu0
  %774 = vmatprep.mubr.f32.mxu0 0.0
  %775 = vmatmul.mubr.f32.gmra.mrb[0].mxu0 %v683
  %v776 = vpop.f32.mrb[0].mxu0
  %v777 = vadd.f32 %v648, %v776
  %v778 = vpop.f32.mrb[0].mxu0
  %779 = vmatprep.mubr.f32.mxu0 0.0
  %780 = vmatmul.mubr.f32.gmra.mrb[0].mxu0 %v686
  %v781 = vpop.f32.mrb[0].mxu0
  %v782 = vadd.f32 %v653, %v781
  %v783 = vpop.f32.mrb[0].mxu0
  %784 = vmatprep.mubr.f32.mxu0 0.0
  %785 = vmatmul.mubr.f32.gmra.mrb[0].mxu0 %v689
  %v786 = vpop.f32.mrb[0].mxu0
  %v787 = vadd.f32 %v658, %v786
  %v788 = vpop.f32.mrb[0].mxu0
  %789 = vmatprep.mubr.f32.mxu0 0.0
  %790 = vmatmul.mubr.f32.gmra.mrb[0].mxu0 %v692
  %v791 = vpop.f32.mrb[0].mxu0
  %v792 = vadd.f32 %v663, %v791
  %v793 = vpop.f32.mrb[0].mxu0
  %794 = vmatprep.mubr.f32.mxu0 0.0
  %795 = vmatmul.mubr.f32.gmra.mrb[0].mxu0 %v695
  %v796 = vpop.f32.mrb[0].mxu0
  %v797 = vadd.f32 %v668, %v796
  %v798 = vpop.f32.mrb[0].mxu0
  %799 = vmatprep.mubr.f32.mxu0 0.0
  %800 = vmatmul.mubr.f32.gmra.mrb[0].mxu0 %v698
  %v801 = vpop.f32.mrb[0].mxu0
  %v802 = vadd.f32 %v673, %v801
  %v803 = vpop.f32.mrb[0].mxu0
  %804 = vdwg.mxu0
  %v805 = vadd.f32 %v301, %v767
  %v806 = vadd.f32 %v302, %v772
  %v807 = vadd.f32 %v303, %v777
  %v808 = vadd.f32 %v304, %v782
  %v809 = vadd.f32 %v787, 0.0
  %v810 = vadd.f32 %v792, 0.0
  %v811 = vadd.f32 %v797, 0.0
  %v812 = vadd.f32 %v802, 0.0
  %813 = vrot.lane.b32.xlu0 %v805, 1
  %v814 = vpop.permute.xlu0 %813
  %815 = vrot.lane.b32.xlu0 %v806, 1
  %v816 = vpop.permute.xlu0 %815
  %817 = vrot.lane.b32.xlu0 %v807, 1
  %v818 = vpop.permute.xlu0 %817
  %819 = vrot.lane.b32.xlu0 %v808, 1
  %v820 = vpop.permute.xlu0 %819
  %v821 = vsel %vm308, %v814, 0.0
  %v822 = vsel %vm308, %v816, 0.0
  %v823 = vsel %vm308, %v818, 0.0
  %v824 = vsel %vm308, %v820, 0.0
  %v825 = vadd.s32 %v64, 1
  %vm826 = vcmp.ge.s32.totalorder %v825, 0
  %vm827 = vcmp.lt.s32.totalorder %v825, 64
  %vm828 = vmand %vm826, %vm827
  %829 = vrot.lane.b32.xlu0 %v805, 127
  %v830 = vpop.permute.xlu0 %829
  %831 = vrot.lane.b32.xlu0 %v806, 127
  %v832 = vpop.permute.xlu0 %831
  %833 = vrot.lane.b32.xlu0 %v807, 127
  %v834 = vpop.permute.xlu0 %833
  %835 = vrot.lane.b32.xlu0 %v808, 127
  %v836 = vpop.permute.xlu0 %835
  %v837 = vsel %vm828, %v830, 0.0
  %v838 = vsel %vm828, %v832, 0.0
  %v839 = vsel %vm828, %v834, 0.0
  %v840 = vsel %vm828, %v836, 0.0
  %s841 = scalar_lea.vmem %s5, 64
  %v842 = vld [vmem:[%s841] sm:$0xff]
  %v843 = vld [vmem:[%s841 + $0x8] sm:$0xff]
  %v844 = vld [vmem:[%s841 + $0x10] sm:$0xff]
  %v845 = vld [vmem:[%s841 + $0x18] sm:$0xff]
  %v846 = vld [vmem:[%s841 + $0x20] sm:$0xff]
  %v847 = vld [vmem:[%s841 + $0x28] sm:$0xff]
  %v848 = vld [vmem:[%s841 + $0x30] sm:$0xff]
  %v849 = vld [vmem:[%s841 + $0x38] sm:$0xff]
  %s850 = scalar_lea.vmem %s6, 64
  %v851 = vld [vmem:[%s850] sm:$0xff]
  %v852 = vld [vmem:[%s850 + $0x8] sm:$0xff]
  %v853 = vld [vmem:[%s850 + $0x10] sm:$0xff]
  %v854 = vld [vmem:[%s850 + $0x18] sm:$0xff]
  %v855 = vld [vmem:[%s850 + $0x20] sm:$0xff]
  %v856 = vld [vmem:[%s850 + $0x28] sm:$0xff]
  %v857 = vld [vmem:[%s850 + $0x30] sm:$0xff]
  %v858 = vld [vmem:[%s850 + $0x38] sm:$0xff]
  %860 = vset.pattern.permute.xlu0 0
  %861 = vperm.xlu0 %860, %v851
  %v862 = vpop.permute.xlu0 %861
  %865 = vset.pattern.permute.xlu0 0
  %866 = vperm.xlu0 %865, %v852
  %v867 = vpop.permute.xlu0 %866
  %870 = vset.pattern.permute.xlu0 0
  %871 = vperm.xlu0 %870, %v853
  %v872 = vpop.permute.xlu0 %871
  %875 = vset.pattern.permute.xlu0 0
  %876 = vperm.xlu0 %875, %v854
  %v877 = vpop.permute.xlu0 %876
  %880 = vset.pattern.permute.xlu0 0
  %881 = vperm.xlu0 %880, %v855
  %v882 = vpop.permute.xlu0 %881
  %885 = vset.pattern.permute.xlu0 0
  %886 = vperm.xlu0 %885, %v856
  %v887 = vpop.permute.xlu0 %886
  %890 = vset.pattern.permute.xlu0 0
  %891 = vperm.xlu0 %890, %v857
  %v892 = vpop.permute.xlu0 %891
  %895 = vset.pattern.permute.xlu0 0
  %896 = vperm.xlu0 %895, %v858
  %v897 = vpop.permute.xlu0 %896
  %v900 = vsel %vm377, %v842, 0
  %v903 = vsel %vm377, %v843, 0
  %v906 = vsel %vm377, %v844, 0
  %v909 = vsel %vm377, %v845, 0
  %v912 = vsel %vm377, %v846, 0
  %v915 = vsel %vm377, %v847, 0
  %v918 = vsel %vm377, %v848, 0
  %v921 = vsel %vm377, %v849, 0
  %923 = vmatprep.subr.mxu0 0.0
  %924 = vmatpush1.msra.mxu0 %v821
  %925 = vmatprep.subr.mxu0 0.0
  %926 = vmatpush1.msra.mxu0 %v822
  %927 = vmatprep.subr.mxu0 0.0
  %928 = vmatpush1.msra.mxu0 %v823
  %929 = vmatprep.subr.mxu0 0.0
  %930 = vmatpush1.msra.mxu0 %v824
  %931 = vmatprep.subr.mxu0 0.0
  %932 = vmatpush1.msra.mxu0 %v837
  %933 = vmatprep.subr.mxu0 0.0
  %934 = vmatpush1.msra.mxu0 %v838
  %935 = vmatprep.subr.mxu0 0.0
  %936 = vmatpush1.msra.mxu0 %v839
  %937 = vmatprep.subr.mxu0 0.0
  %938 = vmatpush1.msra.mxu0 %v840
  %939 = vmatprep.subr.mxu0 0.0
  %940 = vmatpush1.msra.mxu0 0.0
  %941 = vmatprep.subr.mxu0 0.0
  %942 = vmatpush1.msra.mxu0 0.0
  %943 = vmatprep.subr.mxu0 0.0
  %944 = vmatpush1.msra.mxu0 0.0
  %945 = vmatprep.subr.mxu0 0.0
  %946 = vmatpush1.msra.mxu0 0.0
  %947 = vmatprep.subr.mxu0 0.0
  %948 = vmatpush1.msra.mxu0 0.0
  %949 = vmatprep.subr.mxu0 0.0
  %950 = vmatpush1.msra.mxu0 0.0
  %951 = vmatprep.subr.mxu0 0.0
  %952 = vmatpush1.msra.mxu0 0.0
  %953 = vmatprep.subr.mxu0 0.0
  %954 = vmatpush1.msra.mxu0 0.0
  %955 = vmatprep.subr.mxu0 0.0
  %956 = vmatpush1.msra.mxu0 0.0
  %957 = vmatprep.subr.mxu0 0.0
  %958 = vmatpush1.msra.mxu0 0.0
  %959 = vmatprep.subr.mxu0 0.0
  %960 = vmatpush1.msra.mxu0 0.0
  %961 = vmatprep.subr.mxu0 0.0
  %962 = vmatpush1.msra.mxu0 0.0
  %963 = vmatprep.subr.mxu0 0.0
  %964 = vmatpush1.msra.mxu0 0.0
  %965 = vmatprep.subr.mxu0 0.0
  %966 = vmatpush1.msra.mxu0 0.0
  %967 = vmatprep.subr.mxu0 0.0
  %968 = vmatpush1.msra.mxu0 0.0
  %969 = vmatprep.subr.mxu0 0.0
  %970 = vmatpush1.msra.mxu0 0.0
  %971 = vmatprep.subr.mxu0 0.0
  %972 = vmatpush1.msra.mxu0 0.0
  %973 = vmatprep.subr.mxu0 0.0
  %974 = vmatpush1.msra.mxu0 0.0
  %975 = vmatprep.subr.mxu0 0.0
  %976 = vmatpush1.msra.mxu0 0.0
  %977 = vmatprep.subr.mxu0 0.0
  %978 = vmatpush1.msra.mxu0 0.0
  %979 = vmatprep.subr.mxu0 0.0
  %980 = vmatpush1.msra.mxu0 0.0
  %981 = vmatprep.subr.mxu0 0.0
  %982 = vmatpush1.msra.mxu0 0.0
  %983 = vmatprep.subr.mxu0 0.0
  %984 = vmatpush1.msra.mxu0 0.0
  %985 = vmatprep.subr.mxu0 0.0
  %986 = vmatpush1.msra.mxu0 0.0
  %987 = vmatprep.mubr.f32.mxu0 0.0
  %988 = vmatmul.mubr.f32.gmra.mrb[0].mxu0 %v900
  %v989 = vpop.f32.mrb[0].mxu0
  %v990 = vadd.f32 %v862, %v989
  %v991 = vpop.f32.mrb[0].mxu0
  %992 = vmatprep.mubr.f32.mxu0 0.0
  %993 = vmatmul.mubr.f32.gmra.mrb[0].mxu0 %v903
  %v994 = vpop.f32.mrb[0].mxu0
  %v995 = vadd.f32 %v867, %v994
  %v996 = vpop.f32.mrb[0].mxu0
  %997 = vmatprep.mubr.f32.mxu0 0.0
  %998 = vmatmul.mubr.f32.gmra.mrb[0].mxu0 %v906
  %v999 = vpop.f32.mrb[0].mxu0
  %v1000 = vadd.f32 %v872, %v999
  %v1001 = vpop.f32.mrb[0].mxu0
  %1002 = vmatprep.mubr.f32.mxu0 0.0
  %1003 = vmatmul.mubr.f32.gmra.mrb[0].mxu0 %v909
  %v1004 = vpop.f32.mrb[0].mxu0
  %v1005 = vadd.f32 %v877, %v1004
  %v1006 = vpop.f32.mrb[0].mxu0
  %1007 = vmatprep.mubr.f32.mxu0 0.0
  %1008 = vmatmul.mubr.f32.gmra.mrb[0].mxu0 %v912
  %v1009 = vpop.f32.mrb[0].mxu0
  %v1010 = vadd.f32 %v882, %v1009
  %v1011 = vpop.f32.mrb[0].mxu0
  %1012 = vmatprep.mubr.f32.mxu0 0.0
  %1013 = vmatmul.mubr.f32.gmra.mrb[0].mxu0 %v915
  %v1014 = vpop.f32.mrb[0].mxu0
  %v1015 = vadd.f32 %v887, %v1014
  %v1016 = vpop.f32.mrb[0].mxu0
  %1017 = vmatprep.mubr.f32.mxu0 0.0
  %1018 = vmatmul.mubr.f32.gmra.mrb[0].mxu0 %v918
  %v1019 = vpop.f32.mrb[0].mxu0
  %v1020 = vadd.f32 %v892, %v1019
  %v1021 = vpop.f32.mrb[0].mxu0
  %1022 = vmatprep.mubr.f32.mxu0 0.0
  %1023 = vmatmul.mubr.f32.gmra.mrb[0].mxu0 %v921
  %v1024 = vpop.f32.mrb[0].mxu0
  %v1025 = vadd.f32 %v897, %v1024
  %v1026 = vpop.f32.mrb[0].mxu0
  %1027 = vdwg.mxu0
  %v1028 = vmul.f32 %v990, %v1010
  %v1029 = vmul.f32 %v995, %v1015
  %v1030 = vmul.f32 %v1000, %v1020
  %v1031 = vmul.f32 %v1005, %v1025
  %s1032 = scalar_lea.vmem %s7, 32
  %v1033 = vld [vmem:[%s1032] sm:$0xff]
  %v1034 = vld [vmem:[%s1032 + $0x8] sm:$0xff]
  %v1035 = vld [vmem:[%s1032 + $0x10] sm:$0xff]
  %v1036 = vld [vmem:[%s1032 + $0x18] sm:$0xff]
  %s1037 = scalar_lea.vmem %s8, 32
  %v1038 = vld [vmem:[%s1037] sm:$0xff]
  %v1039 = vld [vmem:[%s1037 + $0x8] sm:$0xff]
  %v1040 = vld [vmem:[%s1037 + $0x10] sm:$0xff]
  %v1041 = vld [vmem:[%s1037 + $0x18] sm:$0xff]
  %1042 = vadd.xlane.f32.xlu0 %v1028
  %v1043 = vpop.xlane.xlu0 %1042
  %1044 = vadd.xlane.f32.xlu0 %v1029
  %v1045 = vpop.xlane.xlu0 %1044
  %1046 = vadd.xlane.f32.xlu0 %v1030
  %v1047 = vpop.xlane.xlu0 %1046
  %1048 = vadd.xlane.f32.xlu0 %v1031
  %v1049 = vpop.xlane.xlu0 %1048
  %v1050 = vmul.f32 %v1043, %v212
  %v1051 = vmul.f32 %v1045, %v212
  %v1052 = vmul.f32 %v1047, %v212
  %v1053 = vmul.f32 %v1049, %v212
  %v1054 = vmul.f32 %v1028, %v1028
  %v1055 = vmul.f32 %v1029, %v1029
  %v1056 = vmul.f32 %v1030, %v1030
  %v1057 = vmul.f32 %v1031, %v1031
  %1058 = vadd.xlane.f32.xlu0 %v1054
  %v1059 = vpop.xlane.xlu0 %1058
  %1060 = vadd.xlane.f32.xlu0 %v1055
  %v1061 = vpop.xlane.xlu0 %1060
  %1062 = vadd.xlane.f32.xlu0 %v1056
  %v1063 = vpop.xlane.xlu0 %1062
  %1064 = vadd.xlane.f32.xlu0 %v1057
  %v1065 = vpop.xlane.xlu0 %1064
  %v1066 = vmul.f32 %v1059, %v212
  %v1067 = vmul.f32 %v1061, %v212
  %v1068 = vmul.f32 %v1063, %v212
  %v1069 = vmul.f32 %v1065, %v212
  %v1070 = vmul.f32 %v1050, %v1050
  %v1071 = vmul.f32 %v1051, %v1051
  %v1072 = vmul.f32 %v1052, %v1052
  %v1073 = vmul.f32 %v1053, %v1053
  %v1074 = vsub.f32 %v1066, %v1070
  %v1075 = vsub.f32 %v1067, %v1071
  %v1076 = vsub.f32 %v1068, %v1072
  %v1077 = vsub.f32 %v1069, %v1073
  %v1078 = vadd.f32 %v1074, 1e-05
  %v1079 = vadd.f32 %v1075, 1e-05
  %v1080 = vadd.f32 %v1076, 1e-05
  %v1081 = vadd.f32 %v1077, 1e-05
  %v1082 = vrsqrt.pop %v1078
  %v1083 = vrsqrt.pop %v1079
  %v1084 = vrsqrt.pop %v1080
  %v1085 = vrsqrt.pop %v1081
  %v1086 = vmul.f32 %v1082, %v1033
  %v1087 = vmul.f32 %v1083, %v1034
  %v1088 = vmul.f32 %v1084, %v1035
  %v1089 = vmul.f32 %v1085, %v1036
  %v1090 = vsub.f32 %v1028, %v1050
  %v1091 = vsub.f32 %v1029, %v1051
  %v1092 = vsub.f32 %v1030, %v1052
  %v1093 = vsub.f32 %v1031, %v1053
  %1095 = vset.pattern.permute.xlu0 0
  %1096 = vperm.xlu0 %1095, %v1086
  %v1097 = vpop.permute.xlu0 %1096
  %1100 = vset.pattern.permute.xlu0 0
  %1101 = vperm.xlu0 %1100, %v1087
  %v1102 = vpop.permute.xlu0 %1101
  %1105 = vset.pattern.permute.xlu0 0
  %1106 = vperm.xlu0 %1105, %v1088
  %v1107 = vpop.permute.xlu0 %1106
  %1110 = vset.pattern.permute.xlu0 0
  %1111 = vperm.xlu0 %1110, %v1089
  %v1112 = vpop.permute.xlu0 %1111
  %v1114 = vmul.f32 %v1090, %v1097
  %v1115 = vmul.f32 %v1091, %v1102
  %v1116 = vmul.f32 %v1092, %v1107
  %v1117 = vmul.f32 %v1093, %v1112
  %1119 = vset.pattern.permute.xlu0 0
  %1120 = vperm.xlu0 %1119, %v1038
  %v1121 = vpop.permute.xlu0 %1120
  %1124 = vset.pattern.permute.xlu0 0
  %1125 = vperm.xlu0 %1124, %v1039
  %v1126 = vpop.permute.xlu0 %1125
  %1129 = vset.pattern.permute.xlu0 0
  %1130 = vperm.xlu0 %1129, %v1040
  %v1131 = vpop.permute.xlu0 %1130
  %1134 = vset.pattern.permute.xlu0 0
  %1135 = vperm.xlu0 %1134, %v1041
  %v1136 = vpop.permute.xlu0 %1135
  %v1138 = vadd.f32 %v1114, %v1121
  %v1139 = vadd.f32 %v1115, %v1126
  %v1140 = vadd.f32 %v1116, %v1131
  %v1141 = vadd.f32 %v1117, %v1136
  %s1142 = scalar_lea.vmem %s9, 64
  %v1143 = vld [vmem:[%s1142] sm:$0xff]
  %v1144 = vld [vmem:[%s1142 + $0x8] sm:$0xff]
  %v1145 = vld [vmem:[%s1142 + $0x10] sm:$0xff]
  %v1146 = vld [vmem:[%s1142 + $0x18] sm:$0xff]
  %v1147 = vld [vmem:[%s1142 + $0x20] sm:$0xff]
  %v1148 = vld [vmem:[%s1142 + $0x28] sm:$0xff]
  %v1149 = vld [vmem:[%s1142 + $0x30] sm:$0xff]
  %v1150 = vld [vmem:[%s1142 + $0x38] sm:$0xff]
  %s1151 = scalar_lea.vmem %s10, 64
  %v1152 = vld [vmem:[%s1151] sm:$0xff]
  %v1153 = vld [vmem:[%s1151 + $0x8] sm:$0xff]
  %v1154 = vld [vmem:[%s1151 + $0x10] sm:$0xff]
  %v1155 = vld [vmem:[%s1151 + $0x18] sm:$0xff]
  %v1156 = vld [vmem:[%s1151 + $0x20] sm:$0xff]
  %v1157 = vld [vmem:[%s1151 + $0x28] sm:$0xff]
  %v1158 = vld [vmem:[%s1151 + $0x30] sm:$0xff]
  %v1159 = vld [vmem:[%s1151 + $0x38] sm:$0xff]
  %1161 = vset.pattern.permute.xlu0 0
  %1162 = vperm.xlu0 %1161, %v1152
  %v1163 = vpop.permute.xlu0 %1162
  %1166 = vset.pattern.permute.xlu0 0
  %1167 = vperm.xlu0 %1166, %v1153
  %v1168 = vpop.permute.xlu0 %1167
  %1171 = vset.pattern.permute.xlu0 0
  %1172 = vperm.xlu0 %1171, %v1154
  %v1173 = vpop.permute.xlu0 %1172
  %1176 = vset.pattern.permute.xlu0 0
  %1177 = vperm.xlu0 %1176, %v1155
  %v1178 = vpop.permute.xlu0 %1177
  %1181 = vset.pattern.permute.xlu0 0
  %1182 = vperm.xlu0 %1181, %v1156
  %v1183 = vpop.permute.xlu0 %1182
  %1186 = vset.pattern.permute.xlu0 0
  %1187 = vperm.xlu0 %1186, %v1157
  %v1188 = vpop.permute.xlu0 %1187
  %1191 = vset.pattern.permute.xlu0 0
  %1192 = vperm.xlu0 %1191, %v1158
  %v1193 = vpop.permute.xlu0 %1192
  %1196 = vset.pattern.permute.xlu0 0
  %1197 = vperm.xlu0 %1196, %v1159
  %v1198 = vpop.permute.xlu0 %1197
  %v1201 = vsel %vm675, %v1143, 0
  %v1204 = vsel %vm675, %v1144, 0
  %v1207 = vsel %vm675, %v1145, 0
  %v1210 = vsel %vm675, %v1146, 0
  %v1213 = vsel %vm675, %v1147, 0
  %v1216 = vsel %vm675, %v1148, 0
  %v1219 = vsel %vm675, %v1149, 0
  %v1222 = vsel %vm675, %v1150, 0
  %1224 = vmatprep.subr.mxu0 0.0
  %1225 = vmatpush1.msra.mxu0 %v1138
  %1226 = vmatprep.subr.mxu0 0.0
  %1227 = vmatpush1.msra.mxu0 %v1139
  %1228 = vmatprep.subr.mxu0 0.0
  %1229 = vmatpush1.msra.mxu0 %v1140
  %1230 = vmatprep.subr.mxu0 0.0
  %1231 = vmatpush1.msra.mxu0 %v1141
  %1232 = vmatprep.subr.mxu0 0.0
  %1233 = vmatpush1.msra.mxu0 0.0
  %1234 = vmatprep.subr.mxu0 0.0
  %1235 = vmatpush1.msra.mxu0 0.0
  %1236 = vmatprep.subr.mxu0 0.0
  %1237 = vmatpush1.msra.mxu0 0.0
  %1238 = vmatprep.subr.mxu0 0.0
  %1239 = vmatpush1.msra.mxu0 0.0
  %1240 = vmatprep.subr.mxu0 0.0
  %1241 = vmatpush1.msra.mxu0 0.0
  %1242 = vmatprep.subr.mxu0 0.0
  %1243 = vmatpush1.msra.mxu0 0.0
  %1244 = vmatprep.subr.mxu0 0.0
  %1245 = vmatpush1.msra.mxu0 0.0
  %1246 = vmatprep.subr.mxu0 0.0
  %1247 = vmatpush1.msra.mxu0 0.0
  %1248 = vmatprep.subr.mxu0 0.0
  %1249 = vmatpush1.msra.mxu0 0.0
  %1250 = vmatprep.subr.mxu0 0.0
  %1251 = vmatpush1.msra.mxu0 0.0
  %1252 = vmatprep.subr.mxu0 0.0
  %1253 = vmatpush1.msra.mxu0 0.0
  %1254 = vmatprep.subr.mxu0 0.0
  %1255 = vmatpush1.msra.mxu0 0.0
  %1256 = vmatprep.subr.mxu0 0.0
  %1257 = vmatpush1.msra.mxu0 0.0
  %1258 = vmatprep.subr.mxu0 0.0
  %1259 = vmatpush1.msra.mxu0 0.0
  %1260 = vmatprep.subr.mxu0 0.0
  %1261 = vmatpush1.msra.mxu0 0.0
  %1262 = vmatprep.subr.mxu0 0.0
  %1263 = vmatpush1.msra.mxu0 0.0
  %1264 = vmatprep.subr.mxu0 0.0
  %1265 = vmatpush1.msra.mxu0 0.0
  %1266 = vmatprep.subr.mxu0 0.0
  %1267 = vmatpush1.msra.mxu0 0.0
  %1268 = vmatprep.subr.mxu0 0.0
  %1269 = vmatpush1.msra.mxu0 0.0
  %1270 = vmatprep.subr.mxu0 0.0
  %1271 = vmatpush1.msra.mxu0 0.0
  %1272 = vmatprep.subr.mxu0 0.0
  %1273 = vmatpush1.msra.mxu0 0.0
  %1274 = vmatprep.subr.mxu0 0.0
  %1275 = vmatpush1.msra.mxu0 0.0
  %1276 = vmatprep.subr.mxu0 0.0
  %1277 = vmatpush1.msra.mxu0 0.0
  %1278 = vmatprep.subr.mxu0 0.0
  %1279 = vmatpush1.msra.mxu0 0.0
  %1280 = vmatprep.subr.mxu0 0.0
  %1281 = vmatpush1.msra.mxu0 0.0
  %1282 = vmatprep.subr.mxu0 0.0
  %1283 = vmatpush1.msra.mxu0 0.0
  %1284 = vmatprep.subr.mxu0 0.0
  %1285 = vmatpush1.msra.mxu0 0.0
  %1286 = vmatprep.subr.mxu0 0.0
  %1287 = vmatpush1.msra.mxu0 0.0
  %1288 = vmatprep.mubr.f32.mxu0 0.0
  %1289 = vmatmul.mubr.f32.gmra.mrb[0].mxu0 %v1201
  %v1290 = vpop.f32.mrb[0].mxu0
  %v1291 = vadd.f32 %v1163, %v1290
  %v1292 = vpop.f32.mrb[0].mxu0
  %1293 = vmatprep.mubr.f32.mxu0 0.0
  %1294 = vmatmul.mubr.f32.gmra.mrb[0].mxu0 %v1204
  %v1295 = vpop.f32.mrb[0].mxu0
  %v1296 = vadd.f32 %v1168, %v1295
  %v1297 = vpop.f32.mrb[0].mxu0
  %1298 = vmatprep.mubr.f32.mxu0 0.0
  %1299 = vmatmul.mubr.f32.gmra.mrb[0].mxu0 %v1207
  %v1300 = vpop.f32.mrb[0].mxu0
  %v1301 = vadd.f32 %v1173, %v1300
  %v1302 = vpop.f32.mrb[0].mxu0
  %1303 = vmatprep.mubr.f32.mxu0 0.0
  %1304 = vmatmul.mubr.f32.gmra.mrb[0].mxu0 %v1210
  %v1305 = vpop.f32.mrb[0].mxu0
  %v1306 = vadd.f32 %v1178, %v1305
  %v1307 = vpop.f32.mrb[0].mxu0
  %1308 = vmatprep.mubr.f32.mxu0 0.0
  %1309 = vmatmul.mubr.f32.gmra.mrb[0].mxu0 %v1213
  %v1310 = vpop.f32.mrb[0].mxu0
  %v1311 = vadd.f32 %v1183, %v1310
  %v1312 = vpop.f32.mrb[0].mxu0
  %1313 = vmatprep.mubr.f32.mxu0 0.0
  %1314 = vmatmul.mubr.f32.gmra.mrb[0].mxu0 %v1216
  %v1315 = vpop.f32.mrb[0].mxu0
  %v1316 = vadd.f32 %v1188, %v1315
  %v1317 = vpop.f32.mrb[0].mxu0
  %1318 = vmatprep.mubr.f32.mxu0 0.0
  %1319 = vmatmul.mubr.f32.gmra.mrb[0].mxu0 %v1219
  %v1320 = vpop.f32.mrb[0].mxu0
  %v1321 = vadd.f32 %v1193, %v1320
  %v1322 = vpop.f32.mrb[0].mxu0
  %1323 = vmatprep.mubr.f32.mxu0 0.0
  %1324 = vmatmul.mubr.f32.gmra.mrb[0].mxu0 %v1222
  %v1325 = vpop.f32.mrb[0].mxu0
  %v1326 = vadd.f32 %v1198, %v1325
  %v1327 = vpop.f32.mrb[0].mxu0
  %1328 = vdwg.mxu0
  %v1329 = vadd.f32 %v805, %v1291
  %v1330 = vadd.f32 %v806, %v1296
  %v1331 = vadd.f32 %v807, %v1301
  %v1332 = vadd.f32 %v808, %v1306
  %v1333 = vadd.f32 %v809, %v1311
  %v1334 = vadd.f32 %v810, %v1316
  %v1335 = vadd.f32 %v811, %v1321
  %v1336 = vadd.f32 %v812, %v1326
  %v1337 = vadd.s32 %v64, 4294967294
  %vm1338 = vcmp.ge.s32.totalorder %v1337, 0
  %vm1339 = vcmp.lt.s32.totalorder %v1337, 64
  %vm1340 = vmand %vm1338, %vm1339
  %1341 = vrot.lane.b32.xlu0 %v1329, 2
  %v1342 = vpop.permute.xlu0 %1341
  %1343 = vrot.lane.b32.xlu0 %v1330, 2
  %v1344 = vpop.permute.xlu0 %1343
  %1345 = vrot.lane.b32.xlu0 %v1331, 2
  %v1346 = vpop.permute.xlu0 %1345
  %1347 = vrot.lane.b32.xlu0 %v1332, 2
  %v1348 = vpop.permute.xlu0 %1347
  %v1349 = vsel %vm1340, %v1342, 0.0
  %v1350 = vsel %vm1340, %v1344, 0.0
  %v1351 = vsel %vm1340, %v1346, 0.0
  %v1352 = vsel %vm1340, %v1348, 0.0
  %v1353 = vadd.s32 %v64, 2
  %vm1354 = vcmp.ge.s32.totalorder %v1353, 0
  %vm1355 = vcmp.lt.s32.totalorder %v1353, 64
  %vm1356 = vmand %vm1354, %vm1355
  %1357 = vrot.lane.b32.xlu0 %v1329, 126
  %v1358 = vpop.permute.xlu0 %1357
  %1359 = vrot.lane.b32.xlu0 %v1330, 126
  %v1360 = vpop.permute.xlu0 %1359
  %1361 = vrot.lane.b32.xlu0 %v1331, 126
  %v1362 = vpop.permute.xlu0 %1361
  %1363 = vrot.lane.b32.xlu0 %v1332, 126
  %v1364 = vpop.permute.xlu0 %1363
  %v1365 = vsel %vm1356, %v1358, 0.0
  %v1366 = vsel %vm1356, %v1360, 0.0
  %v1367 = vsel %vm1356, %v1362, 0.0
  %v1368 = vsel %vm1356, %v1364, 0.0
  %s1369 = scalar_lea.vmem %s5, 128
  %v1370 = vld [vmem:[%s1369] sm:$0xff]
  %v1371 = vld [vmem:[%s1369 + $0x8] sm:$0xff]
  %v1372 = vld [vmem:[%s1369 + $0x10] sm:$0xff]
  %v1373 = vld [vmem:[%s1369 + $0x18] sm:$0xff]
  %v1374 = vld [vmem:[%s1369 + $0x20] sm:$0xff]
  %v1375 = vld [vmem:[%s1369 + $0x28] sm:$0xff]
  %v1376 = vld [vmem:[%s1369 + $0x30] sm:$0xff]
  %v1377 = vld [vmem:[%s1369 + $0x38] sm:$0xff]
  %s1378 = scalar_lea.vmem %s6, 128
  %v1379 = vld [vmem:[%s1378] sm:$0xff]
  %v1380 = vld [vmem:[%s1378 + $0x8] sm:$0xff]
  %v1381 = vld [vmem:[%s1378 + $0x10] sm:$0xff]
  %v1382 = vld [vmem:[%s1378 + $0x18] sm:$0xff]
  %v1383 = vld [vmem:[%s1378 + $0x20] sm:$0xff]
  %v1384 = vld [vmem:[%s1378 + $0x28] sm:$0xff]
  %v1385 = vld [vmem:[%s1378 + $0x30] sm:$0xff]
  %v1386 = vld [vmem:[%s1378 + $0x38] sm:$0xff]
  %1388 = vset.pattern.permute.xlu0 0
  %1389 = vperm.xlu0 %1388, %v1379
  %v1390 = vpop.permute.xlu0 %1389
  %1393 = vset.pattern.permute.xlu0 0
  %1394 = vperm.xlu0 %1393, %v1380
  %v1395 = vpop.permute.xlu0 %1394
  %1398 = vset.pattern.permute.xlu0 0
  %1399 = vperm.xlu0 %1398, %v1381
  %v1400 = vpop.permute.xlu0 %1399
  %1403 = vset.pattern.permute.xlu0 0
  %1404 = vperm.xlu0 %1403, %v1382
  %v1405 = vpop.permute.xlu0 %1404
  %1408 = vset.pattern.permute.xlu0 0
  %1409 = vperm.xlu0 %1408, %v1383
  %v1410 = vpop.permute.xlu0 %1409
  %1413 = vset.pattern.permute.xlu0 0
  %1414 = vperm.xlu0 %1413, %v1384
  %v1415 = vpop.permute.xlu0 %1414
  %1418 = vset.pattern.permute.xlu0 0
  %1419 = vperm.xlu0 %1418, %v1385
  %v1420 = vpop.permute.xlu0 %1419
  %1423 = vset.pattern.permute.xlu0 0
  %1424 = vperm.xlu0 %1423, %v1386
  %v1425 = vpop.permute.xlu0 %1424
  %v1428 = vsel %vm377, %v1370, 0
  %v1431 = vsel %vm377, %v1371, 0
  %v1434 = vsel %vm377, %v1372, 0
  %v1437 = vsel %vm377, %v1373, 0
  %v1440 = vsel %vm377, %v1374, 0
  %v1443 = vsel %vm377, %v1375, 0
  %v1446 = vsel %vm377, %v1376, 0
  %v1449 = vsel %vm377, %v1377, 0
  %1451 = vmatprep.subr.mxu0 0.0
  %1452 = vmatpush1.msra.mxu0 %v1349
  %1453 = vmatprep.subr.mxu0 0.0
  %1454 = vmatpush1.msra.mxu0 %v1350
  %1455 = vmatprep.subr.mxu0 0.0
  %1456 = vmatpush1.msra.mxu0 %v1351
  %1457 = vmatprep.subr.mxu0 0.0
  %1458 = vmatpush1.msra.mxu0 %v1352
  %1459 = vmatprep.subr.mxu0 0.0
  %1460 = vmatpush1.msra.mxu0 %v1365
  %1461 = vmatprep.subr.mxu0 0.0
  %1462 = vmatpush1.msra.mxu0 %v1366
  %1463 = vmatprep.subr.mxu0 0.0
  %1464 = vmatpush1.msra.mxu0 %v1367
  %1465 = vmatprep.subr.mxu0 0.0
  %1466 = vmatpush1.msra.mxu0 %v1368
  %1467 = vmatprep.subr.mxu0 0.0
  %1468 = vmatpush1.msra.mxu0 0.0
  %1469 = vmatprep.subr.mxu0 0.0
  %1470 = vmatpush1.msra.mxu0 0.0
  %1471 = vmatprep.subr.mxu0 0.0
  %1472 = vmatpush1.msra.mxu0 0.0
  %1473 = vmatprep.subr.mxu0 0.0
  %1474 = vmatpush1.msra.mxu0 0.0
  %1475 = vmatprep.subr.mxu0 0.0
  %1476 = vmatpush1.msra.mxu0 0.0
  %1477 = vmatprep.subr.mxu0 0.0
  %1478 = vmatpush1.msra.mxu0 0.0
  %1479 = vmatprep.subr.mxu0 0.0
  %1480 = vmatpush1.msra.mxu0 0.0
  %1481 = vmatprep.subr.mxu0 0.0
  %1482 = vmatpush1.msra.mxu0 0.0
  %1483 = vmatprep.subr.mxu0 0.0
  %1484 = vmatpush1.msra.mxu0 0.0
  %1485 = vmatprep.subr.mxu0 0.0
  %1486 = vmatpush1.msra.mxu0 0.0
  %1487 = vmatprep.subr.mxu0 0.0
  %1488 = vmatpush1.msra.mxu0 0.0
  %1489 = vmatprep.subr.mxu0 0.0
  %1490 = vmatpush1.msra.mxu0 0.0
  %1491 = vmatprep.subr.mxu0 0.0
  %1492 = vmatpush1.msra.mxu0 0.0
  %1493 = vmatprep.subr.mxu0 0.0
  %1494 = vmatpush1.msra.mxu0 0.0
  %1495 = vmatprep.subr.mxu0 0.0
  %1496 = vmatpush1.msra.mxu0 0.0
  %1497 = vmatprep.subr.mxu0 0.0
  %1498 = vmatpush1.msra.mxu0 0.0
  %1499 = vmatprep.subr.mxu0 0.0
  %1500 = vmatpush1.msra.mxu0 0.0
  %1501 = vmatprep.subr.mxu0 0.0
  %1502 = vmatpush1.msra.mxu0 0.0
  %1503 = vmatprep.subr.mxu0 0.0
  %1504 = vmatpush1.msra.mxu0 0.0
  %1505 = vmatprep.subr.mxu0 0.0
  %1506 = vmatpush1.msra.mxu0 0.0
  %1507 = vmatprep.subr.mxu0 0.0
  %1508 = vmatpush1.msra.mxu0 0.0
  %1509 = vmatprep.subr.mxu0 0.0
  %1510 = vmatpush1.msra.mxu0 0.0
  %1511 = vmatprep.subr.mxu0 0.0
  %1512 = vmatpush1.msra.mxu0 0.0
  %1513 = vmatprep.subr.mxu0 0.0
  %1514 = vmatpush1.msra.mxu0 0.0
  %1515 = vmatprep.mubr.f32.mxu0 0.0
  %1516 = vmatmul.mubr.f32.gmra.mrb[0].mxu0 %v1428
  %v1517 = vpop.f32.mrb[0].mxu0
  %v1518 = vadd.f32 %v1390, %v1517
  %v1519 = vpop.f32.mrb[0].mxu0
  %1520 = vmatprep.mubr.f32.mxu0 0.0
  %1521 = vmatmul.mubr.f32.gmra.mrb[0].mxu0 %v1431
  %v1522 = vpop.f32.mrb[0].mxu0
  %v1523 = vadd.f32 %v1395, %v1522
  %v1524 = vpop.f32.mrb[0].mxu0
  %1525 = vmatprep.mubr.f32.mxu0 0.0
  %1526 = vmatmul.mubr.f32.gmra.mrb[0].mxu0 %v1434
  %v1527 = vpop.f32.mrb[0].mxu0
  %v1528 = vadd.f32 %v1400, %v1527
  %v1529 = vpop.f32.mrb[0].mxu0
  %1530 = vmatprep.mubr.f32.mxu0 0.0
  %1531 = vmatmul.mubr.f32.gmra.mrb[0].mxu0 %v1437
  %v1532 = vpop.f32.mrb[0].mxu0
  %v1533 = vadd.f32 %v1405, %v1532
  %v1534 = vpop.f32.mrb[0].mxu0
  %1535 = vmatprep.mubr.f32.mxu0 0.0
  %1536 = vmatmul.mubr.f32.gmra.mrb[0].mxu0 %v1440
  %v1537 = vpop.f32.mrb[0].mxu0
  %v1538 = vadd.f32 %v1410, %v1537
  %v1539 = vpop.f32.mrb[0].mxu0
  %1540 = vmatprep.mubr.f32.mxu0 0.0
  %1541 = vmatmul.mubr.f32.gmra.mrb[0].mxu0 %v1443
  %v1542 = vpop.f32.mrb[0].mxu0
  %v1543 = vadd.f32 %v1415, %v1542
  %v1544 = vpop.f32.mrb[0].mxu0
  %1545 = vmatprep.mubr.f32.mxu0 0.0
  %1546 = vmatmul.mubr.f32.gmra.mrb[0].mxu0 %v1446
  %v1547 = vpop.f32.mrb[0].mxu0
  %v1548 = vadd.f32 %v1420, %v1547
  %v1549 = vpop.f32.mrb[0].mxu0
  %1550 = vmatprep.mubr.f32.mxu0 0.0
  %1551 = vmatmul.mubr.f32.gmra.mrb[0].mxu0 %v1449
  %v1552 = vpop.f32.mrb[0].mxu0
  %v1553 = vadd.f32 %v1425, %v1552
  %v1554 = vpop.f32.mrb[0].mxu0
  %1555 = vdwg.mxu0
  %v1556 = vmul.f32 %v1518, %v1538
  %v1557 = vmul.f32 %v1523, %v1543
  %v1558 = vmul.f32 %v1528, %v1548
  %v1559 = vmul.f32 %v1533, %v1553
  %s1560 = scalar_lea.vmem %s7, 64
  %v1561 = vld [vmem:[%s1560] sm:$0xff]
  %v1562 = vld [vmem:[%s1560 + $0x8] sm:$0xff]
  %v1563 = vld [vmem:[%s1560 + $0x10] sm:$0xff]
  %v1564 = vld [vmem:[%s1560 + $0x18] sm:$0xff]
  %s1565 = scalar_lea.vmem %s8, 64
  %v1566 = vld [vmem:[%s1565] sm:$0xff]
  %v1567 = vld [vmem:[%s1565 + $0x8] sm:$0xff]
  %v1568 = vld [vmem:[%s1565 + $0x10] sm:$0xff]
  %v1569 = vld [vmem:[%s1565 + $0x18] sm:$0xff]
  %1570 = vadd.xlane.f32.xlu0 %v1556
  %v1571 = vpop.xlane.xlu0 %1570
  %1572 = vadd.xlane.f32.xlu0 %v1557
  %v1573 = vpop.xlane.xlu0 %1572
  %1574 = vadd.xlane.f32.xlu0 %v1558
  %v1575 = vpop.xlane.xlu0 %1574
  %1576 = vadd.xlane.f32.xlu0 %v1559
  %v1577 = vpop.xlane.xlu0 %1576
  %v1578 = vmul.f32 %v1571, %v212
  %v1579 = vmul.f32 %v1573, %v212
  %v1580 = vmul.f32 %v1575, %v212
  %v1581 = vmul.f32 %v1577, %v212
  %v1582 = vmul.f32 %v1556, %v1556
  %v1583 = vmul.f32 %v1557, %v1557
  %v1584 = vmul.f32 %v1558, %v1558
  %v1585 = vmul.f32 %v1559, %v1559
  %1586 = vadd.xlane.f32.xlu0 %v1582
  %v1587 = vpop.xlane.xlu0 %1586
  %1588 = vadd.xlane.f32.xlu0 %v1583
  %v1589 = vpop.xlane.xlu0 %1588
  %1590 = vadd.xlane.f32.xlu0 %v1584
  %v1591 = vpop.xlane.xlu0 %1590
  %1592 = vadd.xlane.f32.xlu0 %v1585
  %v1593 = vpop.xlane.xlu0 %1592
  %v1594 = vmul.f32 %v1587, %v212
  %v1595 = vmul.f32 %v1589, %v212
  %v1596 = vmul.f32 %v1591, %v212
  %v1597 = vmul.f32 %v1593, %v212
  %v1598 = vmul.f32 %v1578, %v1578
  %v1599 = vmul.f32 %v1579, %v1579
  %v1600 = vmul.f32 %v1580, %v1580
  %v1601 = vmul.f32 %v1581, %v1581
  %v1602 = vsub.f32 %v1594, %v1598
  %v1603 = vsub.f32 %v1595, %v1599
  %v1604 = vsub.f32 %v1596, %v1600
  %v1605 = vsub.f32 %v1597, %v1601
  %v1606 = vadd.f32 %v1602, 1e-05
  %v1607 = vadd.f32 %v1603, 1e-05
  %v1608 = vadd.f32 %v1604, 1e-05
  %v1609 = vadd.f32 %v1605, 1e-05
  %v1610 = vrsqrt.pop %v1606
  %v1611 = vrsqrt.pop %v1607
  %v1612 = vrsqrt.pop %v1608
  %v1613 = vrsqrt.pop %v1609
  %v1614 = vmul.f32 %v1610, %v1561
  %v1615 = vmul.f32 %v1611, %v1562
  %v1616 = vmul.f32 %v1612, %v1563
  %v1617 = vmul.f32 %v1613, %v1564
  %v1618 = vsub.f32 %v1556, %v1578
  %v1619 = vsub.f32 %v1557, %v1579
  %v1620 = vsub.f32 %v1558, %v1580
  %v1621 = vsub.f32 %v1559, %v1581
  %1623 = vset.pattern.permute.xlu0 0
  %1624 = vperm.xlu0 %1623, %v1614
  %v1625 = vpop.permute.xlu0 %1624
  %1628 = vset.pattern.permute.xlu0 0
  %1629 = vperm.xlu0 %1628, %v1615
  %v1630 = vpop.permute.xlu0 %1629
  %1633 = vset.pattern.permute.xlu0 0
  %1634 = vperm.xlu0 %1633, %v1616
  %v1635 = vpop.permute.xlu0 %1634
  %1638 = vset.pattern.permute.xlu0 0
  %1639 = vperm.xlu0 %1638, %v1617
  %v1640 = vpop.permute.xlu0 %1639
  %v1642 = vmul.f32 %v1618, %v1625
  %v1643 = vmul.f32 %v1619, %v1630
  %v1644 = vmul.f32 %v1620, %v1635
  %v1645 = vmul.f32 %v1621, %v1640
  %1647 = vset.pattern.permute.xlu0 0
  %1648 = vperm.xlu0 %1647, %v1566
  %v1649 = vpop.permute.xlu0 %1648
  %1652 = vset.pattern.permute.xlu0 0
  %1653 = vperm.xlu0 %1652, %v1567
  %v1654 = vpop.permute.xlu0 %1653
  %1657 = vset.pattern.permute.xlu0 0
  %1658 = vperm.xlu0 %1657, %v1568
  %v1659 = vpop.permute.xlu0 %1658
  %1662 = vset.pattern.permute.xlu0 0
  %1663 = vperm.xlu0 %1662, %v1569
  %v1664 = vpop.permute.xlu0 %1663
  %v1666 = vadd.f32 %v1642, %v1649
  %v1667 = vadd.f32 %v1643, %v1654
  %v1668 = vadd.f32 %v1644, %v1659
  %v1669 = vadd.f32 %v1645, %v1664
  %s1670 = scalar_lea.vmem %s9, 128
  %v1671 = vld [vmem:[%s1670] sm:$0xff]
  %v1672 = vld [vmem:[%s1670 + $0x8] sm:$0xff]
  %v1673 = vld [vmem:[%s1670 + $0x10] sm:$0xff]
  %v1674 = vld [vmem:[%s1670 + $0x18] sm:$0xff]
  %v1675 = vld [vmem:[%s1670 + $0x20] sm:$0xff]
  %v1676 = vld [vmem:[%s1670 + $0x28] sm:$0xff]
  %v1677 = vld [vmem:[%s1670 + $0x30] sm:$0xff]
  %v1678 = vld [vmem:[%s1670 + $0x38] sm:$0xff]
  %s1679 = scalar_lea.vmem %s10, 128
  %v1680 = vld [vmem:[%s1679] sm:$0xff]
  %v1681 = vld [vmem:[%s1679 + $0x8] sm:$0xff]
  %v1682 = vld [vmem:[%s1679 + $0x10] sm:$0xff]
  %v1683 = vld [vmem:[%s1679 + $0x18] sm:$0xff]
  %v1684 = vld [vmem:[%s1679 + $0x20] sm:$0xff]
  %v1685 = vld [vmem:[%s1679 + $0x28] sm:$0xff]
  %v1686 = vld [vmem:[%s1679 + $0x30] sm:$0xff]
  %v1687 = vld [vmem:[%s1679 + $0x38] sm:$0xff]
  %1689 = vset.pattern.permute.xlu0 0
  %1690 = vperm.xlu0 %1689, %v1680
  %v1691 = vpop.permute.xlu0 %1690
  %1694 = vset.pattern.permute.xlu0 0
  %1695 = vperm.xlu0 %1694, %v1681
  %v1696 = vpop.permute.xlu0 %1695
  %1699 = vset.pattern.permute.xlu0 0
  %1700 = vperm.xlu0 %1699, %v1682
  %v1701 = vpop.permute.xlu0 %1700
  %1704 = vset.pattern.permute.xlu0 0
  %1705 = vperm.xlu0 %1704, %v1683
  %v1706 = vpop.permute.xlu0 %1705
  %1709 = vset.pattern.permute.xlu0 0
  %1710 = vperm.xlu0 %1709, %v1684
  %v1711 = vpop.permute.xlu0 %1710
  %1714 = vset.pattern.permute.xlu0 0
  %1715 = vperm.xlu0 %1714, %v1685
  %v1716 = vpop.permute.xlu0 %1715
  %1719 = vset.pattern.permute.xlu0 0
  %1720 = vperm.xlu0 %1719, %v1686
  %v1721 = vpop.permute.xlu0 %1720
  %1724 = vset.pattern.permute.xlu0 0
  %1725 = vperm.xlu0 %1724, %v1687
  %v1726 = vpop.permute.xlu0 %1725
  %v1729 = vsel %vm675, %v1671, 0
  %v1732 = vsel %vm675, %v1672, 0
  %v1735 = vsel %vm675, %v1673, 0
  %v1738 = vsel %vm675, %v1674, 0
  %v1741 = vsel %vm675, %v1675, 0
  %v1744 = vsel %vm675, %v1676, 0
  %v1747 = vsel %vm675, %v1677, 0
  %v1750 = vsel %vm675, %v1678, 0
  %1752 = vmatprep.subr.mxu0 0.0
  %1753 = vmatpush1.msra.mxu0 %v1666
  %1754 = vmatprep.subr.mxu0 0.0
  %1755 = vmatpush1.msra.mxu0 %v1667
  %1756 = vmatprep.subr.mxu0 0.0
  %1757 = vmatpush1.msra.mxu0 %v1668
  %1758 = vmatprep.subr.mxu0 0.0
  %1759 = vmatpush1.msra.mxu0 %v1669
  %1760 = vmatprep.subr.mxu0 0.0
  %1761 = vmatpush1.msra.mxu0 0.0
  %1762 = vmatprep.subr.mxu0 0.0
  %1763 = vmatpush1.msra.mxu0 0.0
  %1764 = vmatprep.subr.mxu0 0.0
  %1765 = vmatpush1.msra.mxu0 0.0
  %1766 = vmatprep.subr.mxu0 0.0
  %1767 = vmatpush1.msra.mxu0 0.0
  %1768 = vmatprep.subr.mxu0 0.0
  %1769 = vmatpush1.msra.mxu0 0.0
  %1770 = vmatprep.subr.mxu0 0.0
  %1771 = vmatpush1.msra.mxu0 0.0
  %1772 = vmatprep.subr.mxu0 0.0
  %1773 = vmatpush1.msra.mxu0 0.0
  %1774 = vmatprep.subr.mxu0 0.0
  %1775 = vmatpush1.msra.mxu0 0.0
  %1776 = vmatprep.subr.mxu0 0.0
  %1777 = vmatpush1.msra.mxu0 0.0
  %1778 = vmatprep.subr.mxu0 0.0
  %1779 = vmatpush1.msra.mxu0 0.0
  %1780 = vmatprep.subr.mxu0 0.0
  %1781 = vmatpush1.msra.mxu0 0.0
  %1782 = vmatprep.subr.mxu0 0.0
  %1783 = vmatpush1.msra.mxu0 0.0
  %1784 = vmatprep.subr.mxu0 0.0
  %1785 = vmatpush1.msra.mxu0 0.0
  %1786 = vmatprep.subr.mxu0 0.0
  %1787 = vmatpush1.msra.mxu0 0.0
  %1788 = vmatprep.subr.mxu0 0.0
  %1789 = vmatpush1.msra.mxu0 0.0
  %1790 = vmatprep.subr.mxu0 0.0
  %1791 = vmatpush1.msra.mxu0 0.0
  %1792 = vmatprep.subr.mxu0 0.0
  %1793 = vmatpush1.msra.mxu0 0.0
  %1794 = vmatprep.subr.mxu0 0.0
  %1795 = vmatpush1.msra.mxu0 0.0
  %1796 = vmatprep.subr.mxu0 0.0
  %1797 = vmatpush1.msra.mxu0 0.0
  %1798 = vmatprep.subr.mxu0 0.0
  %1799 = vmatpush1.msra.mxu0 0.0
  %1800 = vmatprep.subr.mxu0 0.0
  %1801 = vmatpush1.msra.mxu0 0.0
  %1802 = vmatprep.subr.mxu0 0.0
  %1803 = vmatpush1.msra.mxu0 0.0
  %1804 = vmatprep.subr.mxu0 0.0
  %1805 = vmatpush1.msra.mxu0 0.0
  %1806 = vmatprep.subr.mxu0 0.0
  %1807 = vmatpush1.msra.mxu0 0.0
  %1808 = vmatprep.subr.mxu0 0.0
  %1809 = vmatpush1.msra.mxu0 0.0
  %1810 = vmatprep.subr.mxu0 0.0
  %1811 = vmatpush1.msra.mxu0 0.0
  %1812 = vmatprep.subr.mxu0 0.0
  %1813 = vmatpush1.msra.mxu0 0.0
  %1814 = vmatprep.subr.mxu0 0.0
  %1815 = vmatpush1.msra.mxu0 0.0
  %1816 = vmatprep.mubr.f32.mxu0 0.0
  %1817 = vmatmul.mubr.f32.gmra.mrb[0].mxu0 %v1729
  %v1818 = vpop.f32.mrb[0].mxu0
  %v1819 = vadd.f32 %v1691, %v1818
  %v1820 = vpop.f32.mrb[0].mxu0
  %1821 = vmatprep.mubr.f32.mxu0 0.0
  %1822 = vmatmul.mubr.f32.gmra.mrb[0].mxu0 %v1732
  %v1823 = vpop.f32.mrb[0].mxu0
  %v1824 = vadd.f32 %v1696, %v1823
  %v1825 = vpop.f32.mrb[0].mxu0
  %1826 = vmatprep.mubr.f32.mxu0 0.0
  %1827 = vmatmul.mubr.f32.gmra.mrb[0].mxu0 %v1735
  %v1828 = vpop.f32.mrb[0].mxu0
  %v1829 = vadd.f32 %v1701, %v1828
  %v1830 = vpop.f32.mrb[0].mxu0
  %1831 = vmatprep.mubr.f32.mxu0 0.0
  %1832 = vmatmul.mubr.f32.gmra.mrb[0].mxu0 %v1738
  %v1833 = vpop.f32.mrb[0].mxu0
  %v1834 = vadd.f32 %v1706, %v1833
  %v1835 = vpop.f32.mrb[0].mxu0
  %1836 = vmatprep.mubr.f32.mxu0 0.0
  %1837 = vmatmul.mubr.f32.gmra.mrb[0].mxu0 %v1741
  %v1838 = vpop.f32.mrb[0].mxu0
  %v1839 = vadd.f32 %v1711, %v1838
  %v1840 = vpop.f32.mrb[0].mxu0
  %1841 = vmatprep.mubr.f32.mxu0 0.0
  %1842 = vmatmul.mubr.f32.gmra.mrb[0].mxu0 %v1744
  %v1843 = vpop.f32.mrb[0].mxu0
  %v1844 = vadd.f32 %v1716, %v1843
  %v1845 = vpop.f32.mrb[0].mxu0
  %1846 = vmatprep.mubr.f32.mxu0 0.0
  %1847 = vmatmul.mubr.f32.gmra.mrb[0].mxu0 %v1747
  %v1848 = vpop.f32.mrb[0].mxu0
  %v1849 = vadd.f32 %v1721, %v1848
  %v1850 = vpop.f32.mrb[0].mxu0
  %1851 = vmatprep.mubr.f32.mxu0 0.0
  %1852 = vmatmul.mubr.f32.gmra.mrb[0].mxu0 %v1750
  %v1853 = vpop.f32.mrb[0].mxu0
  %v1854 = vadd.f32 %v1726, %v1853
  %v1855 = vpop.f32.mrb[0].mxu0
  %1856 = vdwg.mxu0
  %v1857 = vadd.f32 %v1329, %v1819
  %v1858 = vadd.f32 %v1330, %v1824
  %v1859 = vadd.f32 %v1331, %v1829
  %v1860 = vadd.f32 %v1332, %v1834
  %v1861 = vadd.f32 %v1333, %v1839
  %v1862 = vadd.f32 %v1334, %v1844
  %v1863 = vadd.f32 %v1335, %v1849
  %v1864 = vadd.f32 %v1336, %v1854
  %v1865 = vadd.s32 %v64, 4294967292
  %vm1866 = vcmp.ge.s32.totalorder %v1865, 0
  %vm1867 = vcmp.lt.s32.totalorder %v1865, 64
  %vm1868 = vmand %vm1866, %vm1867
  %1869 = vrot.lane.b32.xlu0 %v1857, 4
  %v1870 = vpop.permute.xlu0 %1869
  %1871 = vrot.lane.b32.xlu0 %v1858, 4
  %v1872 = vpop.permute.xlu0 %1871
  %1873 = vrot.lane.b32.xlu0 %v1859, 4
  %v1874 = vpop.permute.xlu0 %1873
  %1875 = vrot.lane.b32.xlu0 %v1860, 4
  %v1876 = vpop.permute.xlu0 %1875
  %v1877 = vsel %vm1868, %v1870, 0.0
  %v1878 = vsel %vm1868, %v1872, 0.0
  %v1879 = vsel %vm1868, %v1874, 0.0
  %v1880 = vsel %vm1868, %v1876, 0.0
  %v1881 = vadd.s32 %v64, 4
  %vm1882 = vcmp.ge.s32.totalorder %v1881, 0
  %vm1883 = vcmp.lt.s32.totalorder %v1881, 64
  %vm1884 = vmand %vm1882, %vm1883
  %1885 = vrot.lane.b32.xlu0 %v1857, 124
  %v1886 = vpop.permute.xlu0 %1885
  %1887 = vrot.lane.b32.xlu0 %v1858, 124
  %v1888 = vpop.permute.xlu0 %1887
  %1889 = vrot.lane.b32.xlu0 %v1859, 124
  %v1890 = vpop.permute.xlu0 %1889
  %1891 = vrot.lane.b32.xlu0 %v1860, 124
  %v1892 = vpop.permute.xlu0 %1891
  %v1893 = vsel %vm1884, %v1886, 0.0
  %v1894 = vsel %vm1884, %v1888, 0.0
  %v1895 = vsel %vm1884, %v1890, 0.0
  %v1896 = vsel %vm1884, %v1892, 0.0
  %s1897 = scalar_lea.vmem %s5, 192
  %v1898 = vld [vmem:[%s1897] sm:$0xff]
  %v1899 = vld [vmem:[%s1897 + $0x8] sm:$0xff]
  %v1900 = vld [vmem:[%s1897 + $0x10] sm:$0xff]
  %v1901 = vld [vmem:[%s1897 + $0x18] sm:$0xff]
  %v1902 = vld [vmem:[%s1897 + $0x20] sm:$0xff]
  %v1903 = vld [vmem:[%s1897 + $0x28] sm:$0xff]
  %v1904 = vld [vmem:[%s1897 + $0x30] sm:$0xff]
  %v1905 = vld [vmem:[%s1897 + $0x38] sm:$0xff]
  %s1906 = scalar_lea.vmem %s6, 192
  %v1907 = vld [vmem:[%s1906] sm:$0xff]
  %v1908 = vld [vmem:[%s1906 + $0x8] sm:$0xff]
  %v1909 = vld [vmem:[%s1906 + $0x10] sm:$0xff]
  %v1910 = vld [vmem:[%s1906 + $0x18] sm:$0xff]
  %v1911 = vld [vmem:[%s1906 + $0x20] sm:$0xff]
  %v1912 = vld [vmem:[%s1906 + $0x28] sm:$0xff]
  %v1913 = vld [vmem:[%s1906 + $0x30] sm:$0xff]
  %v1914 = vld [vmem:[%s1906 + $0x38] sm:$0xff]
  %1916 = vset.pattern.permute.xlu0 0
  %1917 = vperm.xlu0 %1916, %v1907
  %v1918 = vpop.permute.xlu0 %1917
  %1921 = vset.pattern.permute.xlu0 0
  %1922 = vperm.xlu0 %1921, %v1908
  %v1923 = vpop.permute.xlu0 %1922
  %1926 = vset.pattern.permute.xlu0 0
  %1927 = vperm.xlu0 %1926, %v1909
  %v1928 = vpop.permute.xlu0 %1927
  %1931 = vset.pattern.permute.xlu0 0
  %1932 = vperm.xlu0 %1931, %v1910
  %v1933 = vpop.permute.xlu0 %1932
  %1936 = vset.pattern.permute.xlu0 0
  %1937 = vperm.xlu0 %1936, %v1911
  %v1938 = vpop.permute.xlu0 %1937
  %1941 = vset.pattern.permute.xlu0 0
  %1942 = vperm.xlu0 %1941, %v1912
  %v1943 = vpop.permute.xlu0 %1942
  %1946 = vset.pattern.permute.xlu0 0
  %1947 = vperm.xlu0 %1946, %v1913
  %v1948 = vpop.permute.xlu0 %1947
  %1951 = vset.pattern.permute.xlu0 0
  %1952 = vperm.xlu0 %1951, %v1914
  %v1953 = vpop.permute.xlu0 %1952
  %v1956 = vsel %vm377, %v1898, 0
  %v1959 = vsel %vm377, %v1899, 0
  %v1962 = vsel %vm377, %v1900, 0
  %v1965 = vsel %vm377, %v1901, 0
  %v1968 = vsel %vm377, %v1902, 0
  %v1971 = vsel %vm377, %v1903, 0
  %v1974 = vsel %vm377, %v1904, 0
  %v1977 = vsel %vm377, %v1905, 0
  %1979 = vmatprep.subr.mxu0 0.0
  %1980 = vmatpush1.msra.mxu0 %v1877
  %1981 = vmatprep.subr.mxu0 0.0
  %1982 = vmatpush1.msra.mxu0 %v1878
  %1983 = vmatprep.subr.mxu0 0.0
  %1984 = vmatpush1.msra.mxu0 %v1879
  %1985 = vmatprep.subr.mxu0 0.0
  %1986 = vmatpush1.msra.mxu0 %v1880
  %1987 = vmatprep.subr.mxu0 0.0
  %1988 = vmatpush1.msra.mxu0 %v1893
  %1989 = vmatprep.subr.mxu0 0.0
  %1990 = vmatpush1.msra.mxu0 %v1894
  %1991 = vmatprep.subr.mxu0 0.0
  %1992 = vmatpush1.msra.mxu0 %v1895
  %1993 = vmatprep.subr.mxu0 0.0
  %1994 = vmatpush1.msra.mxu0 %v1896
  %1995 = vmatprep.subr.mxu0 0.0
  %1996 = vmatpush1.msra.mxu0 0.0
  %1997 = vmatprep.subr.mxu0 0.0
  %1998 = vmatpush1.msra.mxu0 0.0
  %1999 = vmatprep.subr.mxu0 0.0
  %2000 = vmatpush1.msra.mxu0 0.0
  %2001 = vmatprep.subr.mxu0 0.0
  %2002 = vmatpush1.msra.mxu0 0.0
  %2003 = vmatprep.subr.mxu0 0.0
  %2004 = vmatpush1.msra.mxu0 0.0
  %2005 = vmatprep.subr.mxu0 0.0
  %2006 = vmatpush1.msra.mxu0 0.0
  %2007 = vmatprep.subr.mxu0 0.0
  %2008 = vmatpush1.msra.mxu0 0.0
  %2009 = vmatprep.subr.mxu0 0.0
  %2010 = vmatpush1.msra.mxu0 0.0
  %2011 = vmatprep.subr.mxu0 0.0
  %2012 = vmatpush1.msra.mxu0 0.0
  %2013 = vmatprep.subr.mxu0 0.0
  %2014 = vmatpush1.msra.mxu0 0.0
  %2015 = vmatprep.subr.mxu0 0.0
  %2016 = vmatpush1.msra.mxu0 0.0
  %2017 = vmatprep.subr.mxu0 0.0
  %2018 = vmatpush1.msra.mxu0 0.0
  %2019 = vmatprep.subr.mxu0 0.0
  %2020 = vmatpush1.msra.mxu0 0.0
  %2021 = vmatprep.subr.mxu0 0.0
  %2022 = vmatpush1.msra.mxu0 0.0
  %2023 = vmatprep.subr.mxu0 0.0
  %2024 = vmatpush1.msra.mxu0 0.0
  %2025 = vmatprep.subr.mxu0 0.0
  %2026 = vmatpush1.msra.mxu0 0.0
  %2027 = vmatprep.subr.mxu0 0.0
  %2028 = vmatpush1.msra.mxu0 0.0
  %2029 = vmatprep.subr.mxu0 0.0
  %2030 = vmatpush1.msra.mxu0 0.0
  %2031 = vmatprep.subr.mxu0 0.0
  %2032 = vmatpush1.msra.mxu0 0.0
  %2033 = vmatprep.subr.mxu0 0.0
  %2034 = vmatpush1.msra.mxu0 0.0
  %2035 = vmatprep.subr.mxu0 0.0
  %2036 = vmatpush1.msra.mxu0 0.0
  %2037 = vmatprep.subr.mxu0 0.0
  %2038 = vmatpush1.msra.mxu0 0.0
  %2039 = vmatprep.subr.mxu0 0.0
  %2040 = vmatpush1.msra.mxu0 0.0
  %2041 = vmatprep.subr.mxu0 0.0
  %2042 = vmatpush1.msra.mxu0 0.0
  %2043 = vmatprep.mubr.f32.mxu0 0.0
  %2044 = vmatmul.mubr.f32.gmra.mrb[0].mxu0 %v1956
  %v2045 = vpop.f32.mrb[0].mxu0
  %v2046 = vadd.f32 %v1918, %v2045
  %v2047 = vpop.f32.mrb[0].mxu0
  %2048 = vmatprep.mubr.f32.mxu0 0.0
  %2049 = vmatmul.mubr.f32.gmra.mrb[0].mxu0 %v1959
  %v2050 = vpop.f32.mrb[0].mxu0
  %v2051 = vadd.f32 %v1923, %v2050
  %v2052 = vpop.f32.mrb[0].mxu0
  %2053 = vmatprep.mubr.f32.mxu0 0.0
  %2054 = vmatmul.mubr.f32.gmra.mrb[0].mxu0 %v1962
  %v2055 = vpop.f32.mrb[0].mxu0
  %v2056 = vadd.f32 %v1928, %v2055
  %v2057 = vpop.f32.mrb[0].mxu0
  %2058 = vmatprep.mubr.f32.mxu0 0.0
  %2059 = vmatmul.mubr.f32.gmra.mrb[0].mxu0 %v1965
  %v2060 = vpop.f32.mrb[0].mxu0
  %v2061 = vadd.f32 %v1933, %v2060
  %v2062 = vpop.f32.mrb[0].mxu0
  %2063 = vmatprep.mubr.f32.mxu0 0.0
  %2064 = vmatmul.mubr.f32.gmra.mrb[0].mxu0 %v1968
  %v2065 = vpop.f32.mrb[0].mxu0
  %v2066 = vadd.f32 %v1938, %v2065
  %v2067 = vpop.f32.mrb[0].mxu0
  %2068 = vmatprep.mubr.f32.mxu0 0.0
  %2069 = vmatmul.mubr.f32.gmra.mrb[0].mxu0 %v1971
  %v2070 = vpop.f32.mrb[0].mxu0
  %v2071 = vadd.f32 %v1943, %v2070
  %v2072 = vpop.f32.mrb[0].mxu0
  %2073 = vmatprep.mubr.f32.mxu0 0.0
  %2074 = vmatmul.mubr.f32.gmra.mrb[0].mxu0 %v1974
  %v2075 = vpop.f32.mrb[0].mxu0
  %v2076 = vadd.f32 %v1948, %v2075
  %v2077 = vpop.f32.mrb[0].mxu0
  %2078 = vmatprep.mubr.f32.mxu0 0.0
  %2079 = vmatmul.mubr.f32.gmra.mrb[0].mxu0 %v1977
  %v2080 = vpop.f32.mrb[0].mxu0
  %v2081 = vadd.f32 %v1953, %v2080
  %v2082 = vpop.f32.mrb[0].mxu0
  %2083 = vdwg.mxu0
  %v2084 = vmul.f32 %v2046, %v2066
  %v2085 = vmul.f32 %v2051, %v2071
  %v2086 = vmul.f32 %v2056, %v2076
  %v2087 = vmul.f32 %v2061, %v2081
  %s2088 = scalar_lea.vmem %s7, 96
  %v2089 = vld [vmem:[%s2088] sm:$0xff]
  %v2090 = vld [vmem:[%s2088 + $0x8] sm:$0xff]
  %v2091 = vld [vmem:[%s2088 + $0x10] sm:$0xff]
  %v2092 = vld [vmem:[%s2088 + $0x18] sm:$0xff]
  %s2093 = scalar_lea.vmem %s8, 96
  %v2094 = vld [vmem:[%s2093] sm:$0xff]
  %v2095 = vld [vmem:[%s2093 + $0x8] sm:$0xff]
  %v2096 = vld [vmem:[%s2093 + $0x10] sm:$0xff]
  %v2097 = vld [vmem:[%s2093 + $0x18] sm:$0xff]
  %2098 = vadd.xlane.f32.xlu0 %v2084
  %v2099 = vpop.xlane.xlu0 %2098
  %2100 = vadd.xlane.f32.xlu0 %v2085
  %v2101 = vpop.xlane.xlu0 %2100
  %2102 = vadd.xlane.f32.xlu0 %v2086
  %v2103 = vpop.xlane.xlu0 %2102
  %2104 = vadd.xlane.f32.xlu0 %v2087
  %v2105 = vpop.xlane.xlu0 %2104
  %v2106 = vmul.f32 %v2099, %v212
  %v2107 = vmul.f32 %v2101, %v212
  %v2108 = vmul.f32 %v2103, %v212
  %v2109 = vmul.f32 %v2105, %v212
  %v2110 = vmul.f32 %v2084, %v2084
  %v2111 = vmul.f32 %v2085, %v2085
  %v2112 = vmul.f32 %v2086, %v2086
  %v2113 = vmul.f32 %v2087, %v2087
  %2114 = vadd.xlane.f32.xlu0 %v2110
  %v2115 = vpop.xlane.xlu0 %2114
  %2116 = vadd.xlane.f32.xlu0 %v2111
  %v2117 = vpop.xlane.xlu0 %2116
  %2118 = vadd.xlane.f32.xlu0 %v2112
  %v2119 = vpop.xlane.xlu0 %2118
  %2120 = vadd.xlane.f32.xlu0 %v2113
  %v2121 = vpop.xlane.xlu0 %2120
  %v2122 = vmul.f32 %v2115, %v212
  %v2123 = vmul.f32 %v2117, %v212
  %v2124 = vmul.f32 %v2119, %v212
  %v2125 = vmul.f32 %v2121, %v212
  %v2126 = vmul.f32 %v2106, %v2106
  %v2127 = vmul.f32 %v2107, %v2107
  %v2128 = vmul.f32 %v2108, %v2108
  %v2129 = vmul.f32 %v2109, %v2109
  %v2130 = vsub.f32 %v2122, %v2126
  %v2131 = vsub.f32 %v2123, %v2127
  %v2132 = vsub.f32 %v2124, %v2128
  %v2133 = vsub.f32 %v2125, %v2129
  %v2134 = vadd.f32 %v2130, 1e-05
  %v2135 = vadd.f32 %v2131, 1e-05
  %v2136 = vadd.f32 %v2132, 1e-05
  %v2137 = vadd.f32 %v2133, 1e-05
  %v2138 = vrsqrt.pop %v2134
  %v2139 = vrsqrt.pop %v2135
  %v2140 = vrsqrt.pop %v2136
  %v2141 = vrsqrt.pop %v2137
  %v2142 = vmul.f32 %v2138, %v2089
  %v2143 = vmul.f32 %v2139, %v2090
  %v2144 = vmul.f32 %v2140, %v2091
  %v2145 = vmul.f32 %v2141, %v2092
  %v2146 = vsub.f32 %v2084, %v2106
  %v2147 = vsub.f32 %v2085, %v2107
  %v2148 = vsub.f32 %v2086, %v2108
  %v2149 = vsub.f32 %v2087, %v2109
  %2151 = vset.pattern.permute.xlu0 0
  %2152 = vperm.xlu0 %2151, %v2142
  %v2153 = vpop.permute.xlu0 %2152
  %2156 = vset.pattern.permute.xlu0 0
  %2157 = vperm.xlu0 %2156, %v2143
  %v2158 = vpop.permute.xlu0 %2157
  %2161 = vset.pattern.permute.xlu0 0
  %2162 = vperm.xlu0 %2161, %v2144
  %v2163 = vpop.permute.xlu0 %2162
  %2166 = vset.pattern.permute.xlu0 0
  %2167 = vperm.xlu0 %2166, %v2145
  %v2168 = vpop.permute.xlu0 %2167
  %v2170 = vmul.f32 %v2146, %v2153
  %v2171 = vmul.f32 %v2147, %v2158
  %v2172 = vmul.f32 %v2148, %v2163
  %v2173 = vmul.f32 %v2149, %v2168
  %2175 = vset.pattern.permute.xlu0 0
  %2176 = vperm.xlu0 %2175, %v2094
  %v2177 = vpop.permute.xlu0 %2176
  %2180 = vset.pattern.permute.xlu0 0
  %2181 = vperm.xlu0 %2180, %v2095
  %v2182 = vpop.permute.xlu0 %2181
  %2185 = vset.pattern.permute.xlu0 0
  %2186 = vperm.xlu0 %2185, %v2096
  %v2187 = vpop.permute.xlu0 %2186
  %2190 = vset.pattern.permute.xlu0 0
  %2191 = vperm.xlu0 %2190, %v2097
  %v2192 = vpop.permute.xlu0 %2191
  %v2194 = vadd.f32 %v2170, %v2177
  %v2195 = vadd.f32 %v2171, %v2182
  %v2196 = vadd.f32 %v2172, %v2187
  %v2197 = vadd.f32 %v2173, %v2192
  %s2198 = scalar_lea.vmem %s9, 192
  %v2199 = vld [vmem:[%s2198] sm:$0xff]
  %v2200 = vld [vmem:[%s2198 + $0x8] sm:$0xff]
  %v2201 = vld [vmem:[%s2198 + $0x10] sm:$0xff]
  %v2202 = vld [vmem:[%s2198 + $0x18] sm:$0xff]
  %v2203 = vld [vmem:[%s2198 + $0x20] sm:$0xff]
  %v2204 = vld [vmem:[%s2198 + $0x28] sm:$0xff]
  %v2205 = vld [vmem:[%s2198 + $0x30] sm:$0xff]
  %v2206 = vld [vmem:[%s2198 + $0x38] sm:$0xff]
  %s2207 = scalar_lea.vmem %s10, 192
  %v2208 = vld [vmem:[%s2207] sm:$0xff]
  %v2209 = vld [vmem:[%s2207 + $0x8] sm:$0xff]
  %v2210 = vld [vmem:[%s2207 + $0x10] sm:$0xff]
  %v2211 = vld [vmem:[%s2207 + $0x18] sm:$0xff]
  %v2212 = vld [vmem:[%s2207 + $0x20] sm:$0xff]
  %v2213 = vld [vmem:[%s2207 + $0x28] sm:$0xff]
  %v2214 = vld [vmem:[%s2207 + $0x30] sm:$0xff]
  %v2215 = vld [vmem:[%s2207 + $0x38] sm:$0xff]
  %2217 = vset.pattern.permute.xlu0 0
  %2218 = vperm.xlu0 %2217, %v2208
  %v2219 = vpop.permute.xlu0 %2218
  %2222 = vset.pattern.permute.xlu0 0
  %2223 = vperm.xlu0 %2222, %v2209
  %v2224 = vpop.permute.xlu0 %2223
  %2227 = vset.pattern.permute.xlu0 0
  %2228 = vperm.xlu0 %2227, %v2210
  %v2229 = vpop.permute.xlu0 %2228
  %2232 = vset.pattern.permute.xlu0 0
  %2233 = vperm.xlu0 %2232, %v2211
  %v2234 = vpop.permute.xlu0 %2233
  %2237 = vset.pattern.permute.xlu0 0
  %2238 = vperm.xlu0 %2237, %v2212
  %v2239 = vpop.permute.xlu0 %2238
  %2242 = vset.pattern.permute.xlu0 0
  %2243 = vperm.xlu0 %2242, %v2213
  %v2244 = vpop.permute.xlu0 %2243
  %2247 = vset.pattern.permute.xlu0 0
  %2248 = vperm.xlu0 %2247, %v2214
  %v2249 = vpop.permute.xlu0 %2248
  %2252 = vset.pattern.permute.xlu0 0
  %2253 = vperm.xlu0 %2252, %v2215
  %v2254 = vpop.permute.xlu0 %2253
  %v2257 = vsel %vm675, %v2199, 0
  %v2260 = vsel %vm675, %v2200, 0
  %v2263 = vsel %vm675, %v2201, 0
  %v2266 = vsel %vm675, %v2202, 0
  %v2269 = vsel %vm675, %v2203, 0
  %v2272 = vsel %vm675, %v2204, 0
  %v2275 = vsel %vm675, %v2205, 0
  %v2278 = vsel %vm675, %v2206, 0
  %2280 = vmatprep.subr.mxu0 0.0
  %2281 = vmatpush1.msra.mxu0 %v2194
  %2282 = vmatprep.subr.mxu0 0.0
  %2283 = vmatpush1.msra.mxu0 %v2195
  %2284 = vmatprep.subr.mxu0 0.0
  %2285 = vmatpush1.msra.mxu0 %v2196
  %2286 = vmatprep.subr.mxu0 0.0
  %2287 = vmatpush1.msra.mxu0 %v2197
  %2288 = vmatprep.subr.mxu0 0.0
  %2289 = vmatpush1.msra.mxu0 0.0
  %2290 = vmatprep.subr.mxu0 0.0
  %2291 = vmatpush1.msra.mxu0 0.0
  %2292 = vmatprep.subr.mxu0 0.0
  %2293 = vmatpush1.msra.mxu0 0.0
  %2294 = vmatprep.subr.mxu0 0.0
  %2295 = vmatpush1.msra.mxu0 0.0
  %2296 = vmatprep.subr.mxu0 0.0
  %2297 = vmatpush1.msra.mxu0 0.0
  %2298 = vmatprep.subr.mxu0 0.0
  %2299 = vmatpush1.msra.mxu0 0.0
  %2300 = vmatprep.subr.mxu0 0.0
  %2301 = vmatpush1.msra.mxu0 0.0
  %2302 = vmatprep.subr.mxu0 0.0
  %2303 = vmatpush1.msra.mxu0 0.0
  %2304 = vmatprep.subr.mxu0 0.0
  %2305 = vmatpush1.msra.mxu0 0.0
  %2306 = vmatprep.subr.mxu0 0.0
  %2307 = vmatpush1.msra.mxu0 0.0
  %2308 = vmatprep.subr.mxu0 0.0
  %2309 = vmatpush1.msra.mxu0 0.0
  %2310 = vmatprep.subr.mxu0 0.0
  %2311 = vmatpush1.msra.mxu0 0.0
  %2312 = vmatprep.subr.mxu0 0.0
  %2313 = vmatpush1.msra.mxu0 0.0
  %2314 = vmatprep.subr.mxu0 0.0
  %2315 = vmatpush1.msra.mxu0 0.0
  %2316 = vmatprep.subr.mxu0 0.0
  %2317 = vmatpush1.msra.mxu0 0.0
  %2318 = vmatprep.subr.mxu0 0.0
  %2319 = vmatpush1.msra.mxu0 0.0
  %2320 = vmatprep.subr.mxu0 0.0
  %2321 = vmatpush1.msra.mxu0 0.0
  %2322 = vmatprep.subr.mxu0 0.0
  %2323 = vmatpush1.msra.mxu0 0.0
  %2324 = vmatprep.subr.mxu0 0.0
  %2325 = vmatpush1.msra.mxu0 0.0
  %2326 = vmatprep.subr.mxu0 0.0
  %2327 = vmatpush1.msra.mxu0 0.0
  %2328 = vmatprep.subr.mxu0 0.0
  %2329 = vmatpush1.msra.mxu0 0.0
  %2330 = vmatprep.subr.mxu0 0.0
  %2331 = vmatpush1.msra.mxu0 0.0
  %2332 = vmatprep.subr.mxu0 0.0
  %2333 = vmatpush1.msra.mxu0 0.0
  %2334 = vmatprep.subr.mxu0 0.0
  %2335 = vmatpush1.msra.mxu0 0.0
  %2336 = vmatprep.subr.mxu0 0.0
  %2337 = vmatpush1.msra.mxu0 0.0
  %2338 = vmatprep.subr.mxu0 0.0
  %2339 = vmatpush1.msra.mxu0 0.0
  %2340 = vmatprep.subr.mxu0 0.0
  %2341 = vmatpush1.msra.mxu0 0.0
  %2342 = vmatprep.subr.mxu0 0.0
  %2343 = vmatpush1.msra.mxu0 0.0
  %2344 = vmatprep.mubr.f32.mxu0 0.0
  %2345 = vmatmul.mubr.f32.gmra.mrb[0].mxu0 %v2257
  %v2346 = vpop.f32.mrb[0].mxu0
  %v2347 = vadd.f32 %v2219, %v2346
  %v2348 = vpop.f32.mrb[0].mxu0
  %2349 = vmatprep.mubr.f32.mxu0 0.0
  %2350 = vmatmul.mubr.f32.gmra.mrb[0].mxu0 %v2260
  %v2351 = vpop.f32.mrb[0].mxu0
  %v2352 = vadd.f32 %v2224, %v2351
  %v2353 = vpop.f32.mrb[0].mxu0
  %2354 = vmatprep.mubr.f32.mxu0 0.0
  %2355 = vmatmul.mubr.f32.gmra.mrb[0].mxu0 %v2263
  %v2356 = vpop.f32.mrb[0].mxu0
  %v2357 = vadd.f32 %v2229, %v2356
  %v2358 = vpop.f32.mrb[0].mxu0
  %2359 = vmatprep.mubr.f32.mxu0 0.0
  %2360 = vmatmul.mubr.f32.gmra.mrb[0].mxu0 %v2266
  %v2361 = vpop.f32.mrb[0].mxu0
  %v2362 = vadd.f32 %v2234, %v2361
  %v2363 = vpop.f32.mrb[0].mxu0
  %2364 = vmatprep.mubr.f32.mxu0 0.0
  %2365 = vmatmul.mubr.f32.gmra.mrb[0].mxu0 %v2269
  %v2366 = vpop.f32.mrb[0].mxu0
  %v2367 = vadd.f32 %v2239, %v2366
  %v2368 = vpop.f32.mrb[0].mxu0
  %2369 = vmatprep.mubr.f32.mxu0 0.0
  %2370 = vmatmul.mubr.f32.gmra.mrb[0].mxu0 %v2272
  %v2371 = vpop.f32.mrb[0].mxu0
  %v2372 = vadd.f32 %v2244, %v2371
  %v2373 = vpop.f32.mrb[0].mxu0
  %2374 = vmatprep.mubr.f32.mxu0 0.0
  %2375 = vmatmul.mubr.f32.gmra.mrb[0].mxu0 %v2275
  %v2376 = vpop.f32.mrb[0].mxu0
  %v2377 = vadd.f32 %v2249, %v2376
  %v2378 = vpop.f32.mrb[0].mxu0
  %2379 = vmatprep.mubr.f32.mxu0 0.0
  %2380 = vmatmul.mubr.f32.gmra.mrb[0].mxu0 %v2278
  %v2381 = vpop.f32.mrb[0].mxu0
  %v2382 = vadd.f32 %v2254, %v2381
  %v2383 = vpop.f32.mrb[0].mxu0
  %2384 = vdwg.mxu0
  %v2385 = vadd.f32 %v1857, %v2347
  %v2386 = vadd.f32 %v1858, %v2352
  %v2387 = vadd.f32 %v1859, %v2357
  %v2388 = vadd.f32 %v1860, %v2362
  %v2389 = vadd.f32 %v1861, %v2367
  %v2390 = vadd.f32 %v1862, %v2372
  %v2391 = vadd.f32 %v1863, %v2377
  %v2392 = vadd.f32 %v1864, %v2382
  %2393 = vrot.lane.b32.xlu0 %v2385, 1
  %v2394 = vpop.permute.xlu0 %2393
  %2395 = vrot.lane.b32.xlu0 %v2386, 1
  %v2396 = vpop.permute.xlu0 %2395
  %2397 = vrot.lane.b32.xlu0 %v2387, 1
  %v2398 = vpop.permute.xlu0 %2397
  %2399 = vrot.lane.b32.xlu0 %v2388, 1
  %v2400 = vpop.permute.xlu0 %2399
  %v2401 = vsel %vm308, %v2394, 0.0
  %v2402 = vsel %vm308, %v2396, 0.0
  %v2403 = vsel %vm308, %v2398, 0.0
  %v2404 = vsel %vm308, %v2400, 0.0
  %s2405 = scalar_lea.vmem %s5, 256
  %v2406 = vld [vmem:[%s2405] sm:$0xff]
  %v2407 = vld [vmem:[%s2405 + $0x8] sm:$0xff]
  %v2408 = vld [vmem:[%s2405 + $0x10] sm:$0xff]
  %v2409 = vld [vmem:[%s2405 + $0x18] sm:$0xff]
  %v2410 = vld [vmem:[%s2405 + $0x20] sm:$0xff]
  %v2411 = vld [vmem:[%s2405 + $0x28] sm:$0xff]
  %v2412 = vld [vmem:[%s2405 + $0x30] sm:$0xff]
  %v2413 = vld [vmem:[%s2405 + $0x38] sm:$0xff]
  %s2414 = scalar_lea.vmem %s6, 256
  %v2415 = vld [vmem:[%s2414] sm:$0xff]
  %v2416 = vld [vmem:[%s2414 + $0x8] sm:$0xff]
  %v2417 = vld [vmem:[%s2414 + $0x10] sm:$0xff]
  %v2418 = vld [vmem:[%s2414 + $0x18] sm:$0xff]
  %v2419 = vld [vmem:[%s2414 + $0x20] sm:$0xff]
  %v2420 = vld [vmem:[%s2414 + $0x28] sm:$0xff]
  %v2421 = vld [vmem:[%s2414 + $0x30] sm:$0xff]
  %v2422 = vld [vmem:[%s2414 + $0x38] sm:$0xff]
  %2424 = vset.pattern.permute.xlu0 0
  %2425 = vperm.xlu0 %2424, %v2415
  %v2426 = vpop.permute.xlu0 %2425
  %2429 = vset.pattern.permute.xlu0 0
  %2430 = vperm.xlu0 %2429, %v2416
  %v2431 = vpop.permute.xlu0 %2430
  %2434 = vset.pattern.permute.xlu0 0
  %2435 = vperm.xlu0 %2434, %v2417
  %v2436 = vpop.permute.xlu0 %2435
  %2439 = vset.pattern.permute.xlu0 0
  %2440 = vperm.xlu0 %2439, %v2418
  %v2441 = vpop.permute.xlu0 %2440
  %2444 = vset.pattern.permute.xlu0 0
  %2445 = vperm.xlu0 %2444, %v2419
  %v2446 = vpop.permute.xlu0 %2445
  %2449 = vset.pattern.permute.xlu0 0
  %2450 = vperm.xlu0 %2449, %v2420
  %v2451 = vpop.permute.xlu0 %2450
  %2454 = vset.pattern.permute.xlu0 0
  %2455 = vperm.xlu0 %2454, %v2421
  %v2456 = vpop.permute.xlu0 %2455
  %2459 = vset.pattern.permute.xlu0 0
  %2460 = vperm.xlu0 %2459, %v2422
  %v2461 = vpop.permute.xlu0 %2460
  %v2464 = vsel %vm377, %v2406, 0
  %v2467 = vsel %vm377, %v2407, 0
  %v2470 = vsel %vm377, %v2408, 0
  %v2473 = vsel %vm377, %v2409, 0
  %v2476 = vsel %vm377, %v2410, 0
  %v2479 = vsel %vm377, %v2411, 0
  %v2482 = vsel %vm377, %v2412, 0
  %v2485 = vsel %vm377, %v2413, 0
  %2487 = vmatprep.subr.mxu0 0.0
  %2488 = vmatpush1.msra.mxu0 %v2401
  %2489 = vmatprep.subr.mxu0 0.0
  %2490 = vmatpush1.msra.mxu0 %v2402
  %2491 = vmatprep.subr.mxu0 0.0
  %2492 = vmatpush1.msra.mxu0 %v2403
  %2493 = vmatprep.subr.mxu0 0.0
  %2494 = vmatpush1.msra.mxu0 %v2404
  %2495 = vmatprep.subr.mxu0 0.0
  %2496 = vmatpush1.msra.mxu0 %v2385
  %2497 = vmatprep.subr.mxu0 0.0
  %2498 = vmatpush1.msra.mxu0 %v2386
  %2499 = vmatprep.subr.mxu0 0.0
  %2500 = vmatpush1.msra.mxu0 %v2387
  %2501 = vmatprep.subr.mxu0 0.0
  %2502 = vmatpush1.msra.mxu0 %v2388
  %2503 = vmatprep.subr.mxu0 0.0
  %2504 = vmatpush1.msra.mxu0 0.0
  %2505 = vmatprep.subr.mxu0 0.0
  %2506 = vmatpush1.msra.mxu0 0.0
  %2507 = vmatprep.subr.mxu0 0.0
  %2508 = vmatpush1.msra.mxu0 0.0
  %2509 = vmatprep.subr.mxu0 0.0
  %2510 = vmatpush1.msra.mxu0 0.0
  %2511 = vmatprep.subr.mxu0 0.0
  %2512 = vmatpush1.msra.mxu0 0.0
  %2513 = vmatprep.subr.mxu0 0.0
  %2514 = vmatpush1.msra.mxu0 0.0
  %2515 = vmatprep.subr.mxu0 0.0
  %2516 = vmatpush1.msra.mxu0 0.0
  %2517 = vmatprep.subr.mxu0 0.0
  %2518 = vmatpush1.msra.mxu0 0.0
  %2519 = vmatprep.subr.mxu0 0.0
  %2520 = vmatpush1.msra.mxu0 0.0
  %2521 = vmatprep.subr.mxu0 0.0
  %2522 = vmatpush1.msra.mxu0 0.0
  %2523 = vmatprep.subr.mxu0 0.0
  %2524 = vmatpush1.msra.mxu0 0.0
  %2525 = vmatprep.subr.mxu0 0.0
  %2526 = vmatpush1.msra.mxu0 0.0
  %2527 = vmatprep.subr.mxu0 0.0
  %2528 = vmatpush1.msra.mxu0 0.0
  %2529 = vmatprep.subr.mxu0 0.0
  %2530 = vmatpush1.msra.mxu0 0.0
  %2531 = vmatprep.subr.mxu0 0.0
  %2532 = vmatpush1.msra.mxu0 0.0
  %2533 = vmatprep.subr.mxu0 0.0
  %2534 = vmatpush1.msra.mxu0 0.0
  %2535 = vmatprep.subr.mxu0 0.0
  %2536 = vmatpush1.msra.mxu0 0.0
  %2537 = vmatprep.subr.mxu0 0.0
  %2538 = vmatpush1.msra.mxu0 0.0
  %2539 = vmatprep.subr.mxu0 0.0
  %2540 = vmatpush1.msra.mxu0 0.0
  %2541 = vmatprep.subr.mxu0 0.0
  %2542 = vmatpush1.msra.mxu0 0.0
  %2543 = vmatprep.subr.mxu0 0.0
  %2544 = vmatpush1.msra.mxu0 0.0
  %2545 = vmatprep.subr.mxu0 0.0
  %2546 = vmatpush1.msra.mxu0 0.0
  %2547 = vmatprep.subr.mxu0 0.0
  %2548 = vmatpush1.msra.mxu0 0.0
  %2549 = vmatprep.subr.mxu0 0.0
  %2550 = vmatpush1.msra.mxu0 0.0
  %2551 = vmatprep.mubr.f32.mxu0 0.0
  %2552 = vmatmul.mubr.f32.gmra.mrb[0].mxu0 %v2464
  %v2553 = vpop.f32.mrb[0].mxu0
  %v2554 = vadd.f32 %v2426, %v2553
  %v2555 = vpop.f32.mrb[0].mxu0
  %2556 = vmatprep.mubr.f32.mxu0 0.0
  %2557 = vmatmul.mubr.f32.gmra.mrb[0].mxu0 %v2467
  %v2558 = vpop.f32.mrb[0].mxu0
  %v2559 = vadd.f32 %v2431, %v2558
  %v2560 = vpop.f32.mrb[0].mxu0
  %2561 = vmatprep.mubr.f32.mxu0 0.0
  %2562 = vmatmul.mubr.f32.gmra.mrb[0].mxu0 %v2470
  %v2563 = vpop.f32.mrb[0].mxu0
  %v2564 = vadd.f32 %v2436, %v2563
  %v2565 = vpop.f32.mrb[0].mxu0
  %2566 = vmatprep.mubr.f32.mxu0 0.0
  %2567 = vmatmul.mubr.f32.gmra.mrb[0].mxu0 %v2473
  %v2568 = vpop.f32.mrb[0].mxu0
  %v2569 = vadd.f32 %v2441, %v2568
  %v2570 = vpop.f32.mrb[0].mxu0
  %2571 = vmatprep.mubr.f32.mxu0 0.0
  %2572 = vmatmul.mubr.f32.gmra.mrb[0].mxu0 %v2476
  %v2573 = vpop.f32.mrb[0].mxu0
  %v2574 = vadd.f32 %v2446, %v2573
  %v2575 = vpop.f32.mrb[0].mxu0
  %2576 = vmatprep.mubr.f32.mxu0 0.0
  %2577 = vmatmul.mubr.f32.gmra.mrb[0].mxu0 %v2479
  %v2578 = vpop.f32.mrb[0].mxu0
  %v2579 = vadd.f32 %v2451, %v2578
  %v2580 = vpop.f32.mrb[0].mxu0
  %2581 = vmatprep.mubr.f32.mxu0 0.0
  %2582 = vmatmul.mubr.f32.gmra.mrb[0].mxu0 %v2482
  %v2583 = vpop.f32.mrb[0].mxu0
  %v2584 = vadd.f32 %v2456, %v2583
  %v2585 = vpop.f32.mrb[0].mxu0
  %2586 = vmatprep.mubr.f32.mxu0 0.0
  %2587 = vmatmul.mubr.f32.gmra.mrb[0].mxu0 %v2485
  %v2588 = vpop.f32.mrb[0].mxu0
  %v2589 = vadd.f32 %v2461, %v2588
  %v2590 = vpop.f32.mrb[0].mxu0
  %2591 = vdwg.mxu0
  %v2592 = vmul.f32 %v2554, %v2574
  %v2593 = vmul.f32 %v2559, %v2579
  %v2594 = vmul.f32 %v2564, %v2584
  %v2595 = vmul.f32 %v2569, %v2589
  %s2596 = scalar_lea.vmem %s7, 128
  %v2597 = vld [vmem:[%s2596] sm:$0xff]
  %v2598 = vld [vmem:[%s2596 + $0x8] sm:$0xff]
  %v2599 = vld [vmem:[%s2596 + $0x10] sm:$0xff]
  %v2600 = vld [vmem:[%s2596 + $0x18] sm:$0xff]
  %s2601 = scalar_lea.vmem %s8, 128
  %v2602 = vld [vmem:[%s2601] sm:$0xff]
  %v2603 = vld [vmem:[%s2601 + $0x8] sm:$0xff]
  %v2604 = vld [vmem:[%s2601 + $0x10] sm:$0xff]
  %v2605 = vld [vmem:[%s2601 + $0x18] sm:$0xff]
  %2606 = vadd.xlane.f32.xlu0 %v2592
  %v2607 = vpop.xlane.xlu0 %2606
  %2608 = vadd.xlane.f32.xlu0 %v2593
  %v2609 = vpop.xlane.xlu0 %2608
  %2610 = vadd.xlane.f32.xlu0 %v2594
  %v2611 = vpop.xlane.xlu0 %2610
  %2612 = vadd.xlane.f32.xlu0 %v2595
  %v2613 = vpop.xlane.xlu0 %2612
  %v2614 = vmul.f32 %v2607, %v212
  %v2615 = vmul.f32 %v2609, %v212
  %v2616 = vmul.f32 %v2611, %v212
  %v2617 = vmul.f32 %v2613, %v212
  %v2618 = vmul.f32 %v2592, %v2592
  %v2619 = vmul.f32 %v2593, %v2593
  %v2620 = vmul.f32 %v2594, %v2594
  %v2621 = vmul.f32 %v2595, %v2595
  %2622 = vadd.xlane.f32.xlu0 %v2618
  %v2623 = vpop.xlane.xlu0 %2622
  %2624 = vadd.xlane.f32.xlu0 %v2619
  %v2625 = vpop.xlane.xlu0 %2624
  %2626 = vadd.xlane.f32.xlu0 %v2620
  %v2627 = vpop.xlane.xlu0 %2626
  %2628 = vadd.xlane.f32.xlu0 %v2621
  %v2629 = vpop.xlane.xlu0 %2628
  %v2630 = vmul.f32 %v2623, %v212
  %v2631 = vmul.f32 %v2625, %v212
  %v2632 = vmul.f32 %v2627, %v212
  %v2633 = vmul.f32 %v2629, %v212
  %v2634 = vmul.f32 %v2614, %v2614
  %v2635 = vmul.f32 %v2615, %v2615
  %v2636 = vmul.f32 %v2616, %v2616
  %v2637 = vmul.f32 %v2617, %v2617
  %v2638 = vsub.f32 %v2630, %v2634
  %v2639 = vsub.f32 %v2631, %v2635
  %v2640 = vsub.f32 %v2632, %v2636
  %v2641 = vsub.f32 %v2633, %v2637
  %v2642 = vadd.f32 %v2638, 1e-05
  %v2643 = vadd.f32 %v2639, 1e-05
  %v2644 = vadd.f32 %v2640, 1e-05
  %v2645 = vadd.f32 %v2641, 1e-05
  %v2646 = vrsqrt.pop %v2642
  %v2647 = vrsqrt.pop %v2643
  %v2648 = vrsqrt.pop %v2644
  %v2649 = vrsqrt.pop %v2645
  %v2650 = vmul.f32 %v2646, %v2597
  %v2651 = vmul.f32 %v2647, %v2598
  %v2652 = vmul.f32 %v2648, %v2599
  %v2653 = vmul.f32 %v2649, %v2600
  %v2654 = vsub.f32 %v2592, %v2614
  %v2655 = vsub.f32 %v2593, %v2615
  %v2656 = vsub.f32 %v2594, %v2616
  %v2657 = vsub.f32 %v2595, %v2617
  %2659 = vset.pattern.permute.xlu0 0
  %2660 = vperm.xlu0 %2659, %v2650
  %v2661 = vpop.permute.xlu0 %2660
  %2664 = vset.pattern.permute.xlu0 0
  %2665 = vperm.xlu0 %2664, %v2651
  %v2666 = vpop.permute.xlu0 %2665
  %2669 = vset.pattern.permute.xlu0 0
  %2670 = vperm.xlu0 %2669, %v2652
  %v2671 = vpop.permute.xlu0 %2670
  %2674 = vset.pattern.permute.xlu0 0
  %2675 = vperm.xlu0 %2674, %v2653
  %v2676 = vpop.permute.xlu0 %2675
  %v2678 = vmul.f32 %v2654, %v2661
  %v2679 = vmul.f32 %v2655, %v2666
  %v2680 = vmul.f32 %v2656, %v2671
  %v2681 = vmul.f32 %v2657, %v2676
  %2683 = vset.pattern.permute.xlu0 0
  %2684 = vperm.xlu0 %2683, %v2602
  %v2685 = vpop.permute.xlu0 %2684
  %2688 = vset.pattern.permute.xlu0 0
  %2689 = vperm.xlu0 %2688, %v2603
  %v2690 = vpop.permute.xlu0 %2689
  %2693 = vset.pattern.permute.xlu0 0
  %2694 = vperm.xlu0 %2693, %v2604
  %v2695 = vpop.permute.xlu0 %2694
  %2698 = vset.pattern.permute.xlu0 0
  %2699 = vperm.xlu0 %2698, %v2605
  %v2700 = vpop.permute.xlu0 %2699
  %v2702 = vadd.f32 %v2678, %v2685
  %v2703 = vadd.f32 %v2679, %v2690
  %v2704 = vadd.f32 %v2680, %v2695
  %v2705 = vadd.f32 %v2681, %v2700
  %s2706 = scalar_lea.vmem %s9, 256
  %v2707 = vld [vmem:[%s2706] sm:$0xff]
  %v2708 = vld [vmem:[%s2706 + $0x8] sm:$0xff]
  %v2709 = vld [vmem:[%s2706 + $0x10] sm:$0xff]
  %v2710 = vld [vmem:[%s2706 + $0x18] sm:$0xff]
  %v2711 = vld [vmem:[%s2706 + $0x20] sm:$0xff]
  %v2712 = vld [vmem:[%s2706 + $0x28] sm:$0xff]
  %v2713 = vld [vmem:[%s2706 + $0x30] sm:$0xff]
  %v2714 = vld [vmem:[%s2706 + $0x38] sm:$0xff]
  %s2715 = scalar_lea.vmem %s10, 256
  %v2716 = vld [vmem:[%s2715] sm:$0xff]
  %v2717 = vld [vmem:[%s2715 + $0x8] sm:$0xff]
  %v2718 = vld [vmem:[%s2715 + $0x10] sm:$0xff]
  %v2719 = vld [vmem:[%s2715 + $0x18] sm:$0xff]
  %v2720 = vld [vmem:[%s2715 + $0x20] sm:$0xff]
  %v2721 = vld [vmem:[%s2715 + $0x28] sm:$0xff]
  %v2722 = vld [vmem:[%s2715 + $0x30] sm:$0xff]
  %v2723 = vld [vmem:[%s2715 + $0x38] sm:$0xff]
  %2725 = vset.pattern.permute.xlu0 0
  %2726 = vperm.xlu0 %2725, %v2716
  %v2727 = vpop.permute.xlu0 %2726
  %2730 = vset.pattern.permute.xlu0 0
  %2731 = vperm.xlu0 %2730, %v2717
  %v2732 = vpop.permute.xlu0 %2731
  %2735 = vset.pattern.permute.xlu0 0
  %2736 = vperm.xlu0 %2735, %v2718
  %v2737 = vpop.permute.xlu0 %2736
  %2740 = vset.pattern.permute.xlu0 0
  %2741 = vperm.xlu0 %2740, %v2719
  %v2742 = vpop.permute.xlu0 %2741
  %2745 = vset.pattern.permute.xlu0 0
  %2746 = vperm.xlu0 %2745, %v2720
  %v2747 = vpop.permute.xlu0 %2746
  %2750 = vset.pattern.permute.xlu0 0
  %2751 = vperm.xlu0 %2750, %v2721
  %v2752 = vpop.permute.xlu0 %2751
  %2755 = vset.pattern.permute.xlu0 0
  %2756 = vperm.xlu0 %2755, %v2722
  %v2757 = vpop.permute.xlu0 %2756
  %2760 = vset.pattern.permute.xlu0 0
  %2761 = vperm.xlu0 %2760, %v2723
  %v2762 = vpop.permute.xlu0 %2761
  %v2765 = vsel %vm675, %v2707, 0
  %v2768 = vsel %vm675, %v2708, 0
  %v2771 = vsel %vm675, %v2709, 0
  %v2774 = vsel %vm675, %v2710, 0
  %v2777 = vsel %vm675, %v2711, 0
  %v2780 = vsel %vm675, %v2712, 0
  %v2783 = vsel %vm675, %v2713, 0
  %v2786 = vsel %vm675, %v2714, 0
  %2788 = vmatprep.subr.mxu0 0.0
  %2789 = vmatpush1.msra.mxu0 %v2702
  %2790 = vmatprep.subr.mxu0 0.0
  %2791 = vmatpush1.msra.mxu0 %v2703
  %2792 = vmatprep.subr.mxu0 0.0
  %2793 = vmatpush1.msra.mxu0 %v2704
  %2794 = vmatprep.subr.mxu0 0.0
  %2795 = vmatpush1.msra.mxu0 %v2705
  %2796 = vmatprep.subr.mxu0 0.0
  %2797 = vmatpush1.msra.mxu0 0.0
  %2798 = vmatprep.subr.mxu0 0.0
  %2799 = vmatpush1.msra.mxu0 0.0
  %2800 = vmatprep.subr.mxu0 0.0
  %2801 = vmatpush1.msra.mxu0 0.0
  %2802 = vmatprep.subr.mxu0 0.0
  %2803 = vmatpush1.msra.mxu0 0.0
  %2804 = vmatprep.subr.mxu0 0.0
  %2805 = vmatpush1.msra.mxu0 0.0
  %2806 = vmatprep.subr.mxu0 0.0
  %2807 = vmatpush1.msra.mxu0 0.0
  %2808 = vmatprep.subr.mxu0 0.0
  %2809 = vmatpush1.msra.mxu0 0.0
  %2810 = vmatprep.subr.mxu0 0.0
  %2811 = vmatpush1.msra.mxu0 0.0
  %2812 = vmatprep.subr.mxu0 0.0
  %2813 = vmatpush1.msra.mxu0 0.0
  %2814 = vmatprep.subr.mxu0 0.0
  %2815 = vmatpush1.msra.mxu0 0.0
  %2816 = vmatprep.subr.mxu0 0.0
  %2817 = vmatpush1.msra.mxu0 0.0
  %2818 = vmatprep.subr.mxu0 0.0
  %2819 = vmatpush1.msra.mxu0 0.0
  %2820 = vmatprep.subr.mxu0 0.0
  %2821 = vmatpush1.msra.mxu0 0.0
  %2822 = vmatprep.subr.mxu0 0.0
  %2823 = vmatpush1.msra.mxu0 0.0
  %2824 = vmatprep.subr.mxu0 0.0
  %2825 = vmatpush1.msra.mxu0 0.0
  %2826 = vmatprep.subr.mxu0 0.0
  %2827 = vmatpush1.msra.mxu0 0.0
  %2828 = vmatprep.subr.mxu0 0.0
  %2829 = vmatpush1.msra.mxu0 0.0
  %2830 = vmatprep.subr.mxu0 0.0
  %2831 = vmatpush1.msra.mxu0 0.0
  %2832 = vmatprep.subr.mxu0 0.0
  %2833 = vmatpush1.msra.mxu0 0.0
  %2834 = vmatprep.subr.mxu0 0.0
  %2835 = vmatpush1.msra.mxu0 0.0
  %2836 = vmatprep.subr.mxu0 0.0
  %2837 = vmatpush1.msra.mxu0 0.0
  %2838 = vmatprep.subr.mxu0 0.0
  %2839 = vmatpush1.msra.mxu0 0.0
  %2840 = vmatprep.subr.mxu0 0.0
  %2841 = vmatpush1.msra.mxu0 0.0
  %2842 = vmatprep.subr.mxu0 0.0
  %2843 = vmatpush1.msra.mxu0 0.0
  %2844 = vmatprep.subr.mxu0 0.0
  %2845 = vmatpush1.msra.mxu0 0.0
  %2846 = vmatprep.subr.mxu0 0.0
  %2847 = vmatpush1.msra.mxu0 0.0
  %2848 = vmatprep.subr.mxu0 0.0
  %2849 = vmatpush1.msra.mxu0 0.0
  %2850 = vmatprep.subr.mxu0 0.0
  %2851 = vmatpush1.msra.mxu0 0.0
  %2852 = vmatprep.mubr.f32.mxu0 0.0
  %2853 = vmatmul.mubr.f32.gmra.mrb[0].mxu0 %v2765
  %v2854 = vpop.f32.mrb[0].mxu0
  %v2855 = vadd.f32 %v2727, %v2854
  %v2856 = vpop.f32.mrb[0].mxu0
  %2857 = vmatprep.mubr.f32.mxu0 0.0
  %2858 = vmatmul.mubr.f32.gmra.mrb[0].mxu0 %v2768
  %v2859 = vpop.f32.mrb[0].mxu0
  %v2860 = vadd.f32 %v2732, %v2859
  %v2861 = vpop.f32.mrb[0].mxu0
  %2862 = vmatprep.mubr.f32.mxu0 0.0
  %2863 = vmatmul.mubr.f32.gmra.mrb[0].mxu0 %v2771
  %v2864 = vpop.f32.mrb[0].mxu0
  %v2865 = vadd.f32 %v2737, %v2864
  %v2866 = vpop.f32.mrb[0].mxu0
  %2867 = vmatprep.mubr.f32.mxu0 0.0
  %2868 = vmatmul.mubr.f32.gmra.mrb[0].mxu0 %v2774
  %v2869 = vpop.f32.mrb[0].mxu0
  %v2870 = vadd.f32 %v2742, %v2869
  %v2871 = vpop.f32.mrb[0].mxu0
  %2872 = vmatprep.mubr.f32.mxu0 0.0
  %2873 = vmatmul.mubr.f32.gmra.mrb[0].mxu0 %v2777
  %v2874 = vpop.f32.mrb[0].mxu0
  %v2875 = vadd.f32 %v2747, %v2874
  %v2876 = vpop.f32.mrb[0].mxu0
  %2877 = vmatprep.mubr.f32.mxu0 0.0
  %2878 = vmatmul.mubr.f32.gmra.mrb[0].mxu0 %v2780
  %v2879 = vpop.f32.mrb[0].mxu0
  %v2880 = vadd.f32 %v2752, %v2879
  %v2881 = vpop.f32.mrb[0].mxu0
  %2882 = vmatprep.mubr.f32.mxu0 0.0
  %2883 = vmatmul.mubr.f32.gmra.mrb[0].mxu0 %v2783
  %v2884 = vpop.f32.mrb[0].mxu0
  %v2885 = vadd.f32 %v2757, %v2884
  %v2886 = vpop.f32.mrb[0].mxu0
  %2887 = vmatprep.mubr.f32.mxu0 0.0
  %2888 = vmatmul.mubr.f32.gmra.mrb[0].mxu0 %v2786
  %v2889 = vpop.f32.mrb[0].mxu0
  %v2890 = vadd.f32 %v2762, %v2889
  %v2891 = vpop.f32.mrb[0].mxu0
  %2892 = vdwg.mxu0
  %v2893 = vadd.f32 %v2385, %v2855
  %v2894 = vadd.f32 %v2386, %v2860
  %v2895 = vadd.f32 %v2387, %v2865
  %v2896 = vadd.f32 %v2388, %v2870
  %v2897 = vadd.f32 %v2389, %v2875
  %v2898 = vadd.f32 %v2390, %v2880
  %v2899 = vadd.f32 %v2391, %v2885
  %v2900 = vadd.f32 %v2392, %v2890
  %2901 = vrot.lane.b32.xlu0 %v2893, 1
  %v2902 = vpop.permute.xlu0 %2901
  %2903 = vrot.lane.b32.xlu0 %v2894, 1
  %v2904 = vpop.permute.xlu0 %2903
  %2905 = vrot.lane.b32.xlu0 %v2895, 1
  %v2906 = vpop.permute.xlu0 %2905
  %2907 = vrot.lane.b32.xlu0 %v2896, 1
  %v2908 = vpop.permute.xlu0 %2907
  %v2909 = vsel %vm308, %v2902, 0.0
  %v2910 = vsel %vm308, %v2904, 0.0
  %v2911 = vsel %vm308, %v2906, 0.0
  %v2912 = vsel %vm308, %v2908, 0.0
  %2913 = vrot.lane.b32.xlu0 %v2893, 127
  %v2914 = vpop.permute.xlu0 %2913
  %2915 = vrot.lane.b32.xlu0 %v2894, 127
  %v2916 = vpop.permute.xlu0 %2915
  %2917 = vrot.lane.b32.xlu0 %v2895, 127
  %v2918 = vpop.permute.xlu0 %2917
  %2919 = vrot.lane.b32.xlu0 %v2896, 127
  %v2920 = vpop.permute.xlu0 %2919
  %v2921 = vsel %vm828, %v2914, 0.0
  %v2922 = vsel %vm828, %v2916, 0.0
  %v2923 = vsel %vm828, %v2918, 0.0
  %v2924 = vsel %vm828, %v2920, 0.0
  %s2925 = scalar_lea.vmem %s5, 320
  %v2926 = vld [vmem:[%s2925] sm:$0xff]
  %v2927 = vld [vmem:[%s2925 + $0x8] sm:$0xff]
  %v2928 = vld [vmem:[%s2925 + $0x10] sm:$0xff]
  %v2929 = vld [vmem:[%s2925 + $0x18] sm:$0xff]
  %v2930 = vld [vmem:[%s2925 + $0x20] sm:$0xff]
  %v2931 = vld [vmem:[%s2925 + $0x28] sm:$0xff]
  %v2932 = vld [vmem:[%s2925 + $0x30] sm:$0xff]
  %v2933 = vld [vmem:[%s2925 + $0x38] sm:$0xff]
  %s2934 = scalar_lea.vmem %s6, 320
  %v2935 = vld [vmem:[%s2934] sm:$0xff]
  %v2936 = vld [vmem:[%s2934 + $0x8] sm:$0xff]
  %v2937 = vld [vmem:[%s2934 + $0x10] sm:$0xff]
  %v2938 = vld [vmem:[%s2934 + $0x18] sm:$0xff]
  %v2939 = vld [vmem:[%s2934 + $0x20] sm:$0xff]
  %v2940 = vld [vmem:[%s2934 + $0x28] sm:$0xff]
  %v2941 = vld [vmem:[%s2934 + $0x30] sm:$0xff]
  %v2942 = vld [vmem:[%s2934 + $0x38] sm:$0xff]
  %2944 = vset.pattern.permute.xlu0 0
  %2945 = vperm.xlu0 %2944, %v2935
  %v2946 = vpop.permute.xlu0 %2945
  %2949 = vset.pattern.permute.xlu0 0
  %2950 = vperm.xlu0 %2949, %v2936
  %v2951 = vpop.permute.xlu0 %2950
  %2954 = vset.pattern.permute.xlu0 0
  %2955 = vperm.xlu0 %2954, %v2937
  %v2956 = vpop.permute.xlu0 %2955
  %2959 = vset.pattern.permute.xlu0 0
  %2960 = vperm.xlu0 %2959, %v2938
  %v2961 = vpop.permute.xlu0 %2960
  %2964 = vset.pattern.permute.xlu0 0
  %2965 = vperm.xlu0 %2964, %v2939
  %v2966 = vpop.permute.xlu0 %2965
  %2969 = vset.pattern.permute.xlu0 0
  %2970 = vperm.xlu0 %2969, %v2940
  %v2971 = vpop.permute.xlu0 %2970
  %2974 = vset.pattern.permute.xlu0 0
  %2975 = vperm.xlu0 %2974, %v2941
  %v2976 = vpop.permute.xlu0 %2975
  %2979 = vset.pattern.permute.xlu0 0
  %2980 = vperm.xlu0 %2979, %v2942
  %v2981 = vpop.permute.xlu0 %2980
  %v2984 = vsel %vm377, %v2926, 0
  %v2987 = vsel %vm377, %v2927, 0
  %v2990 = vsel %vm377, %v2928, 0
  %v2993 = vsel %vm377, %v2929, 0
  %v2996 = vsel %vm377, %v2930, 0
  %v2999 = vsel %vm377, %v2931, 0
  %v3002 = vsel %vm377, %v2932, 0
  %v3005 = vsel %vm377, %v2933, 0
  %3007 = vmatprep.subr.mxu0 0.0
  %3008 = vmatpush1.msra.mxu0 %v2909
  %3009 = vmatprep.subr.mxu0 0.0
  %3010 = vmatpush1.msra.mxu0 %v2910
  %3011 = vmatprep.subr.mxu0 0.0
  %3012 = vmatpush1.msra.mxu0 %v2911
  %3013 = vmatprep.subr.mxu0 0.0
  %3014 = vmatpush1.msra.mxu0 %v2912
  %3015 = vmatprep.subr.mxu0 0.0
  %3016 = vmatpush1.msra.mxu0 %v2921
  %3017 = vmatprep.subr.mxu0 0.0
  %3018 = vmatpush1.msra.mxu0 %v2922
  %3019 = vmatprep.subr.mxu0 0.0
  %3020 = vmatpush1.msra.mxu0 %v2923
  %3021 = vmatprep.subr.mxu0 0.0
  %3022 = vmatpush1.msra.mxu0 %v2924
  %3023 = vmatprep.subr.mxu0 0.0
  %3024 = vmatpush1.msra.mxu0 0.0
  %3025 = vmatprep.subr.mxu0 0.0
  %3026 = vmatpush1.msra.mxu0 0.0
  %3027 = vmatprep.subr.mxu0 0.0
  %3028 = vmatpush1.msra.mxu0 0.0
  %3029 = vmatprep.subr.mxu0 0.0
  %3030 = vmatpush1.msra.mxu0 0.0
  %3031 = vmatprep.subr.mxu0 0.0
  %3032 = vmatpush1.msra.mxu0 0.0
  %3033 = vmatprep.subr.mxu0 0.0
  %3034 = vmatpush1.msra.mxu0 0.0
  %3035 = vmatprep.subr.mxu0 0.0
  %3036 = vmatpush1.msra.mxu0 0.0
  %3037 = vmatprep.subr.mxu0 0.0
  %3038 = vmatpush1.msra.mxu0 0.0
  %3039 = vmatprep.subr.mxu0 0.0
  %3040 = vmatpush1.msra.mxu0 0.0
  %3041 = vmatprep.subr.mxu0 0.0
  %3042 = vmatpush1.msra.mxu0 0.0
  %3043 = vmatprep.subr.mxu0 0.0
  %3044 = vmatpush1.msra.mxu0 0.0
  %3045 = vmatprep.subr.mxu0 0.0
  %3046 = vmatpush1.msra.mxu0 0.0
  %3047 = vmatprep.subr.mxu0 0.0
  %3048 = vmatpush1.msra.mxu0 0.0
  %3049 = vmatprep.subr.mxu0 0.0
  %3050 = vmatpush1.msra.mxu0 0.0
  %3051 = vmatprep.subr.mxu0 0.0
  %3052 = vmatpush1.msra.mxu0 0.0
  %3053 = vmatprep.subr.mxu0 0.0
  %3054 = vmatpush1.msra.mxu0 0.0
  %3055 = vmatprep.subr.mxu0 0.0
  %3056 = vmatpush1.msra.mxu0 0.0
  %3057 = vmatprep.subr.mxu0 0.0
  %3058 = vmatpush1.msra.mxu0 0.0
  %3059 = vmatprep.subr.mxu0 0.0
  %3060 = vmatpush1.msra.mxu0 0.0
  %3061 = vmatprep.subr.mxu0 0.0
  %3062 = vmatpush1.msra.mxu0 0.0
  %3063 = vmatprep.subr.mxu0 0.0
  %3064 = vmatpush1.msra.mxu0 0.0
  %3065 = vmatprep.subr.mxu0 0.0
  %3066 = vmatpush1.msra.mxu0 0.0
  %3067 = vmatprep.subr.mxu0 0.0
  %3068 = vmatpush1.msra.mxu0 0.0
  %3069 = vmatprep.subr.mxu0 0.0
  %3070 = vmatpush1.msra.mxu0 0.0
  %3071 = vmatprep.mubr.f32.mxu0 0.0
  %3072 = vmatmul.mubr.f32.gmra.mrb[0].mxu0 %v2984
  %v3073 = vpop.f32.mrb[0].mxu0
  %v3074 = vadd.f32 %v2946, %v3073
  %v3075 = vpop.f32.mrb[0].mxu0
  %3076 = vmatprep.mubr.f32.mxu0 0.0
  %3077 = vmatmul.mubr.f32.gmra.mrb[0].mxu0 %v2987
  %v3078 = vpop.f32.mrb[0].mxu0
  %v3079 = vadd.f32 %v2951, %v3078
  %v3080 = vpop.f32.mrb[0].mxu0
  %3081 = vmatprep.mubr.f32.mxu0 0.0
  %3082 = vmatmul.mubr.f32.gmra.mrb[0].mxu0 %v2990
  %v3083 = vpop.f32.mrb[0].mxu0
  %v3084 = vadd.f32 %v2956, %v3083
  %v3085 = vpop.f32.mrb[0].mxu0
  %3086 = vmatprep.mubr.f32.mxu0 0.0
  %3087 = vmatmul.mubr.f32.gmra.mrb[0].mxu0 %v2993
  %v3088 = vpop.f32.mrb[0].mxu0
  %v3089 = vadd.f32 %v2961, %v3088
  %v3090 = vpop.f32.mrb[0].mxu0
  %3091 = vmatprep.mubr.f32.mxu0 0.0
  %3092 = vmatmul.mubr.f32.gmra.mrb[0].mxu0 %v2996
  %v3093 = vpop.f32.mrb[0].mxu0
  %v3094 = vadd.f32 %v2966, %v3093
  %v3095 = vpop.f32.mrb[0].mxu0
  %3096 = vmatprep.mubr.f32.mxu0 0.0
  %3097 = vmatmul.mubr.f32.gmra.mrb[0].mxu0 %v2999
  %v3098 = vpop.f32.mrb[0].mxu0
  %v3099 = vadd.f32 %v2971, %v3098
  %v3100 = vpop.f32.mrb[0].mxu0
  %3101 = vmatprep.mubr.f32.mxu0 0.0
  %3102 = vmatmul.mubr.f32.gmra.mrb[0].mxu0 %v3002
  %v3103 = vpop.f32.mrb[0].mxu0
  %v3104 = vadd.f32 %v2976, %v3103
  %v3105 = vpop.f32.mrb[0].mxu0
  %3106 = vmatprep.mubr.f32.mxu0 0.0
  %3107 = vmatmul.mubr.f32.gmra.mrb[0].mxu0 %v3005
  %v3108 = vpop.f32.mrb[0].mxu0
  %v3109 = vadd.f32 %v2981, %v3108
  %v3110 = vpop.f32.mrb[0].mxu0
  %3111 = vdwg.mxu0
  %v3112 = vmul.f32 %v3074, %v3094
  %v3113 = vmul.f32 %v3079, %v3099
  %v3114 = vmul.f32 %v3084, %v3104
  %v3115 = vmul.f32 %v3089, %v3109
  %s3116 = scalar_lea.vmem %s7, 160
  %v3117 = vld [vmem:[%s3116] sm:$0xff]
  %v3118 = vld [vmem:[%s3116 + $0x8] sm:$0xff]
  %v3119 = vld [vmem:[%s3116 + $0x10] sm:$0xff]
  %v3120 = vld [vmem:[%s3116 + $0x18] sm:$0xff]
  %s3121 = scalar_lea.vmem %s8, 160
  %v3122 = vld [vmem:[%s3121] sm:$0xff]
  %v3123 = vld [vmem:[%s3121 + $0x8] sm:$0xff]
  %v3124 = vld [vmem:[%s3121 + $0x10] sm:$0xff]
  %v3125 = vld [vmem:[%s3121 + $0x18] sm:$0xff]
  %3126 = vadd.xlane.f32.xlu0 %v3112
  %v3127 = vpop.xlane.xlu0 %3126
  %3128 = vadd.xlane.f32.xlu0 %v3113
  %v3129 = vpop.xlane.xlu0 %3128
  %3130 = vadd.xlane.f32.xlu0 %v3114
  %v3131 = vpop.xlane.xlu0 %3130
  %3132 = vadd.xlane.f32.xlu0 %v3115
  %v3133 = vpop.xlane.xlu0 %3132
  %v3134 = vmul.f32 %v3127, %v212
  %v3135 = vmul.f32 %v3129, %v212
  %v3136 = vmul.f32 %v3131, %v212
  %v3137 = vmul.f32 %v3133, %v212
  %v3138 = vmul.f32 %v3112, %v3112
  %v3139 = vmul.f32 %v3113, %v3113
  %v3140 = vmul.f32 %v3114, %v3114
  %v3141 = vmul.f32 %v3115, %v3115
  %3142 = vadd.xlane.f32.xlu0 %v3138
  %v3143 = vpop.xlane.xlu0 %3142
  %3144 = vadd.xlane.f32.xlu0 %v3139
  %v3145 = vpop.xlane.xlu0 %3144
  %3146 = vadd.xlane.f32.xlu0 %v3140
  %v3147 = vpop.xlane.xlu0 %3146
  %3148 = vadd.xlane.f32.xlu0 %v3141
  %v3149 = vpop.xlane.xlu0 %3148
  %v3150 = vmul.f32 %v3143, %v212
  %v3151 = vmul.f32 %v3145, %v212
  %v3152 = vmul.f32 %v3147, %v212
  %v3153 = vmul.f32 %v3149, %v212
  %v3154 = vmul.f32 %v3134, %v3134
  %v3155 = vmul.f32 %v3135, %v3135
  %v3156 = vmul.f32 %v3136, %v3136
  %v3157 = vmul.f32 %v3137, %v3137
  %v3158 = vsub.f32 %v3150, %v3154
  %v3159 = vsub.f32 %v3151, %v3155
  %v3160 = vsub.f32 %v3152, %v3156
  %v3161 = vsub.f32 %v3153, %v3157
  %v3162 = vadd.f32 %v3158, 1e-05
  %v3163 = vadd.f32 %v3159, 1e-05
  %v3164 = vadd.f32 %v3160, 1e-05
  %v3165 = vadd.f32 %v3161, 1e-05
  %v3166 = vrsqrt.pop %v3162
  %v3167 = vrsqrt.pop %v3163
  %v3168 = vrsqrt.pop %v3164
  %v3169 = vrsqrt.pop %v3165
  %v3170 = vmul.f32 %v3166, %v3117
  %v3171 = vmul.f32 %v3167, %v3118
  %v3172 = vmul.f32 %v3168, %v3119
  %v3173 = vmul.f32 %v3169, %v3120
  %v3174 = vsub.f32 %v3112, %v3134
  %v3175 = vsub.f32 %v3113, %v3135
  %v3176 = vsub.f32 %v3114, %v3136
  %v3177 = vsub.f32 %v3115, %v3137
  %3179 = vset.pattern.permute.xlu0 0
  %3180 = vperm.xlu0 %3179, %v3170
  %v3181 = vpop.permute.xlu0 %3180
  %3184 = vset.pattern.permute.xlu0 0
  %3185 = vperm.xlu0 %3184, %v3171
  %v3186 = vpop.permute.xlu0 %3185
  %3189 = vset.pattern.permute.xlu0 0
  %3190 = vperm.xlu0 %3189, %v3172
  %v3191 = vpop.permute.xlu0 %3190
  %3194 = vset.pattern.permute.xlu0 0
  %3195 = vperm.xlu0 %3194, %v3173
  %v3196 = vpop.permute.xlu0 %3195
  %v3198 = vmul.f32 %v3174, %v3181
  %v3199 = vmul.f32 %v3175, %v3186
  %v3200 = vmul.f32 %v3176, %v3191
  %v3201 = vmul.f32 %v3177, %v3196
  %3203 = vset.pattern.permute.xlu0 0
  %3204 = vperm.xlu0 %3203, %v3122
  %v3205 = vpop.permute.xlu0 %3204
  %3208 = vset.pattern.permute.xlu0 0
  %3209 = vperm.xlu0 %3208, %v3123
  %v3210 = vpop.permute.xlu0 %3209
  %3213 = vset.pattern.permute.xlu0 0
  %3214 = vperm.xlu0 %3213, %v3124
  %v3215 = vpop.permute.xlu0 %3214
  %3218 = vset.pattern.permute.xlu0 0
  %3219 = vperm.xlu0 %3218, %v3125
  %v3220 = vpop.permute.xlu0 %3219
  %v3222 = vadd.f32 %v3198, %v3205
  %v3223 = vadd.f32 %v3199, %v3210
  %v3224 = vadd.f32 %v3200, %v3215
  %v3225 = vadd.f32 %v3201, %v3220
  %s3226 = scalar_lea.vmem %s9, 320
  %v3227 = vld [vmem:[%s3226] sm:$0xff]
  %v3228 = vld [vmem:[%s3226 + $0x8] sm:$0xff]
  %v3229 = vld [vmem:[%s3226 + $0x10] sm:$0xff]
  %v3230 = vld [vmem:[%s3226 + $0x18] sm:$0xff]
  %v3231 = vld [vmem:[%s3226 + $0x20] sm:$0xff]
  %v3232 = vld [vmem:[%s3226 + $0x28] sm:$0xff]
  %v3233 = vld [vmem:[%s3226 + $0x30] sm:$0xff]
  %v3234 = vld [vmem:[%s3226 + $0x38] sm:$0xff]
  %s3235 = scalar_lea.vmem %s10, 320
  %v3236 = vld [vmem:[%s3235] sm:$0xff]
  %v3237 = vld [vmem:[%s3235 + $0x8] sm:$0xff]
  %v3238 = vld [vmem:[%s3235 + $0x10] sm:$0xff]
  %v3239 = vld [vmem:[%s3235 + $0x18] sm:$0xff]
  %v3240 = vld [vmem:[%s3235 + $0x20] sm:$0xff]
  %v3241 = vld [vmem:[%s3235 + $0x28] sm:$0xff]
  %v3242 = vld [vmem:[%s3235 + $0x30] sm:$0xff]
  %v3243 = vld [vmem:[%s3235 + $0x38] sm:$0xff]
  %3245 = vset.pattern.permute.xlu0 0
  %3246 = vperm.xlu0 %3245, %v3236
  %v3247 = vpop.permute.xlu0 %3246
  %3250 = vset.pattern.permute.xlu0 0
  %3251 = vperm.xlu0 %3250, %v3237
  %v3252 = vpop.permute.xlu0 %3251
  %3255 = vset.pattern.permute.xlu0 0
  %3256 = vperm.xlu0 %3255, %v3238
  %v3257 = vpop.permute.xlu0 %3256
  %3260 = vset.pattern.permute.xlu0 0
  %3261 = vperm.xlu0 %3260, %v3239
  %v3262 = vpop.permute.xlu0 %3261
  %3265 = vset.pattern.permute.xlu0 0
  %3266 = vperm.xlu0 %3265, %v3240
  %v3267 = vpop.permute.xlu0 %3266
  %3270 = vset.pattern.permute.xlu0 0
  %3271 = vperm.xlu0 %3270, %v3241
  %v3272 = vpop.permute.xlu0 %3271
  %3275 = vset.pattern.permute.xlu0 0
  %3276 = vperm.xlu0 %3275, %v3242
  %v3277 = vpop.permute.xlu0 %3276
  %3280 = vset.pattern.permute.xlu0 0
  %3281 = vperm.xlu0 %3280, %v3243
  %v3282 = vpop.permute.xlu0 %3281
  %v3285 = vsel %vm675, %v3227, 0
  %v3288 = vsel %vm675, %v3228, 0
  %v3291 = vsel %vm675, %v3229, 0
  %v3294 = vsel %vm675, %v3230, 0
  %v3297 = vsel %vm675, %v3231, 0
  %v3300 = vsel %vm675, %v3232, 0
  %v3303 = vsel %vm675, %v3233, 0
  %v3306 = vsel %vm675, %v3234, 0
  %3308 = vmatprep.subr.mxu0 0.0
  %3309 = vmatpush1.msra.mxu0 %v3222
  %3310 = vmatprep.subr.mxu0 0.0
  %3311 = vmatpush1.msra.mxu0 %v3223
  %3312 = vmatprep.subr.mxu0 0.0
  %3313 = vmatpush1.msra.mxu0 %v3224
  %3314 = vmatprep.subr.mxu0 0.0
  %3315 = vmatpush1.msra.mxu0 %v3225
  %3316 = vmatprep.subr.mxu0 0.0
  %3317 = vmatpush1.msra.mxu0 0.0
  %3318 = vmatprep.subr.mxu0 0.0
  %3319 = vmatpush1.msra.mxu0 0.0
  %3320 = vmatprep.subr.mxu0 0.0
  %3321 = vmatpush1.msra.mxu0 0.0
  %3322 = vmatprep.subr.mxu0 0.0
  %3323 = vmatpush1.msra.mxu0 0.0
  %3324 = vmatprep.subr.mxu0 0.0
  %3325 = vmatpush1.msra.mxu0 0.0
  %3326 = vmatprep.subr.mxu0 0.0
  %3327 = vmatpush1.msra.mxu0 0.0
  %3328 = vmatprep.subr.mxu0 0.0
  %3329 = vmatpush1.msra.mxu0 0.0
  %3330 = vmatprep.subr.mxu0 0.0
  %3331 = vmatpush1.msra.mxu0 0.0
  %3332 = vmatprep.subr.mxu0 0.0
  %3333 = vmatpush1.msra.mxu0 0.0
  %3334 = vmatprep.subr.mxu0 0.0
  %3335 = vmatpush1.msra.mxu0 0.0
  %3336 = vmatprep.subr.mxu0 0.0
  %3337 = vmatpush1.msra.mxu0 0.0
  %3338 = vmatprep.subr.mxu0 0.0
  %3339 = vmatpush1.msra.mxu0 0.0
  %3340 = vmatprep.subr.mxu0 0.0
  %3341 = vmatpush1.msra.mxu0 0.0
  %3342 = vmatprep.subr.mxu0 0.0
  %3343 = vmatpush1.msra.mxu0 0.0
  %3344 = vmatprep.subr.mxu0 0.0
  %3345 = vmatpush1.msra.mxu0 0.0
  %3346 = vmatprep.subr.mxu0 0.0
  %3347 = vmatpush1.msra.mxu0 0.0
  %3348 = vmatprep.subr.mxu0 0.0
  %3349 = vmatpush1.msra.mxu0 0.0
  %3350 = vmatprep.subr.mxu0 0.0
  %3351 = vmatpush1.msra.mxu0 0.0
  %3352 = vmatprep.subr.mxu0 0.0
  %3353 = vmatpush1.msra.mxu0 0.0
  %3354 = vmatprep.subr.mxu0 0.0
  %3355 = vmatpush1.msra.mxu0 0.0
  %3356 = vmatprep.subr.mxu0 0.0
  %3357 = vmatpush1.msra.mxu0 0.0
  %3358 = vmatprep.subr.mxu0 0.0
  %3359 = vmatpush1.msra.mxu0 0.0
  %3360 = vmatprep.subr.mxu0 0.0
  %3361 = vmatpush1.msra.mxu0 0.0
  %3362 = vmatprep.subr.mxu0 0.0
  %3363 = vmatpush1.msra.mxu0 0.0
  %3364 = vmatprep.subr.mxu0 0.0
  %3365 = vmatpush1.msra.mxu0 0.0
  %3366 = vmatprep.subr.mxu0 0.0
  %3367 = vmatpush1.msra.mxu0 0.0
  %3368 = vmatprep.subr.mxu0 0.0
  %3369 = vmatpush1.msra.mxu0 0.0
  %3370 = vmatprep.subr.mxu0 0.0
  %3371 = vmatpush1.msra.mxu0 0.0
  %3372 = vmatprep.mubr.f32.mxu0 0.0
  %3373 = vmatmul.mubr.f32.gmra.mrb[0].mxu0 %v3285
  %v3374 = vpop.f32.mrb[0].mxu0
  %v3375 = vadd.f32 %v3247, %v3374
  %v3376 = vpop.f32.mrb[0].mxu0
  %3377 = vmatprep.mubr.f32.mxu0 0.0
  %3378 = vmatmul.mubr.f32.gmra.mrb[0].mxu0 %v3288
  %v3379 = vpop.f32.mrb[0].mxu0
  %v3380 = vadd.f32 %v3252, %v3379
  %v3381 = vpop.f32.mrb[0].mxu0
  %3382 = vmatprep.mubr.f32.mxu0 0.0
  %3383 = vmatmul.mubr.f32.gmra.mrb[0].mxu0 %v3291
  %v3384 = vpop.f32.mrb[0].mxu0
  %v3385 = vadd.f32 %v3257, %v3384
  %v3386 = vpop.f32.mrb[0].mxu0
  %3387 = vmatprep.mubr.f32.mxu0 0.0
  %3388 = vmatmul.mubr.f32.gmra.mrb[0].mxu0 %v3294
  %v3389 = vpop.f32.mrb[0].mxu0
  %v3390 = vadd.f32 %v3262, %v3389
  %v3391 = vpop.f32.mrb[0].mxu0
  %3392 = vmatprep.mubr.f32.mxu0 0.0
  %3393 = vmatmul.mubr.f32.gmra.mrb[0].mxu0 %v3297
  %v3394 = vpop.f32.mrb[0].mxu0
  %v3395 = vadd.f32 %v3267, %v3394
  %v3396 = vpop.f32.mrb[0].mxu0
  %3397 = vmatprep.mubr.f32.mxu0 0.0
  %3398 = vmatmul.mubr.f32.gmra.mrb[0].mxu0 %v3300
  %v3399 = vpop.f32.mrb[0].mxu0
  %v3400 = vadd.f32 %v3272, %v3399
  %v3401 = vpop.f32.mrb[0].mxu0
  %3402 = vmatprep.mubr.f32.mxu0 0.0
  %3403 = vmatmul.mubr.f32.gmra.mrb[0].mxu0 %v3303
  %v3404 = vpop.f32.mrb[0].mxu0
  %v3405 = vadd.f32 %v3277, %v3404
  %v3406 = vpop.f32.mrb[0].mxu0
  %3407 = vmatprep.mubr.f32.mxu0 0.0
  %3408 = vmatmul.mubr.f32.gmra.mrb[0].mxu0 %v3306
  %v3409 = vpop.f32.mrb[0].mxu0
  %v3410 = vadd.f32 %v3282, %v3409
  %v3411 = vpop.f32.mrb[0].mxu0
  %3412 = vdwg.mxu0
  %v3413 = vadd.f32 %v2893, %v3375
  %v3414 = vadd.f32 %v2894, %v3380
  %v3415 = vadd.f32 %v2895, %v3385
  %v3416 = vadd.f32 %v2896, %v3390
  %v3417 = vadd.f32 %v2897, %v3395
  %v3418 = vadd.f32 %v2898, %v3400
  %v3419 = vadd.f32 %v2899, %v3405
  %v3420 = vadd.f32 %v2900, %v3410
  %3421 = vrot.lane.b32.xlu0 %v3413, 2
  %v3422 = vpop.permute.xlu0 %3421
  %3423 = vrot.lane.b32.xlu0 %v3414, 2
  %v3424 = vpop.permute.xlu0 %3423
  %3425 = vrot.lane.b32.xlu0 %v3415, 2
  %v3426 = vpop.permute.xlu0 %3425
  %3427 = vrot.lane.b32.xlu0 %v3416, 2
  %v3428 = vpop.permute.xlu0 %3427
  %v3429 = vsel %vm1340, %v3422, 0.0
  %v3430 = vsel %vm1340, %v3424, 0.0
  %v3431 = vsel %vm1340, %v3426, 0.0
  %v3432 = vsel %vm1340, %v3428, 0.0
  %3433 = vrot.lane.b32.xlu0 %v3413, 126
  %v3434 = vpop.permute.xlu0 %3433
  %3435 = vrot.lane.b32.xlu0 %v3414, 126
  %v3436 = vpop.permute.xlu0 %3435
  %3437 = vrot.lane.b32.xlu0 %v3415, 126
  %v3438 = vpop.permute.xlu0 %3437
  %3439 = vrot.lane.b32.xlu0 %v3416, 126
  %v3440 = vpop.permute.xlu0 %3439
  %v3441 = vsel %vm1356, %v3434, 0.0
  %v3442 = vsel %vm1356, %v3436, 0.0
  %v3443 = vsel %vm1356, %v3438, 0.0
  %v3444 = vsel %vm1356, %v3440, 0.0
  %s3445 = scalar_lea.vmem %s5, 384
  %v3446 = vld [vmem:[%s3445] sm:$0xff]
  %v3447 = vld [vmem:[%s3445 + $0x8] sm:$0xff]
  %v3448 = vld [vmem:[%s3445 + $0x10] sm:$0xff]
  %v3449 = vld [vmem:[%s3445 + $0x18] sm:$0xff]
  %v3450 = vld [vmem:[%s3445 + $0x20] sm:$0xff]
  %v3451 = vld [vmem:[%s3445 + $0x28] sm:$0xff]
  %v3452 = vld [vmem:[%s3445 + $0x30] sm:$0xff]
  %v3453 = vld [vmem:[%s3445 + $0x38] sm:$0xff]
  %s3454 = scalar_lea.vmem %s6, 384
  %v3455 = vld [vmem:[%s3454] sm:$0xff]
  %v3456 = vld [vmem:[%s3454 + $0x8] sm:$0xff]
  %v3457 = vld [vmem:[%s3454 + $0x10] sm:$0xff]
  %v3458 = vld [vmem:[%s3454 + $0x18] sm:$0xff]
  %v3459 = vld [vmem:[%s3454 + $0x20] sm:$0xff]
  %v3460 = vld [vmem:[%s3454 + $0x28] sm:$0xff]
  %v3461 = vld [vmem:[%s3454 + $0x30] sm:$0xff]
  %v3462 = vld [vmem:[%s3454 + $0x38] sm:$0xff]
  %3464 = vset.pattern.permute.xlu0 0
  %3465 = vperm.xlu0 %3464, %v3455
  %v3466 = vpop.permute.xlu0 %3465
  %3469 = vset.pattern.permute.xlu0 0
  %3470 = vperm.xlu0 %3469, %v3456
  %v3471 = vpop.permute.xlu0 %3470
  %3474 = vset.pattern.permute.xlu0 0
  %3475 = vperm.xlu0 %3474, %v3457
  %v3476 = vpop.permute.xlu0 %3475
  %3479 = vset.pattern.permute.xlu0 0
  %3480 = vperm.xlu0 %3479, %v3458
  %v3481 = vpop.permute.xlu0 %3480
  %3484 = vset.pattern.permute.xlu0 0
  %3485 = vperm.xlu0 %3484, %v3459
  %v3486 = vpop.permute.xlu0 %3485
  %3489 = vset.pattern.permute.xlu0 0
  %3490 = vperm.xlu0 %3489, %v3460
  %v3491 = vpop.permute.xlu0 %3490
  %3494 = vset.pattern.permute.xlu0 0
  %3495 = vperm.xlu0 %3494, %v3461
  %v3496 = vpop.permute.xlu0 %3495
  %3499 = vset.pattern.permute.xlu0 0
  %3500 = vperm.xlu0 %3499, %v3462
  %v3501 = vpop.permute.xlu0 %3500
  %v3504 = vsel %vm377, %v3446, 0
  %v3507 = vsel %vm377, %v3447, 0
  %v3510 = vsel %vm377, %v3448, 0
  %v3513 = vsel %vm377, %v3449, 0
  %v3516 = vsel %vm377, %v3450, 0
  %v3519 = vsel %vm377, %v3451, 0
  %v3522 = vsel %vm377, %v3452, 0
  %v3525 = vsel %vm377, %v3453, 0
  %3527 = vmatprep.subr.mxu0 0.0
  %3528 = vmatpush1.msra.mxu0 %v3429
  %3529 = vmatprep.subr.mxu0 0.0
  %3530 = vmatpush1.msra.mxu0 %v3430
  %3531 = vmatprep.subr.mxu0 0.0
  %3532 = vmatpush1.msra.mxu0 %v3431
  %3533 = vmatprep.subr.mxu0 0.0
  %3534 = vmatpush1.msra.mxu0 %v3432
  %3535 = vmatprep.subr.mxu0 0.0
  %3536 = vmatpush1.msra.mxu0 %v3441
  %3537 = vmatprep.subr.mxu0 0.0
  %3538 = vmatpush1.msra.mxu0 %v3442
  %3539 = vmatprep.subr.mxu0 0.0
  %3540 = vmatpush1.msra.mxu0 %v3443
  %3541 = vmatprep.subr.mxu0 0.0
  %3542 = vmatpush1.msra.mxu0 %v3444
  %3543 = vmatprep.subr.mxu0 0.0
  %3544 = vmatpush1.msra.mxu0 0.0
  %3545 = vmatprep.subr.mxu0 0.0
  %3546 = vmatpush1.msra.mxu0 0.0
  %3547 = vmatprep.subr.mxu0 0.0
  %3548 = vmatpush1.msra.mxu0 0.0
  %3549 = vmatprep.subr.mxu0 0.0
  %3550 = vmatpush1.msra.mxu0 0.0
  %3551 = vmatprep.subr.mxu0 0.0
  %3552 = vmatpush1.msra.mxu0 0.0
  %3553 = vmatprep.subr.mxu0 0.0
  %3554 = vmatpush1.msra.mxu0 0.0
  %3555 = vmatprep.subr.mxu0 0.0
  %3556 = vmatpush1.msra.mxu0 0.0
  %3557 = vmatprep.subr.mxu0 0.0
  %3558 = vmatpush1.msra.mxu0 0.0
  %3559 = vmatprep.subr.mxu0 0.0
  %3560 = vmatpush1.msra.mxu0 0.0
  %3561 = vmatprep.subr.mxu0 0.0
  %3562 = vmatpush1.msra.mxu0 0.0
  %3563 = vmatprep.subr.mxu0 0.0
  %3564 = vmatpush1.msra.mxu0 0.0
  %3565 = vmatprep.subr.mxu0 0.0
  %3566 = vmatpush1.msra.mxu0 0.0
  %3567 = vmatprep.subr.mxu0 0.0
  %3568 = vmatpush1.msra.mxu0 0.0
  %3569 = vmatprep.subr.mxu0 0.0
  %3570 = vmatpush1.msra.mxu0 0.0
  %3571 = vmatprep.subr.mxu0 0.0
  %3572 = vmatpush1.msra.mxu0 0.0
  %3573 = vmatprep.subr.mxu0 0.0
  %3574 = vmatpush1.msra.mxu0 0.0
  %3575 = vmatprep.subr.mxu0 0.0
  %3576 = vmatpush1.msra.mxu0 0.0
  %3577 = vmatprep.subr.mxu0 0.0
  %3578 = vmatpush1.msra.mxu0 0.0
  %3579 = vmatprep.subr.mxu0 0.0
  %3580 = vmatpush1.msra.mxu0 0.0
  %3581 = vmatprep.subr.mxu0 0.0
  %3582 = vmatpush1.msra.mxu0 0.0
  %3583 = vmatprep.subr.mxu0 0.0
  %3584 = vmatpush1.msra.mxu0 0.0
  %3585 = vmatprep.subr.mxu0 0.0
  %3586 = vmatpush1.msra.mxu0 0.0
  %3587 = vmatprep.subr.mxu0 0.0
  %3588 = vmatpush1.msra.mxu0 0.0
  %3589 = vmatprep.subr.mxu0 0.0
  %3590 = vmatpush1.msra.mxu0 0.0
  %3591 = vmatprep.mubr.f32.mxu0 0.0
  %3592 = vmatmul.mubr.f32.gmra.mrb[0].mxu0 %v3504
  %v3593 = vpop.f32.mrb[0].mxu0
  %v3594 = vadd.f32 %v3466, %v3593
  %v3595 = vpop.f32.mrb[0].mxu0
  %3596 = vmatprep.mubr.f32.mxu0 0.0
  %3597 = vmatmul.mubr.f32.gmra.mrb[0].mxu0 %v3507
  %v3598 = vpop.f32.mrb[0].mxu0
  %v3599 = vadd.f32 %v3471, %v3598
  %v3600 = vpop.f32.mrb[0].mxu0
  %3601 = vmatprep.mubr.f32.mxu0 0.0
  %3602 = vmatmul.mubr.f32.gmra.mrb[0].mxu0 %v3510
  %v3603 = vpop.f32.mrb[0].mxu0
  %v3604 = vadd.f32 %v3476, %v3603
  %v3605 = vpop.f32.mrb[0].mxu0
  %3606 = vmatprep.mubr.f32.mxu0 0.0
  %3607 = vmatmul.mubr.f32.gmra.mrb[0].mxu0 %v3513
  %v3608 = vpop.f32.mrb[0].mxu0
  %v3609 = vadd.f32 %v3481, %v3608
  %v3610 = vpop.f32.mrb[0].mxu0
  %3611 = vmatprep.mubr.f32.mxu0 0.0
  %3612 = vmatmul.mubr.f32.gmra.mrb[0].mxu0 %v3516
  %v3613 = vpop.f32.mrb[0].mxu0
  %v3614 = vadd.f32 %v3486, %v3613
  %v3615 = vpop.f32.mrb[0].mxu0
  %3616 = vmatprep.mubr.f32.mxu0 0.0
  %3617 = vmatmul.mubr.f32.gmra.mrb[0].mxu0 %v3519
  %v3618 = vpop.f32.mrb[0].mxu0
  %v3619 = vadd.f32 %v3491, %v3618
  %v3620 = vpop.f32.mrb[0].mxu0
  %3621 = vmatprep.mubr.f32.mxu0 0.0
  %3622 = vmatmul.mubr.f32.gmra.mrb[0].mxu0 %v3522
  %v3623 = vpop.f32.mrb[0].mxu0
  %v3624 = vadd.f32 %v3496, %v3623
  %v3625 = vpop.f32.mrb[0].mxu0
  %3626 = vmatprep.mubr.f32.mxu0 0.0
  %3627 = vmatmul.mubr.f32.gmra.mrb[0].mxu0 %v3525
  %v3628 = vpop.f32.mrb[0].mxu0
  %v3629 = vadd.f32 %v3501, %v3628
  %v3630 = vpop.f32.mrb[0].mxu0
  %3631 = vdwg.mxu0
  %v3632 = vmul.f32 %v3594, %v3614
  %v3633 = vmul.f32 %v3599, %v3619
  %v3634 = vmul.f32 %v3604, %v3624
  %v3635 = vmul.f32 %v3609, %v3629
  %s3636 = scalar_lea.vmem %s7, 192
  %v3637 = vld [vmem:[%s3636] sm:$0xff]
  %v3638 = vld [vmem:[%s3636 + $0x8] sm:$0xff]
  %v3639 = vld [vmem:[%s3636 + $0x10] sm:$0xff]
  %v3640 = vld [vmem:[%s3636 + $0x18] sm:$0xff]
  %s3641 = scalar_lea.vmem %s8, 192
  %v3642 = vld [vmem:[%s3641] sm:$0xff]
  %v3643 = vld [vmem:[%s3641 + $0x8] sm:$0xff]
  %v3644 = vld [vmem:[%s3641 + $0x10] sm:$0xff]
  %v3645 = vld [vmem:[%s3641 + $0x18] sm:$0xff]
  %3646 = vadd.xlane.f32.xlu0 %v3632
  %v3647 = vpop.xlane.xlu0 %3646
  %3648 = vadd.xlane.f32.xlu0 %v3633
  %v3649 = vpop.xlane.xlu0 %3648
  %3650 = vadd.xlane.f32.xlu0 %v3634
  %v3651 = vpop.xlane.xlu0 %3650
  %3652 = vadd.xlane.f32.xlu0 %v3635
  %v3653 = vpop.xlane.xlu0 %3652
  %v3654 = vmul.f32 %v3647, %v212
  %v3655 = vmul.f32 %v3649, %v212
  %v3656 = vmul.f32 %v3651, %v212
  %v3657 = vmul.f32 %v3653, %v212
  %v3658 = vmul.f32 %v3632, %v3632
  %v3659 = vmul.f32 %v3633, %v3633
  %v3660 = vmul.f32 %v3634, %v3634
  %v3661 = vmul.f32 %v3635, %v3635
  %3662 = vadd.xlane.f32.xlu0 %v3658
  %v3663 = vpop.xlane.xlu0 %3662
  %3664 = vadd.xlane.f32.xlu0 %v3659
  %v3665 = vpop.xlane.xlu0 %3664
  %3666 = vadd.xlane.f32.xlu0 %v3660
  %v3667 = vpop.xlane.xlu0 %3666
  %3668 = vadd.xlane.f32.xlu0 %v3661
  %v3669 = vpop.xlane.xlu0 %3668
  %v3670 = vmul.f32 %v3663, %v212
  %v3671 = vmul.f32 %v3665, %v212
  %v3672 = vmul.f32 %v3667, %v212
  %v3673 = vmul.f32 %v3669, %v212
  %v3674 = vmul.f32 %v3654, %v3654
  %v3675 = vmul.f32 %v3655, %v3655
  %v3676 = vmul.f32 %v3656, %v3656
  %v3677 = vmul.f32 %v3657, %v3657
  %v3678 = vsub.f32 %v3670, %v3674
  %v3679 = vsub.f32 %v3671, %v3675
  %v3680 = vsub.f32 %v3672, %v3676
  %v3681 = vsub.f32 %v3673, %v3677
  %v3682 = vadd.f32 %v3678, 1e-05
  %v3683 = vadd.f32 %v3679, 1e-05
  %v3684 = vadd.f32 %v3680, 1e-05
  %v3685 = vadd.f32 %v3681, 1e-05
  %v3686 = vrsqrt.pop %v3682
  %v3687 = vrsqrt.pop %v3683
  %v3688 = vrsqrt.pop %v3684
  %v3689 = vrsqrt.pop %v3685
  %v3690 = vmul.f32 %v3686, %v3637
  %v3691 = vmul.f32 %v3687, %v3638
  %v3692 = vmul.f32 %v3688, %v3639
  %v3693 = vmul.f32 %v3689, %v3640
  %v3694 = vsub.f32 %v3632, %v3654
  %v3695 = vsub.f32 %v3633, %v3655
  %v3696 = vsub.f32 %v3634, %v3656
  %v3697 = vsub.f32 %v3635, %v3657
  %3699 = vset.pattern.permute.xlu0 0
  %3700 = vperm.xlu0 %3699, %v3690
  %v3701 = vpop.permute.xlu0 %3700
  %3704 = vset.pattern.permute.xlu0 0
  %3705 = vperm.xlu0 %3704, %v3691
  %v3706 = vpop.permute.xlu0 %3705
  %3709 = vset.pattern.permute.xlu0 0
  %3710 = vperm.xlu0 %3709, %v3692
  %v3711 = vpop.permute.xlu0 %3710
  %3714 = vset.pattern.permute.xlu0 0
  %3715 = vperm.xlu0 %3714, %v3693
  %v3716 = vpop.permute.xlu0 %3715
  %v3718 = vmul.f32 %v3694, %v3701
  %v3719 = vmul.f32 %v3695, %v3706
  %v3720 = vmul.f32 %v3696, %v3711
  %v3721 = vmul.f32 %v3697, %v3716
  %3723 = vset.pattern.permute.xlu0 0
  %3724 = vperm.xlu0 %3723, %v3642
  %v3725 = vpop.permute.xlu0 %3724
  %3728 = vset.pattern.permute.xlu0 0
  %3729 = vperm.xlu0 %3728, %v3643
  %v3730 = vpop.permute.xlu0 %3729
  %3733 = vset.pattern.permute.xlu0 0
  %3734 = vperm.xlu0 %3733, %v3644
  %v3735 = vpop.permute.xlu0 %3734
  %3738 = vset.pattern.permute.xlu0 0
  %3739 = vperm.xlu0 %3738, %v3645
  %v3740 = vpop.permute.xlu0 %3739
  %v3742 = vadd.f32 %v3718, %v3725
  %v3743 = vadd.f32 %v3719, %v3730
  %v3744 = vadd.f32 %v3720, %v3735
  %v3745 = vadd.f32 %v3721, %v3740
  %s3746 = scalar_lea.vmem %s9, 384
  %v3747 = vld [vmem:[%s3746] sm:$0xff]
  %v3748 = vld [vmem:[%s3746 + $0x8] sm:$0xff]
  %v3749 = vld [vmem:[%s3746 + $0x10] sm:$0xff]
  %v3750 = vld [vmem:[%s3746 + $0x18] sm:$0xff]
  %v3751 = vld [vmem:[%s3746 + $0x20] sm:$0xff]
  %v3752 = vld [vmem:[%s3746 + $0x28] sm:$0xff]
  %v3753 = vld [vmem:[%s3746 + $0x30] sm:$0xff]
  %v3754 = vld [vmem:[%s3746 + $0x38] sm:$0xff]
  %s3755 = scalar_lea.vmem %s10, 384
  %v3756 = vld [vmem:[%s3755] sm:$0xff]
  %v3757 = vld [vmem:[%s3755 + $0x8] sm:$0xff]
  %v3758 = vld [vmem:[%s3755 + $0x10] sm:$0xff]
  %v3759 = vld [vmem:[%s3755 + $0x18] sm:$0xff]
  %v3760 = vld [vmem:[%s3755 + $0x20] sm:$0xff]
  %v3761 = vld [vmem:[%s3755 + $0x28] sm:$0xff]
  %v3762 = vld [vmem:[%s3755 + $0x30] sm:$0xff]
  %v3763 = vld [vmem:[%s3755 + $0x38] sm:$0xff]
  %3765 = vset.pattern.permute.xlu0 0
  %3766 = vperm.xlu0 %3765, %v3756
  %v3767 = vpop.permute.xlu0 %3766
  %3770 = vset.pattern.permute.xlu0 0
  %3771 = vperm.xlu0 %3770, %v3757
  %v3772 = vpop.permute.xlu0 %3771
  %3775 = vset.pattern.permute.xlu0 0
  %3776 = vperm.xlu0 %3775, %v3758
  %v3777 = vpop.permute.xlu0 %3776
  %3780 = vset.pattern.permute.xlu0 0
  %3781 = vperm.xlu0 %3780, %v3759
  %v3782 = vpop.permute.xlu0 %3781
  %3785 = vset.pattern.permute.xlu0 0
  %3786 = vperm.xlu0 %3785, %v3760
  %v3787 = vpop.permute.xlu0 %3786
  %3790 = vset.pattern.permute.xlu0 0
  %3791 = vperm.xlu0 %3790, %v3761
  %v3792 = vpop.permute.xlu0 %3791
  %3795 = vset.pattern.permute.xlu0 0
  %3796 = vperm.xlu0 %3795, %v3762
  %v3797 = vpop.permute.xlu0 %3796
  %3800 = vset.pattern.permute.xlu0 0
  %3801 = vperm.xlu0 %3800, %v3763
  %v3802 = vpop.permute.xlu0 %3801
  %v3805 = vsel %vm675, %v3747, 0
  %v3808 = vsel %vm675, %v3748, 0
  %v3811 = vsel %vm675, %v3749, 0
  %v3814 = vsel %vm675, %v3750, 0
  %v3817 = vsel %vm675, %v3751, 0
  %v3820 = vsel %vm675, %v3752, 0
  %v3823 = vsel %vm675, %v3753, 0
  %v3826 = vsel %vm675, %v3754, 0
  %3828 = vmatprep.subr.mxu0 0.0
  %3829 = vmatpush1.msra.mxu0 %v3742
  %3830 = vmatprep.subr.mxu0 0.0
  %3831 = vmatpush1.msra.mxu0 %v3743
  %3832 = vmatprep.subr.mxu0 0.0
  %3833 = vmatpush1.msra.mxu0 %v3744
  %3834 = vmatprep.subr.mxu0 0.0
  %3835 = vmatpush1.msra.mxu0 %v3745
  %3836 = vmatprep.subr.mxu0 0.0
  %3837 = vmatpush1.msra.mxu0 0.0
  %3838 = vmatprep.subr.mxu0 0.0
  %3839 = vmatpush1.msra.mxu0 0.0
  %3840 = vmatprep.subr.mxu0 0.0
  %3841 = vmatpush1.msra.mxu0 0.0
  %3842 = vmatprep.subr.mxu0 0.0
  %3843 = vmatpush1.msra.mxu0 0.0
  %3844 = vmatprep.subr.mxu0 0.0
  %3845 = vmatpush1.msra.mxu0 0.0
  %3846 = vmatprep.subr.mxu0 0.0
  %3847 = vmatpush1.msra.mxu0 0.0
  %3848 = vmatprep.subr.mxu0 0.0
  %3849 = vmatpush1.msra.mxu0 0.0
  %3850 = vmatprep.subr.mxu0 0.0
  %3851 = vmatpush1.msra.mxu0 0.0
  %3852 = vmatprep.subr.mxu0 0.0
  %3853 = vmatpush1.msra.mxu0 0.0
  %3854 = vmatprep.subr.mxu0 0.0
  %3855 = vmatpush1.msra.mxu0 0.0
  %3856 = vmatprep.subr.mxu0 0.0
  %3857 = vmatpush1.msra.mxu0 0.0
  %3858 = vmatprep.subr.mxu0 0.0
  %3859 = vmatpush1.msra.mxu0 0.0
  %3860 = vmatprep.subr.mxu0 0.0
  %3861 = vmatpush1.msra.mxu0 0.0
  %3862 = vmatprep.subr.mxu0 0.0
  %3863 = vmatpush1.msra.mxu0 0.0
  %3864 = vmatprep.subr.mxu0 0.0
  %3865 = vmatpush1.msra.mxu0 0.0
  %3866 = vmatprep.subr.mxu0 0.0
  %3867 = vmatpush1.msra.mxu0 0.0
  %3868 = vmatprep.subr.mxu0 0.0
  %3869 = vmatpush1.msra.mxu0 0.0
  %3870 = vmatprep.subr.mxu0 0.0
  %3871 = vmatpush1.msra.mxu0 0.0
  %3872 = vmatprep.subr.mxu0 0.0
  %3873 = vmatpush1.msra.mxu0 0.0
  %3874 = vmatprep.subr.mxu0 0.0
  %3875 = vmatpush1.msra.mxu0 0.0
  %3876 = vmatprep.subr.mxu0 0.0
  %3877 = vmatpush1.msra.mxu0 0.0
  %3878 = vmatprep.subr.mxu0 0.0
  %3879 = vmatpush1.msra.mxu0 0.0
  %3880 = vmatprep.subr.mxu0 0.0
  %3881 = vmatpush1.msra.mxu0 0.0
  %3882 = vmatprep.subr.mxu0 0.0
  %3883 = vmatpush1.msra.mxu0 0.0
  %3884 = vmatprep.subr.mxu0 0.0
  %3885 = vmatpush1.msra.mxu0 0.0
  %3886 = vmatprep.subr.mxu0 0.0
  %3887 = vmatpush1.msra.mxu0 0.0
  %3888 = vmatprep.subr.mxu0 0.0
  %3889 = vmatpush1.msra.mxu0 0.0
  %3890 = vmatprep.subr.mxu0 0.0
  %3891 = vmatpush1.msra.mxu0 0.0
  %3892 = vmatprep.mubr.f32.mxu0 0.0
  %3893 = vmatmul.mubr.f32.gmra.mrb[0].mxu0 %v3805
  %v3894 = vpop.f32.mrb[0].mxu0
  %v3895 = vadd.f32 %v3767, %v3894
  %v3896 = vpop.f32.mrb[0].mxu0
  %3897 = vmatprep.mubr.f32.mxu0 0.0
  %3898 = vmatmul.mubr.f32.gmra.mrb[0].mxu0 %v3808
  %v3899 = vpop.f32.mrb[0].mxu0
  %v3900 = vadd.f32 %v3772, %v3899
  %v3901 = vpop.f32.mrb[0].mxu0
  %3902 = vmatprep.mubr.f32.mxu0 0.0
  %3903 = vmatmul.mubr.f32.gmra.mrb[0].mxu0 %v3811
  %v3904 = vpop.f32.mrb[0].mxu0
  %v3905 = vadd.f32 %v3777, %v3904
  %v3906 = vpop.f32.mrb[0].mxu0
  %3907 = vmatprep.mubr.f32.mxu0 0.0
  %3908 = vmatmul.mubr.f32.gmra.mrb[0].mxu0 %v3814
  %v3909 = vpop.f32.mrb[0].mxu0
  %v3910 = vadd.f32 %v3782, %v3909
  %v3911 = vpop.f32.mrb[0].mxu0
  %3912 = vmatprep.mubr.f32.mxu0 0.0
  %3913 = vmatmul.mubr.f32.gmra.mrb[0].mxu0 %v3817
  %v3914 = vpop.f32.mrb[0].mxu0
  %v3915 = vadd.f32 %v3787, %v3914
  %v3916 = vpop.f32.mrb[0].mxu0
  %3917 = vmatprep.mubr.f32.mxu0 0.0
  %3918 = vmatmul.mubr.f32.gmra.mrb[0].mxu0 %v3820
  %v3919 = vpop.f32.mrb[0].mxu0
  %v3920 = vadd.f32 %v3792, %v3919
  %v3921 = vpop.f32.mrb[0].mxu0
  %3922 = vmatprep.mubr.f32.mxu0 0.0
  %3923 = vmatmul.mubr.f32.gmra.mrb[0].mxu0 %v3823
  %v3924 = vpop.f32.mrb[0].mxu0
  %v3925 = vadd.f32 %v3797, %v3924
  %v3926 = vpop.f32.mrb[0].mxu0
  %3927 = vmatprep.mubr.f32.mxu0 0.0
  %3928 = vmatmul.mubr.f32.gmra.mrb[0].mxu0 %v3826
  %v3929 = vpop.f32.mrb[0].mxu0
  %v3930 = vadd.f32 %v3802, %v3929
  %v3931 = vpop.f32.mrb[0].mxu0
  %3932 = vdwg.mxu0
  %v3933 = vadd.f32 %v3413, %v3895
  %v3934 = vadd.f32 %v3414, %v3900
  %v3935 = vadd.f32 %v3415, %v3905
  %v3936 = vadd.f32 %v3416, %v3910
  %v3937 = vadd.f32 %v3417, %v3915
  %v3938 = vadd.f32 %v3418, %v3920
  %v3939 = vadd.f32 %v3419, %v3925
  %v3940 = vadd.f32 %v3420, %v3930
  %3941 = vrot.lane.b32.xlu0 %v3933, 4
  %v3942 = vpop.permute.xlu0 %3941
  %3943 = vrot.lane.b32.xlu0 %v3934, 4
  %v3944 = vpop.permute.xlu0 %3943
  %3945 = vrot.lane.b32.xlu0 %v3935, 4
  %v3946 = vpop.permute.xlu0 %3945
  %3947 = vrot.lane.b32.xlu0 %v3936, 4
  %v3948 = vpop.permute.xlu0 %3947
  %v3949 = vsel %vm1868, %v3942, 0.0
  %v3950 = vsel %vm1868, %v3944, 0.0
  %v3951 = vsel %vm1868, %v3946, 0.0
  %v3952 = vsel %vm1868, %v3948, 0.0
  %3953 = vrot.lane.b32.xlu0 %v3933, 124
  %v3954 = vpop.permute.xlu0 %3953
  %3955 = vrot.lane.b32.xlu0 %v3934, 124
  %v3956 = vpop.permute.xlu0 %3955
  %3957 = vrot.lane.b32.xlu0 %v3935, 124
  %v3958 = vpop.permute.xlu0 %3957
  %3959 = vrot.lane.b32.xlu0 %v3936, 124
  %v3960 = vpop.permute.xlu0 %3959
  %v3961 = vsel %vm1884, %v3954, 0.0
  %v3962 = vsel %vm1884, %v3956, 0.0
  %v3963 = vsel %vm1884, %v3958, 0.0
  %v3964 = vsel %vm1884, %v3960, 0.0
  %s3965 = scalar_lea.vmem %s5, 448
  %v3966 = vld [vmem:[%s3965] sm:$0xff]
  %v3967 = vld [vmem:[%s3965 + $0x8] sm:$0xff]
  %v3968 = vld [vmem:[%s3965 + $0x10] sm:$0xff]
  %v3969 = vld [vmem:[%s3965 + $0x18] sm:$0xff]
  %v3970 = vld [vmem:[%s3965 + $0x20] sm:$0xff]
  %v3971 = vld [vmem:[%s3965 + $0x28] sm:$0xff]
  %v3972 = vld [vmem:[%s3965 + $0x30] sm:$0xff]
  %v3973 = vld [vmem:[%s3965 + $0x38] sm:$0xff]
  %s3974 = scalar_lea.vmem %s6, 448
  %v3975 = vld [vmem:[%s3974] sm:$0xff]
  %v3976 = vld [vmem:[%s3974 + $0x8] sm:$0xff]
  %v3977 = vld [vmem:[%s3974 + $0x10] sm:$0xff]
  %v3978 = vld [vmem:[%s3974 + $0x18] sm:$0xff]
  %v3979 = vld [vmem:[%s3974 + $0x20] sm:$0xff]
  %v3980 = vld [vmem:[%s3974 + $0x28] sm:$0xff]
  %v3981 = vld [vmem:[%s3974 + $0x30] sm:$0xff]
  %v3982 = vld [vmem:[%s3974 + $0x38] sm:$0xff]
  %3984 = vset.pattern.permute.xlu0 0
  %3985 = vperm.xlu0 %3984, %v3975
  %v3986 = vpop.permute.xlu0 %3985
  %3989 = vset.pattern.permute.xlu0 0
  %3990 = vperm.xlu0 %3989, %v3976
  %v3991 = vpop.permute.xlu0 %3990
  %3994 = vset.pattern.permute.xlu0 0
  %3995 = vperm.xlu0 %3994, %v3977
  %v3996 = vpop.permute.xlu0 %3995
  %3999 = vset.pattern.permute.xlu0 0
  %4000 = vperm.xlu0 %3999, %v3978
  %v4001 = vpop.permute.xlu0 %4000
  %4004 = vset.pattern.permute.xlu0 0
  %4005 = vperm.xlu0 %4004, %v3979
  %v4006 = vpop.permute.xlu0 %4005
  %4009 = vset.pattern.permute.xlu0 0
  %4010 = vperm.xlu0 %4009, %v3980
  %v4011 = vpop.permute.xlu0 %4010
  %4014 = vset.pattern.permute.xlu0 0
  %4015 = vperm.xlu0 %4014, %v3981
  %v4016 = vpop.permute.xlu0 %4015
  %4019 = vset.pattern.permute.xlu0 0
  %4020 = vperm.xlu0 %4019, %v3982
  %v4021 = vpop.permute.xlu0 %4020
  %v4024 = vsel %vm377, %v3966, 0
  %v4027 = vsel %vm377, %v3967, 0
  %v4030 = vsel %vm377, %v3968, 0
  %v4033 = vsel %vm377, %v3969, 0
  %v4036 = vsel %vm377, %v3970, 0
  %v4039 = vsel %vm377, %v3971, 0
  %v4042 = vsel %vm377, %v3972, 0
  %v4045 = vsel %vm377, %v3973, 0
  %4047 = vmatprep.subr.mxu0 0.0
  %4048 = vmatpush1.msra.mxu0 %v3949
  %4049 = vmatprep.subr.mxu0 0.0
  %4050 = vmatpush1.msra.mxu0 %v3950
  %4051 = vmatprep.subr.mxu0 0.0
  %4052 = vmatpush1.msra.mxu0 %v3951
  %4053 = vmatprep.subr.mxu0 0.0
  %4054 = vmatpush1.msra.mxu0 %v3952
  %4055 = vmatprep.subr.mxu0 0.0
  %4056 = vmatpush1.msra.mxu0 %v3961
  %4057 = vmatprep.subr.mxu0 0.0
  %4058 = vmatpush1.msra.mxu0 %v3962
  %4059 = vmatprep.subr.mxu0 0.0
  %4060 = vmatpush1.msra.mxu0 %v3963
  %4061 = vmatprep.subr.mxu0 0.0
  %4062 = vmatpush1.msra.mxu0 %v3964
  %4063 = vmatprep.subr.mxu0 0.0
  %4064 = vmatpush1.msra.mxu0 0.0
  %4065 = vmatprep.subr.mxu0 0.0
  %4066 = vmatpush1.msra.mxu0 0.0
  %4067 = vmatprep.subr.mxu0 0.0
  %4068 = vmatpush1.msra.mxu0 0.0
  %4069 = vmatprep.subr.mxu0 0.0
  %4070 = vmatpush1.msra.mxu0 0.0
  %4071 = vmatprep.subr.mxu0 0.0
  %4072 = vmatpush1.msra.mxu0 0.0
  %4073 = vmatprep.subr.mxu0 0.0
  %4074 = vmatpush1.msra.mxu0 0.0
  %4075 = vmatprep.subr.mxu0 0.0
  %4076 = vmatpush1.msra.mxu0 0.0
  %4077 = vmatprep.subr.mxu0 0.0
  %4078 = vmatpush1.msra.mxu0 0.0
  %4079 = vmatprep.subr.mxu0 0.0
  %4080 = vmatpush1.msra.mxu0 0.0
  %4081 = vmatprep.subr.mxu0 0.0
  %4082 = vmatpush1.msra.mxu0 0.0
  %4083 = vmatprep.subr.mxu0 0.0
  %4084 = vmatpush1.msra.mxu0 0.0
  %4085 = vmatprep.subr.mxu0 0.0
  %4086 = vmatpush1.msra.mxu0 0.0
  %4087 = vmatprep.subr.mxu0 0.0
  %4088 = vmatpush1.msra.mxu0 0.0
  %4089 = vmatprep.subr.mxu0 0.0
  %4090 = vmatpush1.msra.mxu0 0.0
  %4091 = vmatprep.subr.mxu0 0.0
  %4092 = vmatpush1.msra.mxu0 0.0
  %4093 = vmatprep.subr.mxu0 0.0
  %4094 = vmatpush1.msra.mxu0 0.0
  %4095 = vmatprep.subr.mxu0 0.0
  %4096 = vmatpush1.msra.mxu0 0.0
  %4097 = vmatprep.subr.mxu0 0.0
  %4098 = vmatpush1.msra.mxu0 0.0
  %4099 = vmatprep.subr.mxu0 0.0
  %4100 = vmatpush1.msra.mxu0 0.0
  %4101 = vmatprep.subr.mxu0 0.0
  %4102 = vmatpush1.msra.mxu0 0.0
  %4103 = vmatprep.subr.mxu0 0.0
  %4104 = vmatpush1.msra.mxu0 0.0
  %4105 = vmatprep.subr.mxu0 0.0
  %4106 = vmatpush1.msra.mxu0 0.0
  %4107 = vmatprep.subr.mxu0 0.0
  %4108 = vmatpush1.msra.mxu0 0.0
  %4109 = vmatprep.subr.mxu0 0.0
  %4110 = vmatpush1.msra.mxu0 0.0
  %4111 = vmatprep.mubr.f32.mxu0 0.0
  %4112 = vmatmul.mubr.f32.gmra.mrb[0].mxu0 %v4024
  %v4113 = vpop.f32.mrb[0].mxu0
  %v4114 = vadd.f32 %v3986, %v4113
  %v4115 = vpop.f32.mrb[0].mxu0
  %4116 = vmatprep.mubr.f32.mxu0 0.0
  %4117 = vmatmul.mubr.f32.gmra.mrb[0].mxu0 %v4027
  %v4118 = vpop.f32.mrb[0].mxu0
  %v4119 = vadd.f32 %v3991, %v4118
  %v4120 = vpop.f32.mrb[0].mxu0
  %4121 = vmatprep.mubr.f32.mxu0 0.0
  %4122 = vmatmul.mubr.f32.gmra.mrb[0].mxu0 %v4030
  %v4123 = vpop.f32.mrb[0].mxu0
  %v4124 = vadd.f32 %v3996, %v4123
  %v4125 = vpop.f32.mrb[0].mxu0
  %4126 = vmatprep.mubr.f32.mxu0 0.0
  %4127 = vmatmul.mubr.f32.gmra.mrb[0].mxu0 %v4033
  %v4128 = vpop.f32.mrb[0].mxu0
  %v4129 = vadd.f32 %v4001, %v4128
  %v4130 = vpop.f32.mrb[0].mxu0
  %4131 = vmatprep.mubr.f32.mxu0 0.0
  %4132 = vmatmul.mubr.f32.gmra.mrb[0].mxu0 %v4036
  %v4133 = vpop.f32.mrb[0].mxu0
  %v4134 = vadd.f32 %v4006, %v4133
  %v4135 = vpop.f32.mrb[0].mxu0
  %4136 = vmatprep.mubr.f32.mxu0 0.0
  %4137 = vmatmul.mubr.f32.gmra.mrb[0].mxu0 %v4039
  %v4138 = vpop.f32.mrb[0].mxu0
  %v4139 = vadd.f32 %v4011, %v4138
  %v4140 = vpop.f32.mrb[0].mxu0
  %4141 = vmatprep.mubr.f32.mxu0 0.0
  %4142 = vmatmul.mubr.f32.gmra.mrb[0].mxu0 %v4042
  %v4143 = vpop.f32.mrb[0].mxu0
  %v4144 = vadd.f32 %v4016, %v4143
  %v4145 = vpop.f32.mrb[0].mxu0
  %4146 = vmatprep.mubr.f32.mxu0 0.0
  %4147 = vmatmul.mubr.f32.gmra.mrb[0].mxu0 %v4045
  %v4148 = vpop.f32.mrb[0].mxu0
  %v4149 = vadd.f32 %v4021, %v4148
  %v4150 = vpop.f32.mrb[0].mxu0
  %4151 = vdwg.mxu0
  %v4152 = vmul.f32 %v4114, %v4134
  %v4153 = vmul.f32 %v4119, %v4139
  %v4154 = vmul.f32 %v4124, %v4144
  %v4155 = vmul.f32 %v4129, %v4149
  %s4156 = scalar_lea.vmem %s7, 224
  %v4157 = vld [vmem:[%s4156] sm:$0xff]
  %v4158 = vld [vmem:[%s4156 + $0x8] sm:$0xff]
  %v4159 = vld [vmem:[%s4156 + $0x10] sm:$0xff]
  %v4160 = vld [vmem:[%s4156 + $0x18] sm:$0xff]
  %s4161 = scalar_lea.vmem %s8, 224
  %v4162 = vld [vmem:[%s4161] sm:$0xff]
  %v4163 = vld [vmem:[%s4161 + $0x8] sm:$0xff]
  %v4164 = vld [vmem:[%s4161 + $0x10] sm:$0xff]
  %v4165 = vld [vmem:[%s4161 + $0x18] sm:$0xff]
  %4166 = vadd.xlane.f32.xlu0 %v4152
  %v4167 = vpop.xlane.xlu0 %4166
  %4168 = vadd.xlane.f32.xlu0 %v4153
  %v4169 = vpop.xlane.xlu0 %4168
  %4170 = vadd.xlane.f32.xlu0 %v4154
  %v4171 = vpop.xlane.xlu0 %4170
  %4172 = vadd.xlane.f32.xlu0 %v4155
  %v4173 = vpop.xlane.xlu0 %4172
  %v4174 = vmul.f32 %v4167, %v212
  %v4175 = vmul.f32 %v4169, %v212
  %v4176 = vmul.f32 %v4171, %v212
  %v4177 = vmul.f32 %v4173, %v212
  %v4178 = vmul.f32 %v4152, %v4152
  %v4179 = vmul.f32 %v4153, %v4153
  %v4180 = vmul.f32 %v4154, %v4154
  %v4181 = vmul.f32 %v4155, %v4155
  %4182 = vadd.xlane.f32.xlu0 %v4178
  %v4183 = vpop.xlane.xlu0 %4182
  %4184 = vadd.xlane.f32.xlu0 %v4179
  %v4185 = vpop.xlane.xlu0 %4184
  %4186 = vadd.xlane.f32.xlu0 %v4180
  %v4187 = vpop.xlane.xlu0 %4186
  %4188 = vadd.xlane.f32.xlu0 %v4181
  %v4189 = vpop.xlane.xlu0 %4188
  %v4190 = vmul.f32 %v4183, %v212
  %v4191 = vmul.f32 %v4185, %v212
  %v4192 = vmul.f32 %v4187, %v212
  %v4193 = vmul.f32 %v4189, %v212
  %v4194 = vmul.f32 %v4174, %v4174
  %v4195 = vmul.f32 %v4175, %v4175
  %v4196 = vmul.f32 %v4176, %v4176
  %v4197 = vmul.f32 %v4177, %v4177
  %v4198 = vsub.f32 %v4190, %v4194
  %v4199 = vsub.f32 %v4191, %v4195
  %v4200 = vsub.f32 %v4192, %v4196
  %v4201 = vsub.f32 %v4193, %v4197
  %v4202 = vadd.f32 %v4198, 1e-05
  %v4203 = vadd.f32 %v4199, 1e-05
  %v4204 = vadd.f32 %v4200, 1e-05
  %v4205 = vadd.f32 %v4201, 1e-05
  %v4206 = vrsqrt.pop %v4202
  %v4207 = vrsqrt.pop %v4203
  %v4208 = vrsqrt.pop %v4204
  %v4209 = vrsqrt.pop %v4205
  %v4210 = vmul.f32 %v4206, %v4157
  %v4211 = vmul.f32 %v4207, %v4158
  %v4212 = vmul.f32 %v4208, %v4159
  %v4213 = vmul.f32 %v4209, %v4160
  %v4214 = vsub.f32 %v4152, %v4174
  %v4215 = vsub.f32 %v4153, %v4175
  %v4216 = vsub.f32 %v4154, %v4176
  %v4217 = vsub.f32 %v4155, %v4177
  %4219 = vset.pattern.permute.xlu0 0
  %4220 = vperm.xlu0 %4219, %v4210
  %v4221 = vpop.permute.xlu0 %4220
  %4224 = vset.pattern.permute.xlu0 0
  %4225 = vperm.xlu0 %4224, %v4211
  %v4226 = vpop.permute.xlu0 %4225
  %4229 = vset.pattern.permute.xlu0 0
  %4230 = vperm.xlu0 %4229, %v4212
  %v4231 = vpop.permute.xlu0 %4230
  %4234 = vset.pattern.permute.xlu0 0
  %4235 = vperm.xlu0 %4234, %v4213
  %v4236 = vpop.permute.xlu0 %4235
  %v4238 = vmul.f32 %v4214, %v4221
  %v4239 = vmul.f32 %v4215, %v4226
  %v4240 = vmul.f32 %v4216, %v4231
  %v4241 = vmul.f32 %v4217, %v4236
  %4243 = vset.pattern.permute.xlu0 0
  %4244 = vperm.xlu0 %4243, %v4162
  %v4245 = vpop.permute.xlu0 %4244
  %4248 = vset.pattern.permute.xlu0 0
  %4249 = vperm.xlu0 %4248, %v4163
  %v4250 = vpop.permute.xlu0 %4249
  %4253 = vset.pattern.permute.xlu0 0
  %4254 = vperm.xlu0 %4253, %v4164
  %v4255 = vpop.permute.xlu0 %4254
  %4258 = vset.pattern.permute.xlu0 0
  %4259 = vperm.xlu0 %4258, %v4165
  %v4260 = vpop.permute.xlu0 %4259
  %v4262 = vadd.f32 %v4238, %v4245
  %v4263 = vadd.f32 %v4239, %v4250
  %v4264 = vadd.f32 %v4240, %v4255
  %v4265 = vadd.f32 %v4241, %v4260
  %s4266 = scalar_lea.vmem %s9, 448
  %v4267 = vld [vmem:[%s4266] sm:$0xff]
  %v4268 = vld [vmem:[%s4266 + $0x8] sm:$0xff]
  %v4269 = vld [vmem:[%s4266 + $0x10] sm:$0xff]
  %v4270 = vld [vmem:[%s4266 + $0x18] sm:$0xff]
  %v4271 = vld [vmem:[%s4266 + $0x20] sm:$0xff]
  %v4272 = vld [vmem:[%s4266 + $0x28] sm:$0xff]
  %v4273 = vld [vmem:[%s4266 + $0x30] sm:$0xff]
  %v4274 = vld [vmem:[%s4266 + $0x38] sm:$0xff]
  %s4275 = scalar_lea.vmem %s10, 448
  %v4276 = vld [vmem:[%s4275] sm:$0xff]
  %v4277 = vld [vmem:[%s4275 + $0x8] sm:$0xff]
  %v4278 = vld [vmem:[%s4275 + $0x10] sm:$0xff]
  %v4279 = vld [vmem:[%s4275 + $0x18] sm:$0xff]
  %v4280 = vld [vmem:[%s4275 + $0x20] sm:$0xff]
  %v4281 = vld [vmem:[%s4275 + $0x28] sm:$0xff]
  %v4282 = vld [vmem:[%s4275 + $0x30] sm:$0xff]
  %v4283 = vld [vmem:[%s4275 + $0x38] sm:$0xff]
  %4285 = vset.pattern.permute.xlu0 0
  %4286 = vperm.xlu0 %4285, %v4276
  %v4287 = vpop.permute.xlu0 %4286
  %4289 = vset.pattern.permute.xlu0 0
  %4290 = vperm.xlu0 %4289, %v4277
  %v4291 = vpop.permute.xlu0 %4290
  %4293 = vset.pattern.permute.xlu0 0
  %4294 = vperm.xlu0 %4293, %v4278
  %v4295 = vpop.permute.xlu0 %4294
  %4297 = vset.pattern.permute.xlu0 0
  %4298 = vperm.xlu0 %4297, %v4279
  %v4299 = vpop.permute.xlu0 %4298
  %4301 = vset.pattern.permute.xlu0 0
  %4302 = vperm.xlu0 %4301, %v4280
  %v4303 = vpop.permute.xlu0 %4302
  %4306 = vset.pattern.permute.xlu0 0
  %4307 = vperm.xlu0 %4306, %v4281
  %v4308 = vpop.permute.xlu0 %4307
  %4311 = vset.pattern.permute.xlu0 0
  %4312 = vperm.xlu0 %4311, %v4282
  %v4313 = vpop.permute.xlu0 %4312
  %4316 = vset.pattern.permute.xlu0 0
  %4317 = vperm.xlu0 %4316, %v4283
  %v4318 = vpop.permute.xlu0 %4317
  %v4321 = vsel %vm675, %v4267, 0
  %v4324 = vsel %vm675, %v4268, 0
  %v4327 = vsel %vm675, %v4269, 0
  %v4330 = vsel %vm675, %v4270, 0
  %v4333 = vsel %vm675, %v4271, 0
  %v4336 = vsel %vm675, %v4272, 0
  %v4339 = vsel %vm675, %v4273, 0
  %v4342 = vsel %vm675, %v4274, 0
  %4344 = vmatprep.subr.mxu0 0.0
  %4345 = vmatpush1.msra.mxu0 %v4262
  %4346 = vmatprep.subr.mxu0 0.0
  %4347 = vmatpush1.msra.mxu0 %v4263
  %4348 = vmatprep.subr.mxu0 0.0
  %4349 = vmatpush1.msra.mxu0 %v4264
  %4350 = vmatprep.subr.mxu0 0.0
  %4351 = vmatpush1.msra.mxu0 %v4265
  %4352 = vmatprep.subr.mxu0 0.0
  %4353 = vmatpush1.msra.mxu0 0.0
  %4354 = vmatprep.subr.mxu0 0.0
  %4355 = vmatpush1.msra.mxu0 0.0
  %4356 = vmatprep.subr.mxu0 0.0
  %4357 = vmatpush1.msra.mxu0 0.0
  %4358 = vmatprep.subr.mxu0 0.0
  %4359 = vmatpush1.msra.mxu0 0.0
  %4360 = vmatprep.subr.mxu0 0.0
  %4361 = vmatpush1.msra.mxu0 0.0
  %4362 = vmatprep.subr.mxu0 0.0
  %4363 = vmatpush1.msra.mxu0 0.0
  %4364 = vmatprep.subr.mxu0 0.0
  %4365 = vmatpush1.msra.mxu0 0.0
  %4366 = vmatprep.subr.mxu0 0.0
  %4367 = vmatpush1.msra.mxu0 0.0
  %4368 = vmatprep.subr.mxu0 0.0
  %4369 = vmatpush1.msra.mxu0 0.0
  %4370 = vmatprep.subr.mxu0 0.0
  %4371 = vmatpush1.msra.mxu0 0.0
  %4372 = vmatprep.subr.mxu0 0.0
  %4373 = vmatpush1.msra.mxu0 0.0
  %4374 = vmatprep.subr.mxu0 0.0
  %4375 = vmatpush1.msra.mxu0 0.0
  %4376 = vmatprep.subr.mxu0 0.0
  %4377 = vmatpush1.msra.mxu0 0.0
  %4378 = vmatprep.subr.mxu0 0.0
  %4379 = vmatpush1.msra.mxu0 0.0
  %4380 = vmatprep.subr.mxu0 0.0
  %4381 = vmatpush1.msra.mxu0 0.0
  %4382 = vmatprep.subr.mxu0 0.0
  %4383 = vmatpush1.msra.mxu0 0.0
  %4384 = vmatprep.subr.mxu0 0.0
  %4385 = vmatpush1.msra.mxu0 0.0
  %4386 = vmatprep.subr.mxu0 0.0
  %4387 = vmatpush1.msra.mxu0 0.0
  %4388 = vmatprep.subr.mxu0 0.0
  %4389 = vmatpush1.msra.mxu0 0.0
  %4390 = vmatprep.subr.mxu0 0.0
  %4391 = vmatpush1.msra.mxu0 0.0
  %4392 = vmatprep.subr.mxu0 0.0
  %4393 = vmatpush1.msra.mxu0 0.0
  %4394 = vmatprep.subr.mxu0 0.0
  %4395 = vmatpush1.msra.mxu0 0.0
  %4396 = vmatprep.subr.mxu0 0.0
  %4397 = vmatpush1.msra.mxu0 0.0
  %4398 = vmatprep.subr.mxu0 0.0
  %4399 = vmatpush1.msra.mxu0 0.0
  %4400 = vmatprep.subr.mxu0 0.0
  %4401 = vmatpush1.msra.mxu0 0.0
  %4402 = vmatprep.subr.mxu0 0.0
  %4403 = vmatpush1.msra.mxu0 0.0
  %4404 = vmatprep.subr.mxu0 0.0
  %4405 = vmatpush1.msra.mxu0 0.0
  %4406 = vmatprep.subr.mxu0 0.0
  %4407 = vmatpush1.msra.mxu0 0.0
  %4408 = vmatprep.mubr.f32.mxu0 0.0
  %4409 = vmatmul.mubr.f32.gmra.mrb[0].mxu0 %v4321
  %v4410 = vpop.f32.mrb[0].mxu0
  %v4411 = vpop.f32.mrb[0].mxu0
  %4412 = vmatprep.mubr.f32.mxu0 0.0
  %4413 = vmatmul.mubr.f32.gmra.mrb[0].mxu0 %v4324
  %v4414 = vpop.f32.mrb[0].mxu0
  %v4415 = vpop.f32.mrb[0].mxu0
  %4416 = vmatprep.mubr.f32.mxu0 0.0
  %4417 = vmatmul.mubr.f32.gmra.mrb[0].mxu0 %v4327
  %v4418 = vpop.f32.mrb[0].mxu0
  %v4419 = vpop.f32.mrb[0].mxu0
  %4420 = vmatprep.mubr.f32.mxu0 0.0
  %4421 = vmatmul.mubr.f32.gmra.mrb[0].mxu0 %v4330
  %v4422 = vpop.f32.mrb[0].mxu0
  %v4423 = vpop.f32.mrb[0].mxu0
  %4424 = vmatprep.mubr.f32.mxu0 0.0
  %4425 = vmatmul.mubr.f32.gmra.mrb[0].mxu0 %v4333
  %v4426 = vpop.f32.mrb[0].mxu0
  %v4427 = vadd.f32 %v4303, %v4426
  %v4428 = vpop.f32.mrb[0].mxu0
  %4429 = vmatprep.mubr.f32.mxu0 0.0
  %4430 = vmatmul.mubr.f32.gmra.mrb[0].mxu0 %v4336
  %v4431 = vpop.f32.mrb[0].mxu0
  %v4432 = vadd.f32 %v4308, %v4431
  %v4433 = vpop.f32.mrb[0].mxu0
  %4434 = vmatprep.mubr.f32.mxu0 0.0
  %4435 = vmatmul.mubr.f32.gmra.mrb[0].mxu0 %v4339
  %v4436 = vpop.f32.mrb[0].mxu0
  %v4437 = vadd.f32 %v4313, %v4436
  %v4438 = vpop.f32.mrb[0].mxu0
  %4439 = vmatprep.mubr.f32.mxu0 0.0
  %4440 = vmatmul.mubr.f32.gmra.mrb[0].mxu0 %v4342
  %v4441 = vpop.f32.mrb[0].mxu0
  %v4442 = vadd.f32 %v4318, %v4441
  %v4443 = vpop.f32.mrb[0].mxu0
  %4444 = vdwg.mxu0
  %v4445 = vadd.f32 %v3937, %v4427
  %v4446 = vadd.f32 %v3938, %v4432
  %v4447 = vadd.f32 %v3939, %v4437
  %v4448 = vadd.f32 %v3940, %v4442
  %v4449 = vmax.f32 %v4445, 0.0
  %v4450 = vmax.f32 %v4446, 0.0
  %v4451 = vmax.f32 %v4447, 0.0
  %v4452 = vmax.f32 %v4448, 0.0
  %v4453 = vld [vmem:[%s11] sm:$0xff]
  %v4454 = vld [vmem:[%s11 + $0x8] sm:$0xff]
  %v4455 = vld [vmem:[%s11 + $0x10] sm:$0xff]
  %v4456 = vld [vmem:[%s11 + $0x18] sm:$0xff]
  %v4457 = vld [vmem:[%s12] sm:$0xff]
  %v4458 = vld [vmem:[%s12 + $0x8] sm:$0xff]
  %v4459 = vld [vmem:[%s12 + $0x10] sm:$0xff]
  %v4460 = vld [vmem:[%s12 + $0x18] sm:$0xff]
  %4461 = vadd.xlane.f32.xlu0 %v4449
  %v4462 = vpop.xlane.xlu0 %4461
  %4463 = vadd.xlane.f32.xlu0 %v4450
  %v4464 = vpop.xlane.xlu0 %4463
  %4465 = vadd.xlane.f32.xlu0 %v4451
  %v4466 = vpop.xlane.xlu0 %4465
  %4467 = vadd.xlane.f32.xlu0 %v4452
  %v4468 = vpop.xlane.xlu0 %4467
  %v4469 = vmul.f32 %v4462, %v212
  %v4470 = vmul.f32 %v4464, %v212
  %v4471 = vmul.f32 %v4466, %v212
  %v4472 = vmul.f32 %v4468, %v212
  %v4473 = vmul.f32 %v4449, %v4449
  %v4474 = vmul.f32 %v4450, %v4450
  %v4475 = vmul.f32 %v4451, %v4451
  %v4476 = vmul.f32 %v4452, %v4452
  %4477 = vadd.xlane.f32.xlu0 %v4473
  %v4478 = vpop.xlane.xlu0 %4477
  %4479 = vadd.xlane.f32.xlu0 %v4474
  %v4480 = vpop.xlane.xlu0 %4479
  %4481 = vadd.xlane.f32.xlu0 %v4475
  %v4482 = vpop.xlane.xlu0 %4481
  %4483 = vadd.xlane.f32.xlu0 %v4476
  %v4484 = vpop.xlane.xlu0 %4483
  %v4485 = vmul.f32 %v4478, %v212
  %v4486 = vmul.f32 %v4480, %v212
  %v4487 = vmul.f32 %v4482, %v212
  %v4488 = vmul.f32 %v4484, %v212
  %v4489 = vmul.f32 %v4469, %v4469
  %v4490 = vmul.f32 %v4470, %v4470
  %v4491 = vmul.f32 %v4471, %v4471
  %v4492 = vmul.f32 %v4472, %v4472
  %v4493 = vsub.f32 %v4485, %v4489
  %v4494 = vsub.f32 %v4486, %v4490
  %v4495 = vsub.f32 %v4487, %v4491
  %v4496 = vsub.f32 %v4488, %v4492
  %v4497 = vadd.f32 %v4493, 0.0005
  %v4498 = vadd.f32 %v4494, 0.0005
  %v4499 = vadd.f32 %v4495, 0.0005
  %v4500 = vadd.f32 %v4496, 0.0005
  %v4501 = vrsqrt.pop %v4497
  %v4502 = vrsqrt.pop %v4498
  %v4503 = vrsqrt.pop %v4499
  %v4504 = vrsqrt.pop %v4500
  %v4505 = vmul.f32 %v4501, %v4453
  %v4506 = vmul.f32 %v4502, %v4454
  %v4507 = vmul.f32 %v4503, %v4455
  %v4508 = vmul.f32 %v4504, %v4456
  %v4509 = vsub.f32 %v4449, %v4469
  %v4510 = vsub.f32 %v4450, %v4470
  %v4511 = vsub.f32 %v4451, %v4471
  %v4512 = vsub.f32 %v4452, %v4472
  %4514 = vset.pattern.permute.xlu0 0
  %4515 = vperm.xlu0 %4514, %v4505
  %v4516 = vpop.permute.xlu0 %4515
  %4519 = vset.pattern.permute.xlu0 0
  %4520 = vperm.xlu0 %4519, %v4506
  %v4521 = vpop.permute.xlu0 %4520
  %4524 = vset.pattern.permute.xlu0 0
  %4525 = vperm.xlu0 %4524, %v4507
  %v4526 = vpop.permute.xlu0 %4525
  %4529 = vset.pattern.permute.xlu0 0
  %4530 = vperm.xlu0 %4529, %v4508
  %v4531 = vpop.permute.xlu0 %4530
  %v4533 = vmul.f32 %v4509, %v4516
  %v4534 = vmul.f32 %v4510, %v4521
  %v4535 = vmul.f32 %v4511, %v4526
  %v4536 = vmul.f32 %v4512, %v4531
  %4538 = vset.pattern.permute.xlu0 0
  %4539 = vperm.xlu0 %4538, %v4457
  %v4540 = vpop.permute.xlu0 %4539
  %4543 = vset.pattern.permute.xlu0 0
  %4544 = vperm.xlu0 %4543, %v4458
  %v4545 = vpop.permute.xlu0 %4544
  %4548 = vset.pattern.permute.xlu0 0
  %4549 = vperm.xlu0 %4548, %v4459
  %v4550 = vpop.permute.xlu0 %4549
  %4553 = vset.pattern.permute.xlu0 0
  %4554 = vperm.xlu0 %4553, %v4460
  %v4555 = vpop.permute.xlu0 %4554
  %v4557 = vadd.f32 %v4533, %v4540
  %v4558 = vadd.f32 %v4534, %v4545
  %v4559 = vadd.f32 %v4535, %v4550
  %v4560 = vadd.f32 %v4536, %v4555
  %v4561 = vld [vmem:[%s13] sm:$0xff]
  %v4562 = vld [vmem:[%s14] sm:$0xff]
  %4564 = vset.pattern.permute.xlu0 0
  %4565 = vperm.xlu0 %4564, %v4562
  %v4566 = vpop.permute.xlu0 %4565
  %v4569 = vsel %vm675, %v4561, 0
  %4571 = vmatprep.subr.mxu0 0.0
  %4572 = vmatpush1.msra.mxu0 %v4557
  %4573 = vmatprep.subr.mxu0 0.0
  %4574 = vmatpush1.msra.mxu0 %v4558
  %4575 = vmatprep.subr.mxu0 0.0
  %4576 = vmatpush1.msra.mxu0 %v4559
  %4577 = vmatprep.subr.mxu0 0.0
  %4578 = vmatpush1.msra.mxu0 %v4560
  %4579 = vmatprep.subr.mxu0 0.0
  %4580 = vmatpush1.msra.mxu0 0.0
  %4581 = vmatprep.subr.mxu0 0.0
  %4582 = vmatpush1.msra.mxu0 0.0
  %4583 = vmatprep.subr.mxu0 0.0
  %4584 = vmatpush1.msra.mxu0 0.0
  %4585 = vmatprep.subr.mxu0 0.0
  %4586 = vmatpush1.msra.mxu0 0.0
  %4587 = vmatprep.subr.mxu0 0.0
  %4588 = vmatpush1.msra.mxu0 0.0
  %4589 = vmatprep.subr.mxu0 0.0
  %4590 = vmatpush1.msra.mxu0 0.0
  %4591 = vmatprep.subr.mxu0 0.0
  %4592 = vmatpush1.msra.mxu0 0.0
  %4593 = vmatprep.subr.mxu0 0.0
  %4594 = vmatpush1.msra.mxu0 0.0
  %4595 = vmatprep.subr.mxu0 0.0
  %4596 = vmatpush1.msra.mxu0 0.0
  %4597 = vmatprep.subr.mxu0 0.0
  %4598 = vmatpush1.msra.mxu0 0.0
  %4599 = vmatprep.subr.mxu0 0.0
  %4600 = vmatpush1.msra.mxu0 0.0
  %4601 = vmatprep.subr.mxu0 0.0
  %4602 = vmatpush1.msra.mxu0 0.0
  %4603 = vmatprep.subr.mxu0 0.0
  %4604 = vmatpush1.msra.mxu0 0.0
  %4605 = vmatprep.subr.mxu0 0.0
  %4606 = vmatpush1.msra.mxu0 0.0
  %4607 = vmatprep.subr.mxu0 0.0
  %4608 = vmatpush1.msra.mxu0 0.0
  %4609 = vmatprep.subr.mxu0 0.0
  %4610 = vmatpush1.msra.mxu0 0.0
  %4611 = vmatprep.subr.mxu0 0.0
  %4612 = vmatpush1.msra.mxu0 0.0
  %4613 = vmatprep.subr.mxu0 0.0
  %4614 = vmatpush1.msra.mxu0 0.0
  %4615 = vmatprep.subr.mxu0 0.0
  %4616 = vmatpush1.msra.mxu0 0.0
  %4617 = vmatprep.subr.mxu0 0.0
  %4618 = vmatpush1.msra.mxu0 0.0
  %4619 = vmatprep.subr.mxu0 0.0
  %4620 = vmatpush1.msra.mxu0 0.0
  %4621 = vmatprep.subr.mxu0 0.0
  %4622 = vmatpush1.msra.mxu0 0.0
  %4623 = vmatprep.subr.mxu0 0.0
  %4624 = vmatpush1.msra.mxu0 0.0
  %4625 = vmatprep.subr.mxu0 0.0
  %4626 = vmatpush1.msra.mxu0 0.0
  %4627 = vmatprep.subr.mxu0 0.0
  %4628 = vmatpush1.msra.mxu0 0.0
  %4629 = vmatprep.subr.mxu0 0.0
  %4630 = vmatpush1.msra.mxu0 0.0
  %4631 = vmatprep.subr.mxu0 0.0
  %4632 = vmatpush1.msra.mxu0 0.0
  %4633 = vmatprep.subr.mxu0 0.0
  %4634 = vmatpush1.msra.mxu0 0.0
  %4635 = vmatprep.mubr.f32.mxu0 0.0
  %4636 = vmatmul.mubr.f32.gmra.mrb[0].mxu0 %v4569
  %v4637 = vpop.f32.mrb[0].mxu0
  %v4638 = vadd.f32 %v4566, %v4637
  %v4639 = vpop.f32.mrb[0].mxu0
  %4640 = vdwg.mxu0
  %v4641 = vmax.f32 %v4638, 0.0
  %v4642 = vld [vmem:[%s15] sm:$0xff]
  %v4643 = vld [vmem:[%s16] sm:$0xff]
  %4644 = vadd.xlane.f32.xlu0 %v4641
  %v4645 = vpop.xlane.xlu0 %4644
  %v4646 = vmul.f32 %v4645, %v212
  %v4647 = vmul.f32 %v4641, %v4641
  %4648 = vadd.xlane.f32.xlu0 %v4647
  %v4649 = vpop.xlane.xlu0 %4648
  %v4650 = vmul.f32 %v4649, %v212
  %v4651 = vmul.f32 %v4646, %v4646
  %v4652 = vsub.f32 %v4650, %v4651
  %v4653 = vadd.f32 %v4652, 0.0005
  %v4654 = vrsqrt.pop %v4653
  %v4655 = vmul.f32 %v4654, %v4642
  %v4656 = vsub.f32 %v4641, %v4646
  %4658 = vset.pattern.permute.xlu0 0
  %4659 = vperm.xlu0 %4658, %v4655
  %v4660 = vpop.permute.xlu0 %4659
  %v4662 = vmul.f32 %v4656, %v4660
  %4664 = vset.pattern.permute.xlu0 0
  %4665 = vperm.xlu0 %4664, %v4643
  %v4666 = vpop.permute.xlu0 %4665
  %v4668 = vadd.f32 %v4662, %v4666
  %v4669 = vld [vmem:[%s17] sm:$0xff]
  %v4670 = vld [vmem:[%s18] sm:$0xff]
  %4672 = vset.pattern.permute.xlu0 0
  %4673 = vperm.xlu0 %4672, %v4670
  %v4674 = vpop.permute.xlu0 %4673
  %vm4676 = vcmask 64512
  %v4678 = vsel %vm4676, %v4669, 0
  %4680 = vmatprep.subr.mxu0 0.0
  %4681 = vmatpush1.msra.mxu0 %v4668
  %4682 = vmatprep.subr.mxu0 0.0
  %4683 = vmatpush1.msra.mxu0 0.0
  %4684 = vmatprep.subr.mxu0 0.0
  %4685 = vmatpush1.msra.mxu0 0.0
  %4686 = vmatprep.subr.mxu0 0.0
  %4687 = vmatpush1.msra.mxu0 0.0
  %4688 = vmatprep.subr.mxu0 0.0
  %4689 = vmatpush1.msra.mxu0 0.0
  %4690 = vmatprep.subr.mxu0 0.0
  %4691 = vmatpush1.msra.mxu0 0.0
  %4692 = vmatprep.subr.mxu0 0.0
  %4693 = vmatpush1.msra.mxu0 0.0
  %4694 = vmatprep.subr.mxu0 0.0
  %4695 = vmatpush1.msra.mxu0 0.0
  %4696 = vmatprep.subr.mxu0 0.0
  %4697 = vmatpush1.msra.mxu0 0.0
  %4698 = vmatprep.subr.mxu0 0.0
  %4699 = vmatpush1.msra.mxu0 0.0
  %4700 = vmatprep.subr.mxu0 0.0
  %4701 = vmatpush1.msra.mxu0 0.0
  %4702 = vmatprep.subr.mxu0 0.0
  %4703 = vmatpush1.msra.mxu0 0.0
  %4704 = vmatprep.subr.mxu0 0.0
  %4705 = vmatpush1.msra.mxu0 0.0
  %4706 = vmatprep.subr.mxu0 0.0
  %4707 = vmatpush1.msra.mxu0 0.0
  %4708 = vmatprep.subr.mxu0 0.0
  %4709 = vmatpush1.msra.mxu0 0.0
  %4710 = vmatprep.subr.mxu0 0.0
  %4711 = vmatpush1.msra.mxu0 0.0
  %4712 = vmatprep.subr.mxu0 0.0
  %4713 = vmatpush1.msra.mxu0 0.0
  %4714 = vmatprep.subr.mxu0 0.0
  %4715 = vmatpush1.msra.mxu0 0.0
  %4716 = vmatprep.subr.mxu0 0.0
  %4717 = vmatpush1.msra.mxu0 0.0
  %4718 = vmatprep.subr.mxu0 0.0
  %4719 = vmatpush1.msra.mxu0 0.0
  %4720 = vmatprep.subr.mxu0 0.0
  %4721 = vmatpush1.msra.mxu0 0.0
  %4722 = vmatprep.subr.mxu0 0.0
  %4723 = vmatpush1.msra.mxu0 0.0
  %4724 = vmatprep.subr.mxu0 0.0
  %4725 = vmatpush1.msra.mxu0 0.0
  %4726 = vmatprep.subr.mxu0 0.0
  %4727 = vmatpush1.msra.mxu0 0.0
  %4728 = vmatprep.subr.mxu0 0.0
  %4729 = vmatpush1.msra.mxu0 0.0
  %4730 = vmatprep.subr.mxu0 0.0
  %4731 = vmatpush1.msra.mxu0 0.0
  %4732 = vmatprep.subr.mxu0 0.0
  %4733 = vmatpush1.msra.mxu0 0.0
  %4734 = vmatprep.subr.mxu0 0.0
  %4735 = vmatpush1.msra.mxu0 0.0
  %4736 = vmatprep.subr.mxu0 0.0
  %4737 = vmatpush1.msra.mxu0 0.0
  %4738 = vmatprep.subr.mxu0 0.0
  %4739 = vmatpush1.msra.mxu0 0.0
  %4740 = vmatprep.subr.mxu0 0.0
  %4741 = vmatpush1.msra.mxu0 0.0
  %4742 = vmatprep.subr.mxu0 0.0
  %4743 = vmatpush1.msra.mxu0 0.0
  %4744 = vmatprep.mubr.f32.mxu0 0.0
  %4745 = vmatmul.mubr.f32.gmra.mrb[0].mxu0 %v4678
  %v4746 = vpop.f32.mrb[0].mxu0
  %v4747 = vadd.f32 %v4674, %v4746
  %v4748 = vpop.f32.mrb[0].mxu0
  %4749 = vdwg.mxu0
  %4750 = vst [vmem:[%s19] sm:$0xff] %v4747
  // Predicated region
  $region78: #{bitwise_wavenet_forward.1} parent=0 // pred_check
    _
  $region79: #{bitwise_wavenet_forward.1} parent=0 // pred_check_branch
    %4752 = sbr.rel (0) target = $region81
  $region80: #{bitwise_wavenet_forward.1} parent=0 // pred_region
    _
  $region81: #{bitwise_wavenet_forward.1} parent=0 // pred_fallthru
    _
  // Predicated region
  $region82: #{bitwise_wavenet_forward.1} parent=0 // pred_check
    _
  $region83: #{bitwise_wavenet_forward.1} parent=0 // pred_check_branch
    %4754 = sbr.rel (0) target = $region85
  $region84: #{bitwise_wavenet_forward.1} parent=0 // pred_region
    _
  $region85: #{bitwise_wavenet_forward.1} parent=0 // pred_fallthru
    _

</llo_original>
